<compile_context>
chip_gen: v7x
topology: tpu7x:2x2x1
jax: 0.10.0
libtpu: 0.0.40
codegen_flags: <defaults>
</compile_context>

<pallas_src>
import math

import jax
import jax.numpy as jnp
from jax import lax
from jax.experimental import pallas as pl
from jax.experimental.pallas import tpu as pltpu


def _round_up(v, m):
    return ((v + m - 1) // m) * m


# ----------------------------------------------------------------------------
# per-dimension phase plan
# ----------------------------------------------------------------------------
def _phase_dim_plan(phase, in_size, out_size, k, s, pad):
    """Taps / input window for the output positions o = phase + s*t.

    Returns (n_out, taps, window):
      n_out  : number of output positions in this phase
      taps   : list of (kernel_index, delta); the input index used by output t
               is (t + delta), expressed relative to the returned window
      window : (pad_lo, pad_hi, start, length) describing how to build the
               zero-padded input window:  pad(x)[start : start + length]
    """
    n_out = max(0, -(-(out_size - phase) // s))
    taps = [(ki, (phase + pad - ki) // s)
            for ki in range(k) if (phase + pad - ki) % s == 0]
    if n_out == 0 or not taps:
        return n_out, [], (0, 0, 0, 1)
    dmin = min(d for _, d in taps)
    dmax = max(d for _, d in taps)
    length = n_out + (dmax - dmin)
    pad_lo = max(0, -dmin)
    pad_hi = max(0, (n_out - 1 + dmax) - (in_size - 1))
    start = dmin + pad_lo
    taps = [(ki, d - dmin) for ki, d in taps]
    return n_out, taps, (pad_lo, pad_hi, start, length)


# ----------------------------------------------------------------------------
# Pallas kernel (one phase): fused patch extraction + transposed GEMM + bias
# ----------------------------------------------------------------------------
def _make_phase_kernel(tap_plan, l_out):
    """tap_plan: list of (x_input_index, lane_shift, weight_tap_index)."""

    def kernel(w_ref, b_ref, *refs):
        x_refs, o_ref = refs[:-1], refs[-1]
        c_out = o_ref.shape[2]
        acc = jnp.zeros((c_out, l_out), jnp.float32)
        for xi, shift, wi in tap_plan:
            # shifted view of the flattened-HW input slice (static offsets)
            rhs = x_refs[xi][0, 0, :, shift:shift + l_out]      # (Cin, l_out)
            # transposed GEMM: lanes carry output voxels -> lane-dense store,
            # MXU N-dim = l_out, K = Cin, accumulation stays in f32.
            acc = acc + jnp.dot(w_ref[wi], rhs,
                                preferred_element_type=jnp.float32)
        o_ref[0, 0] = (acc + b_ref[...]).astype(o_ref.dtype)

    return kernel


def _conv_transpose3d_phase(x, weight, bias, phase, stride, padding, out_size):
    N, Cin, D, H, W = x.shape
    _, Cout, kD, kH, kW = weight.shape
    pd, ph, pw = phase
    sD, sH, sW = stride
    padD, padH, padW = padding
    OD, OH, OW = out_size
    out_dtype = x.dtype

    ODp, taps_d, win_d = _phase_dim_plan(pd, D, OD, kD, sD, padD)
    OHp, taps_h, win_h = _phase_dim_plan(ph, H, OH, kH, sH, padH)
    OWp, taps_w, win_w = _phase_dim_plan(pw, W, OW, kW, sW, padW)

    if min(ODp, OHp, OWp) == 0:
        return jnp.zeros((N, Cout, ODp, OHp, OWp), out_dtype)
    if not (taps_d and taps_h and taps_w):
        # no kernel tap ever hits this phase -> output is just the bias
        b = bias.astype(out_dtype).reshape(1, Cout, 1, 1, 1)
        return jnp.broadcast_to(b, (N, Cout, ODp, OHp, OWp))

    dlo, dhi, dst, Dx = win_d
    hlo, hhi, hst, Hx = win_h
    wlo, whi, wst, Wx = win_w

    # Per-phase zero-padded input window (glue, ~1x the input size -- NOT the
    # 27x im2col blowup).  Layout: (N, Dx, Cin, Hx*Wx) so the last (lane) dim
    # of every kernel block is long and dense; pad it to a multiple of 128
    # (also provides the spread_w guard columns used by the shifted views).
    xw = jnp.pad(x, ((0, 0), (0, 0), (dlo, dhi), (hlo, hhi), (wlo, whi)))
    xw = lax.slice(xw, (0, 0, dst, hst, wst),
                   (N, Cin, dst + Dx, hst + Hx, wst + Wx))
    xw = jnp.transpose(xw, (0, 2, 1, 3, 4)).reshape(N, Dx, Cin, Hx * Wx)
    spread_w = Wx - OWp
    L_out = OHp * Wx
    L_pad = _round_up(Hx * Wx + spread_w, 128)
    xw = jnp.pad(xw, ((0, 0), (0, 0), (0, 0), (0, L_pad - Hx * Wx)))

    # one input spec per distinct depth offset (block size 1 along depth so
    # the index_map addresses element offsets directly)
    d_offsets = sorted({dd for _, dd in taps_d})
    d_index = {dd: i for i, dd in enumerate(d_offsets)}

    w_taps, tap_plan = [], []
    for kd, dd in taps_d:
        for kh, dh in taps_h:
            for kw_, dw in taps_w:
                w_taps.append(weight[:, :, kd, kh, kw_].T)      # (Cout, Cin)
                tap_plan.append((d_index[dd], dh * Wx + dw, len(w_taps) - 1))
    w_arr = jnp.stack(w_taps, axis=0).astype(jnp.float32)       # (T, Cout, Cin)
    b_arr = bias.reshape(Cout, 1).astype(jnp.float32)

    in_specs = [
        pl.BlockSpec(tuple(w_arr.shape), lambda n, t: (0, 0, 0)),
        pl.BlockSpec((Cout, 1), lambda n, t: (0, 0)),
    ]
    for dd in d_offsets:
        in_specs.append(
            pl.BlockSpec((1, 1, Cin, L_pad),
                         lambda n, t, _dd=dd: (n, t + _dd, 0, 0)))

    out_wide = pl.pallas_call(
        _make_phase_kernel(tap_plan, L_out),
        out_shape=jax.ShapeDtypeStruct((N, ODp, Cout, L_out), out_dtype),
        grid=(N, ODp),
        in_specs=in_specs,
        out_specs=pl.BlockSpec((1, 1, Cout, L_out), lambda n, t: (n, t, 0, 0)),
        compiler_params=pltpu.CompilerParams(
            dimension_semantics=("parallel", "parallel")),
    )(w_arr, b_arr, *([xw] * len(d_offsets)))

    # drop the spread_w guard columns, back to (N, Cout, ODp, OHp, OWp)
    out = out_wide.reshape(N, ODp, Cout, OHp, Wx)[..., :OWp]
    return jnp.transpose(out, (0, 2, 1, 3, 4))


# ----------------------------------------------------------------------------
# ConvTranspose3d forward (stride=scale_factor, padding=1), output_size aware
# ----------------------------------------------------------------------------
def conv_transpose3d_pallas(x, weight, bias, stride, padding, output_size):
    """x: (N, Cin, D, H, W); weight: (Cin, Cout, kD, kH, kW) (PyTorch layout)."""
    N, Cin, D, H, W = x.shape
    _, Cout, kD, kH, kW = weight.shape
    sD, sH, sW = stride
    OD, OH, OW = output_size

    # Same output_size validity check nn.ConvTranspose3d applies.
    for o, i, k, s, p in ((OD, D, kD, sD, padding[0]),
                          (OH, H, kH, sH, padding[1]),
                          (OW, W, kW, sW, padding[2])):
        lo = (i - 1) * s - 2 * p + k
        if not (lo <= o <= lo + s - 1):
            raise ValueError(f"requested output size {o} is outside the valid "
                             f"range [{lo}, {lo + s - 1}]")

    ODc, OHc, OWc = -(-OD // sD), -(-OH // sH), -(-OW // sW)
    phase_outs = []
    for pd in range(sD):
        for ph in range(sH):
            for pw in range(sW):
                po = _conv_transpose3d_phase(x, weight, bias, (pd, ph, pw),
                                             stride, padding, output_size)
                po = jnp.pad(po, ((0, 0), (0, 0),
                                  (0, ODc - po.shape[2]),
                                  (0, OHc - po.shape[3]),
                                  (0, OWc - po.shape[4])))
                phase_outs.append(po)

    # interleave the phases back into NCDHW (single transpose/reshape pass)
    out = jnp.stack(phase_outs, axis=0).reshape(
        sD, sH, sW, N, Cout, ODc, OHc, OWc)
    out = jnp.transpose(out, (3, 4, 5, 0, 6, 1, 7, 2))
    out = out.reshape(N, Cout, ODc * sD, OHc * sH, OWc * sW)
    return out[:, :, :OD, :OH, :OW]


_conv_transpose3d = jax.jit(conv_transpose3d_pallas, static_argnums=(3, 4, 5))


# ----------------------------------------------------------------------------
# Upsampling module (forward semantics of the PyTorch class)
# ----------------------------------------------------------------------------
class Upsampling:
    def __init__(self, transposed_conv, in_channels=None, out_channels=None,
                 kernel_size=3, scale_factor=(2, 2, 2), mode='nearest',
                 key=None):
        self.transposed_conv = transposed_conv
        self.mode = mode
        if transposed_conv:
            k = kernel_size if isinstance(kernel_size, (tuple, list)) else (kernel_size,) * 3
            s = scale_factor if isinstance(scale_factor, (tuple, list)) else (scale_factor,) * 3
            self.kernel_size = tuple(int(v) for v in k)
            self.stride = tuple(int(v) for v in s)
            self.padding = (1, 1, 1)
            if key is None:
                key = jax.random.PRNGKey(0)
            kw_, kb_ = jax.random.split(key)
            # deterministic init; shapes match nn.ConvTranspose3d: (Cin, Cout, kD, kH, kW)
            fan = out_channels * self.kernel_size[0] * self.kernel_size[1] * self.kernel_size[2]
            bound = 1.0 / math.sqrt(fan)
            self.weight = jax.random.uniform(
                kw_, (in_channels, out_channels) + self.kernel_size,
                jnp.float32, -bound, bound)
            self.bias = jax.random.uniform(kb_, (out_channels,), jnp.float32,
                                           -bound, bound)

    def forward(self, encoder_features, x):
        self.encoder_features = encoder_features
        output_size = tuple(int(v) for v in encoder_features.shape[2:])
        if self.transposed_conv:
            return _conv_transpose3d(x, self.weight, self.bias,
                                     self.stride, self.padding, output_size)
        return self._interpolate(x, output_size, self.mode)

    __call__ = forward

    @staticmethod
    def _interpolate(x, size, mode):
        # TODO(synk): nearest interpolation is a pure index gather (zero FLOPs);
        # kept as plain-JAX glue rather than a Pallas kernel.
        assert mode == 'nearest'
        N, C, D, H, W = x.shape
        OD, OH, OW = size
        idx_d = (jnp.arange(OD) * D) // OD
        idx_h = (jnp.arange(OH) * H) // OH
        idx_w = (jnp.arange(OW) * W) // OW
        return x[:, :, idx_d][:, :, :, idx_h][:, :, :, :, idx_w]


# ----------------------------------------------------------------------------
# Plain-JAX reference for the conv-transpose path (validation only)
# ----------------------------------------------------------------------------
def _ref_conv_transpose3d(x, weight, bias, stride, padding, output_size):
    N, Cin, D, H, W = x.shape
    _, Cout, kD, kH, kW = weight.shape
    sD, sH, sW = stride
    pD, pH, pW = padding
    OD, OH, OW = output_size
    opD = OD - ((D - 1) * sD - 2 * pD + kD)
    opH = OH - ((H - 1) * sH - 2 * pH + kH)
    opW = OW - ((W - 1) * sW - 2 * pW + kW)
    w_conv = jnp.transpose(weight[:, :, ::-1, ::-1, ::-1], (1, 0, 2, 3, 4))
    y = jax.lax.conv_general_dilated(
        x, w_conv, window_strides=(1, 1, 1),
        padding=[(kD - 1 - pD, kD - 1 - pD + opD),
                 (kH - 1 - pH, kH - 1 - pH + opH),
                 (kW - 1 - pW, kW - 1 - pW + opW)],
        lhs_dilation=(sD, sH, sW),
        dimension_numbers=('NCDHW', 'OIDHW', 'NCDHW'))
    return y + bias.reshape(1, Cout, 1, 1, 1)


if __name__ == "__main__":
    key = jax.random.PRNGKey(0)
    k1, k2, k3 = jax.random.split(key, 3)

    N, Cin, Cout = 2, 4, 8
    D = H = W = 8
    x = jax.random.normal(k1, (N, Cin, D, H, W), jnp.float32)
    encoder_features = jax.random.normal(k2, (N, Cout, 2 * D, 2 * H, 2 * W),
                                         jnp.float32)

    # transposed-conv path (Pallas phase-decomposed conv-transpose kernels)
    up = Upsampling(True, in_channels=Cin, out_channels=Cout, kernel_size=3,
                    scale_factor=(2, 2, 2), key=k3)
    y = jax.block_until_ready(up.forward(encoder_features, x))
    assert y.shape == (N, Cout, 2 * D, 2 * H, 2 * W), y.shape
    y_ref = jax.block_until_ready(
        _ref_conv_transpose3d(x, up.weight, up.bias, up.stride, up.padding,
                              (2 * D, 2 * H, 2 * W)))
    assert jnp.allclose(y, y_ref, atol=1e-2, rtol=1e-2), float(
        jnp.max(jnp.abs(y - y_ref)))

    # odd output size (exercises unequal per-phase shapes / output_padding=0)
    enc_odd = jnp.zeros((N, Cout, 2 * D - 1, 2 * H - 1, 2 * W - 1), jnp.float32)
    y2 = jax.block_until_ready(up.forward(enc_odd, x))
    y2_ref = jax.block_until_ready(
        _ref_conv_transpose3d(x, up.weight, up.bias, up.stride, up.padding,
                              (2 * D - 1, 2 * H - 1, 2 * W - 1)))
    assert y2.shape == y2_ref.shape, (y2.shape, y2_ref.shape)
    assert jnp.allclose(y2, y2_ref, atol=1e-2, rtol=1e-2), float(
        jnp.max(jnp.abs(y2 - y2_ref)))

    # interpolation path (nearest, default mode)
    up2 = Upsampling(False)
    y3 = jax.block_until_ready(up2.forward(encoder_features, x))
    assert y3.shape == (N, Cin, 2 * D, 2 * H, 2 * W), y3.shape

    print("KERNEL_OK")
</pallas_src>

<mosaic_0001>
module attributes {stable_mosaic.version = 11 : i64} {
  func.func @kernel(%arg0: i32, %arg1: i32, %arg2: memref<2x8x4xf32, #tpu.memory_space<vmem>>, %arg3: memref<8x1xf32, #tpu.memory_space<vmem>>, %arg4: memref<1x1x4x128xf32, #tpu.memory_space<vmem>>, %arg5: memref<1x1x8x72xf32, #tpu.memory_space<vmem>>) attributes {dimension_semantics = [#tpu.dimension_semantics<parallel>, #tpu.dimension_semantics<parallel>], iteration_bounds = array<i64: 2, 8>, scalar_prefetch = 0 : i64, scratch_operands = 0 : i64, tpu.core_type = #tpu.core_type<tc>, window_params = [{pipeline_mode = #tpu.pipeline_mode<synchronous>, transform_indices = @transform_0, window_bounds = array<i64: 2, 8, 4>}, {pipeline_mode = #tpu.pipeline_mode<synchronous>, transform_indices = @transform_1, window_bounds = array<i64: 8, 1>}, {transform_indices = @transform_2, window_bounds = array<i64: 1, 1, 4, 128>}, {transform_indices = @transform_3, window_bounds = array<i64: 1, 1, 8, 72>}]} {
    %cst = arith.constant 0.000000e+00 : f32
    %0 = vector.broadcast %cst : f32 to vector<8x72xf32>
    %c0 = arith.constant 0 : index
    %c0_0 = arith.constant 0 : index
    %c0_1 = arith.constant 0 : index
    %c1 = arith.constant 1 : index
    %1 = vector.load %arg4[%c0, %c0_0, %c0_1, %c1] : memref<1x1x4x128xf32, #tpu.memory_space<vmem>>, vector<1x1x4x72xf32>
    %2 = vector.shape_cast %1 : vector<1x1x4x72xf32> to vector<4x72xf32>
    %c0_2 = arith.constant 0 : index
    %c0_3 = arith.constant 0 : index
    %c0_4 = arith.constant 0 : index
    %3 = vector.load %arg2[%c0_2, %c0_3, %c0_4] : memref<2x8x4xf32, #tpu.memory_space<vmem>>, vector<1x8x4xf32>
    %4 = vector.shape_cast %3 : vector<1x8x4xf32> to vector<8x4xf32>
    %cst_5 = arith.constant dense<0.000000e+00> : vector<8x72xf32>
    %5 = tpu.matmul %4, %2, %cst_5 {dimension_numbers = #tpu.dot_dimension_numbers<[1], [0], [0], [1], [0, 0, 1, 1], [], []>} : vector<8x4xf32>, vector<4x72xf32>, vector<8x72xf32> -> vector<8x72xf32>
    %6 = arith.addf %0, %5 : vector<8x72xf32>
    %c0_6 = arith.constant 0 : index
    %c0_7 = arith.constant 0 : index
    %c0_8 = arith.constant 0 : index
    %c0_9 = arith.constant 0 : index
    %7 = vector.load %arg4[%c0_6, %c0_7, %c0_8, %c0_9] : memref<1x1x4x128xf32, #tpu.memory_space<vmem>>, vector<1x1x4x72xf32>
    %8 = vector.shape_cast %7 : vector<1x1x4x72xf32> to vector<4x72xf32>
    %c1_10 = arith.constant 1 : index
    %c0_11 = arith.constant 0 : index
    %c0_12 = arith.constant 0 : index
    %9 = vector.load %arg2[%c1_10, %c0_11, %c0_12] : memref<2x8x4xf32, #tpu.memory_space<vmem>>, vector<1x8x4xf32>
    %10 = vector.shape_cast %9 : vector<1x8x4xf32> to vector<8x4xf32>
    %cst_13 = arith.constant dense<0.000000e+00> : vector<8x72xf32>
    %11 = tpu.matmul %10, %8, %cst_13 {dimension_numbers = #tpu.dot_dimension_numbers<[1], [0], [0], [1], [0, 0, 1, 1], [], []>} : vector<8x4xf32>, vector<4x72xf32>, vector<8x72xf32> -> vector<8x72xf32>
    %12 = arith.addf %6, %11 : vector<8x72xf32>
    %c0_14 = arith.constant 0 : index
    %c0_15 = arith.constant 0 : index
    %13 = vector.load %arg3[%c0_14, %c0_15] : memref<8x1xf32, #tpu.memory_space<vmem>>, vector<8x1xf32>
    %14 = vector.broadcast %13 : vector<8x1xf32> to vector<8x72xf32>
    %15 = arith.addf %12, %14 : vector<8x72xf32>
    %c0_16 = arith.constant 0 : index
    %c0_17 = arith.constant 0 : index
    %c0_18 = arith.constant 0 : index
    %c0_19 = arith.constant 0 : index
    %16 = vector.load %arg5[%c0_16, %c0_17, %c0_18, %c0_19] : memref<1x1x8x72xf32, #tpu.memory_space<vmem>>, vector<1x1x8x72xf32>
    %17 = vector.shape_cast %16 : vector<1x1x8x72xf32> to vector<8x72xf32>
    %18 = vector.shape_cast %15 : vector<8x72xf32> to vector<1x1x8x72xf32>
    tpu.vector_store %arg5[%c0_16, %c0_17, %c0_18, %c0_19], %18 {strides = array<i32>} : memref<1x1x8x72xf32, #tpu.memory_space<vmem>>, vector<1x1x8x72xf32>,
    return
  }
  func.func @transform_0(%arg0: i32, %arg1: i32) -> (i32, i32, i32) {
    %c0_i32 = arith.constant 0 : i32
    %c0_i32_0 = arith.constant 0 : i32
    %c0_i32_1 = arith.constant 0 : i32
    %c0_i32_2 = arith.constant 0 : i32
    return %c0_i32, %c0_i32_0, %c0_i32_1 : i32, i32, i32
  }
  func.func @transform_1(%arg0: i32, %arg1: i32) -> (i32, i32) {
    %c0_i32 = arith.constant 0 : i32
    %c0_i32_0 = arith.constant 0 : i32
    %c0_i32_1 = arith.constant 0 : i32
    return %c0_i32, %c0_i32_0 : i32, i32
  }
  func.func @transform_2(%arg0: i32, %arg1: i32) -> (i32, i32, i32, i32) {
    %c0_i32 = arith.constant 0 : i32
    %0 = arith.addi %arg1, %c0_i32 : i32
    %c0_i32_0 = arith.constant 0 : i32
    %c0_i32_1 = arith.constant 0 : i32
    %c0_i32_2 = arith.constant 0 : i32
    return %arg0, %0, %c0_i32_0, %c0_i32_1 : i32, i32, i32, i32
  }
  func.func @transform_3(%arg0: i32, %arg1: i32) -> (i32, i32, i32, i32) {
    %c0_i32 = arith.constant 0 : i32
    %c0_i32_0 = arith.constant 0 : i32
    %c0_i32_1 = arith.constant 0 : i32
    return %arg0, %arg1, %c0_i32, %c0_i32_0 : i32, i32, i32, i32
  }
}

module attributes {stable_mosaic.version = 11 : i64} {
  func.func @kernel(%arg0: i32, %arg1: i32, %arg2: memref<1x8x4xf32, #tpu.memory_space<vmem>>, %arg3: memref<8x1xf32, #tpu.memory_space<vmem>>, %arg4: memref<1x1x4x128xf32, #tpu.memory_space<vmem>>, %arg5: memref<1x1x8x64xf32, #tpu.memory_space<vmem>>) attributes {dimension_semantics = [#tpu.dimension_semantics<parallel>, #tpu.dimension_semantics<parallel>], iteration_bounds = array<i64: 2, 8>, scalar_prefetch = 0 : i64, scratch_operands = 0 : i64, tpu.core_type = #tpu.core_type<tc>, window_params = [{pipeline_mode = #tpu.pipeline_mode<synchronous>, transform_indices = @transform_0, window_bounds = array<i64: 1, 8, 4>}, {pipeline_mode = #tpu.pipeline_mode<synchronous>, transform_indices = @transform_1, window_bounds = array<i64: 8, 1>}, {transform_indices = @transform_2, window_bounds = array<i64: 1, 1, 4, 128>}, {transform_indices = @transform_3, window_bounds = array<i64: 1, 1, 8, 64>}]} {
    %cst = arith.constant 0.000000e+00 : f32
    %0 = vector.broadcast %cst : f32 to vector<8x64xf32>
    %c0 = arith.constant 0 : index
    %c0_0 = arith.constant 0 : index
    %c0_1 = arith.constant 0 : index
    %c0_2 = arith.constant 0 : index
    %1 = vector.load %arg4[%c0, %c0_0, %c0_1, %c0_2] : memref<1x1x4x128xf32, #tpu.memory_space<vmem>>, vector<1x1x4x64xf32>
    %2 = vector.shape_cast %1 : vector<1x1x4x64xf32> to vector<4x64xf32>
    %c0_3 = arith.constant 0 : index
    %c0_4 = arith.constant 0 : index
    %c0_5 = arith.constant 0 : index
    %3 = vector.load %arg2[%c0_3, %c0_4, %c0_5] : memref<1x8x4xf32, #tpu.memory_space<vmem>>, vector<1x8x4xf32>
    %4 = vector.shape_cast %3 : vector<1x8x4xf32> to vector<8x4xf32>
    %cst_6 = arith.constant dense<0.000000e+00> : vector<8x64xf32>
    %5 = tpu.matmul %4, %2, %cst_6 {dimension_numbers = #tpu.dot_dimension_numbers<[1], [0], [0], [1], [0, 0, 1, 1], [], []>} : vector<8x4xf32>, vector<4x64xf32>, vector<8x64xf32> -> vector<8x64xf32>
    %6 = arith.addf %0, %5 : vector<8x64xf32>
    %c0_7 = arith.constant 0 : index
    %c0_8 = arith.constant 0 : index
    %7 = vector.load %arg3[%c0_7, %c0_8] : memref<8x1xf32, #tpu.memory_space<vmem>>, vector<8x1xf32>
    %8 = vector.broadcast %7 : vector<8x1xf32> to vector<8x64xf32>
    %9 = arith.addf %6, %8 : vector<8x64xf32>
    %c0_9 = arith.constant 0 : index
    %c0_10 = arith.constant 0 : index
    %c0_11 = arith.constant 0 : index
    %c0_12 = arith.constant 0 : index
    %10 = vector.load %arg5[%c0_9, %c0_10, %c0_11, %c0_12] : memref<1x1x8x64xf32, #tpu.memory_space<vmem>>, vector<1x1x8x64xf32>
    %11 = vector.shape_cast %10 : vector<1x1x8x64xf32> to vector<8x64xf32>
    %12 = vector.shape_cast %9 : vector<8x64xf32> to vector<1x1x8x64xf32>
    tpu.vector_store %arg5[%c0_9, %c0_10, %c0_11, %c0_12], %12 {strides = array<i32>} : memref<1x1x8x64xf32, #tpu.memory_space<vmem>>, vector<1x1x8x64xf32>,
    return
  }
  func.func @transform_0(%arg0: i32, %arg1: i32) -> (i32, i32, i32) {
    %c0_i32 = arith.constant 0 : i32
    %c0_i32_0 = arith.constant 0 : i32
    %c0_i32_1 = arith.constant 0 : i32
    %c0_i32_2 = arith.constant 0 : i32
    return %c0_i32, %c0_i32_0, %c0_i32_1 : i32, i32, i32
  }
  func.func @transform_1(%arg0: i32, %arg1: i32) -> (i32, i32) {
    %c0_i32 = arith.constant 0 : i32
    %c0_i32_0 = arith.constant 0 : i32
    %c0_i32_1 = arith.constant 0 : i32
    return %c0_i32, %c0_i32_0 : i32, i32
  }
  func.func @transform_2(%arg0: i32, %arg1: i32) -> (i32, i32, i32, i32) {
    %c0_i32 = arith.constant 0 : i32
    %0 = arith.addi %arg1, %c0_i32 : i32
    %c0_i32_0 = arith.constant 0 : i32
    %c0_i32_1 = arith.constant 0 : i32
    %c0_i32_2 = arith.constant 0 : i32
    return %arg0, %0, %c0_i32_0, %c0_i32_1 : i32, i32, i32, i32
  }
  func.func @transform_3(%arg0: i32, %arg1: i32) -> (i32, i32, i32, i32) {
    %c0_i32 = arith.constant 0 : i32
    %c0_i32_0 = arith.constant 0 : i32
    %c0_i32_1 = arith.constant 0 : i32
    return %arg0, %arg1, %c0_i32, %c0_i32_0 : i32, i32, i32, i32
  }
}

module attributes {stable_mosaic.version = 11 : i64} {
  func.func @kernel(%arg0: i32, %arg1: i32, %arg2: memref<2x8x4xf32, #tpu.memory_space<vmem>>, %arg3: memref<8x1xf32, #tpu.memory_space<vmem>>, %arg4: memref<1x1x4x128xf32, #tpu.memory_space<vmem>>, %arg5: memref<1x1x8x64xf32, #tpu.memory_space<vmem>>) attributes {dimension_semantics = [#tpu.dimension_semantics<parallel>, #tpu.dimension_semantics<parallel>], iteration_bounds = array<i64: 2, 8>, scalar_prefetch = 0 : i64, scratch_operands = 0 : i64, tpu.core_type = #tpu.core_type<tc>, window_params = [{pipeline_mode = #tpu.pipeline_mode<synchronous>, transform_indices = @transform_0, window_bounds = array<i64: 2, 8, 4>}, {pipeline_mode = #tpu.pipeline_mode<synchronous>, transform_indices = @transform_1, window_bounds = array<i64: 8, 1>}, {transform_indices = @transform_2, window_bounds = array<i64: 1, 1, 4, 128>}, {transform_indices = @transform_3, window_bounds = array<i64: 1, 1, 8, 64>}]} {
    %cst = arith.constant 0.000000e+00 : f32
    %0 = vector.broadcast %cst : f32 to vector<8x64xf32>
    %c0 = arith.constant 0 : index
    %c0_0 = arith.constant 0 : index
    %c0_1 = arith.constant 0 : index
    %c8 = arith.constant 8 : index
    %1 = vector.load %arg4[%c0, %c0_0, %c0_1, %c8] : memref<1x1x4x128xf32, #tpu.memory_space<vmem>>, vector<1x1x4x64xf32>
    %2 = vector.shape_cast %1 : vector<1x1x4x64xf32> to vector<4x64xf32>
    %c0_2 = arith.constant 0 : index
    %c0_3 = arith.constant 0 : index
    %c0_4 = arith.constant 0 : index
    %3 = vector.load %arg2[%c0_2, %c0_3, %c0_4] : memref<2x8x4xf32, #tpu.memory_space<vmem>>, vector<1x8x4xf32>
    %4 = vector.shape_cast %3 : vector<1x8x4xf32> to vector<8x4xf32>
    %cst_5 = arith.constant dense<0.000000e+00> : vector<8x64xf32>
    %5 = tpu.matmul %4, %2, %cst_5 {dimension_numbers = #tpu.dot_dimension_numbers<[1], [0], [0], [1], [0, 0, 1, 1], [], []>} : vector<8x4xf32>, vector<4x64xf32>, vector<8x64xf32> -> vector<8x64xf32>
    %6 = arith.addf %0, %5 : vector<8x64xf32>
    %c0_6 = arith.constant 0 : index
    %c0_7 = arith.constant 0 : index
    %c0_8 = arith.constant 0 : index
    %c0_9 = arith.constant 0 : index
    %7 = vector.load %arg4[%c0_6, %c0_7, %c0_8, %c0_9] : memref<1x1x4x128xf32, #tpu.memory_space<vmem>>, vector<1x1x4x64xf32>
    %8 = vector.shape_cast %7 : vector<1x1x4x64xf32> to vector<4x64xf32>
    %c1 = arith.constant 1 : index
    %c0_10 = arith.constant 0 : index
    %c0_11 = arith.constant 0 : index
    %9 = vector.load %arg2[%c1, %c0_10, %c0_11] : memref<2x8x4xf32, #tpu.memory_space<vmem>>, vector<1x8x4xf32>
    %10 = vector.shape_cast %9 : vector<1x8x4xf32> to vector<8x4xf32>
    %cst_12 = arith.constant dense<0.000000e+00> : vector<8x64xf32>
    %11 = tpu.matmul %10, %8, %cst_12 {dimension_numbers = #tpu.dot_dimension_numbers<[1], [0], [0], [1], [0, 0, 1, 1], [], []>} : vector<8x4xf32>, vector<4x64xf32>, vector<8x64xf32> -> vector<8x64xf32>
    %12 = arith.addf %6, %11 : vector<8x64xf32>
    %c0_13 = arith.constant 0 : index
    %c0_14 = arith.constant 0 : index
    %13 = vector.load %arg3[%c0_13, %c0_14] : memref<8x1xf32, #tpu.memory_space<vmem>>, vector<8x1xf32>
    %14 = vector.broadcast %13 : vector<8x1xf32> to vector<8x64xf32>
    %15 = arith.addf %12, %14 : vector<8x64xf32>
    %c0_15 = arith.constant 0 : index
    %c0_16 = arith.constant 0 : index
    %c0_17 = arith.constant 0 : index
    %c0_18 = arith.constant 0 : index
    %16 = vector.load %arg5[%c0_15, %c0_16, %c0_17, %c0_18] : memref<1x1x8x64xf32, #tpu.memory_space<vmem>>, vector<1x1x8x64xf32>
    %17 = vector.shape_cast %16 : vector<1x1x8x64xf32> to vector<8x64xf32>
    %18 = vector.shape_cast %15 : vector<8x64xf32> to vector<1x1x8x64xf32>
    tpu.vector_store %arg5[%c0_15, %c0_16, %c0_17, %c0_18], %18 {strides = array<i32>} : memref<1x1x8x64xf32, #tpu.memory_space<vmem>>, vector<1x1x8x64xf32>,
    return
  }
  func.func @transform_0(%arg0: i32, %arg1: i32) -> (i32, i32, i32) {
    %c0_i32 = arith.constant 0 : i32
    %c0_i32_0 = arith.constant 0 : i32
    %c0_i32_1 = arith.constant 0 : i32
    %c0_i32_2 = arith.constant 0 : i32
    return %c0_i32, %c0_i32_0, %c0_i32_1 : i32, i32, i32
  }
  func.func @transform_1(%arg0: i32, %arg1: i32) -> (i32, i32) {
    %c0_i32 = arith.constant 0 : i32
    %c0_i32_0 = arith.constant 0 : i32
    %c0_i32_1 = arith.constant 0 : i32
    return %c0_i32, %c0_i32_0 : i32, i32
  }
  func.func @transform_2(%arg0: i32, %arg1: i32) -> (i32, i32, i32, i32) {
    %c0_i32 = arith.constant 0 : i32
    %0 = arith.addi %arg1, %c0_i32 : i32
    %c0_i32_0 = arith.constant 0 : i32
    %c0_i32_1 = arith.constant 0 : i32
    %c0_i32_2 = arith.constant 0 : i32
    return %arg0, %0, %c0_i32_0, %c0_i32_1 : i32, i32, i32, i32
  }
  func.func @transform_3(%arg0: i32, %arg1: i32) -> (i32, i32, i32, i32) {
    %c0_i32 = arith.constant 0 : i32
    %c0_i32_0 = arith.constant 0 : i32
    %c0_i32_1 = arith.constant 0 : i32
    return %arg0, %arg1, %c0_i32, %c0_i32_0 : i32, i32, i32, i32
  }
}

module attributes {stable_mosaic.version = 11 : i64} {
  func.func @kernel(%arg0: i32, %arg1: i32, %arg2: memref<4x8x4xf32, #tpu.memory_space<vmem>>, %arg3: memref<8x1xf32, #tpu.memory_space<vmem>>, %arg4: memref<1x1x4x128xf32, #tpu.memory_space<vmem>>, %arg5: memref<1x1x8x72xf32, #tpu.memory_space<vmem>>) attributes {dimension_semantics = [#tpu.dimension_semantics<parallel>, #tpu.dimension_semantics<parallel>], iteration_bounds = array<i64: 2, 8>, scalar_prefetch = 0 : i64, scratch_operands = 0 : i64, tpu.core_type = #tpu.core_type<tc>, window_params = [{pipeline_mode = #tpu.pipeline_mode<synchronous>, transform_indices = @transform_0, window_bounds = array<i64: 4, 8, 4>}, {pipeline_mode = #tpu.pipeline_mode<synchronous>, transform_indices = @transform_1, window_bounds = array<i64: 8, 1>}, {transform_indices = @transform_2, window_bounds = array<i64: 1, 1, 4, 128>}, {transform_indices = @transform_3, window_bounds = array<i64: 1, 1, 8, 72>}]} {
    %cst = arith.constant 0.000000e+00 : f32
    %0 = vector.broadcast %cst : f32 to vector<8x72xf32>
    %c0 = arith.constant 0 : index
    %c0_0 = arith.constant 0 : index
    %c0_1 = arith.constant 0 : index
    %c10 = arith.constant 10 : index
    %1 = vector.load %arg4[%c0, %c0_0, %c0_1, %c10] : memref<1x1x4x128xf32, #tpu.memory_space<vmem>>, vector<1x1x4x72xf32>
    %2 = vector.shape_cast %1 : vector<1x1x4x72xf32> to vector<4x72xf32>
    %c0_2 = arith.constant 0 : index
    %c0_3 = arith.constant 0 : index
    %c0_4 = arith.constant 0 : index
    %3 = vector.load %arg2[%c0_2, %c0_3, %c0_4] : memref<4x8x4xf32, #tpu.memory_space<vmem>>, vector<1x8x4xf32>
    %4 = vector.shape_cast %3 : vector<1x8x4xf32> to vector<8x4xf32>
    %cst_5 = arith.constant dense<0.000000e+00> : vector<8x72xf32>
    %5 = tpu.matmul %4, %2, %cst_5 {dimension_numbers = #tpu.dot_dimension_numbers<[1], [0], [0], [1], [0, 0, 1, 1], [], []>} : vector<8x4xf32>, vector<4x72xf32>, vector<8x72xf32> -> vector<8x72xf32>
    %6 = arith.addf %0, %5 : vector<8x72xf32>
    %c0_6 = arith.constant 0 : index
    %c0_7 = arith.constant 0 : index
    %c0_8 = arith.constant 0 : index
    %c9 = arith.constant 9 : index
    %7 = vector.load %arg4[%c0_6, %c0_7, %c0_8, %c9] : memref<1x1x4x128xf32, #tpu.memory_space<vmem>>, vector<1x1x4x72xf32>
    %8 = vector.shape_cast %7 : vector<1x1x4x72xf32> to vector<4x72xf32>
    %c1 = arith.constant 1 : index
    %c0_9 = arith.constant 0 : index
    %c0_10 = arith.constant 0 : index
    %9 = vector.load %arg2[%c1, %c0_9, %c0_10] : memref<4x8x4xf32, #tpu.memory_space<vmem>>, vector<1x8x4xf32>
    %10 = vector.shape_cast %9 : vector<1x8x4xf32> to vector<8x4xf32>
    %cst_11 = arith.constant dense<0.000000e+00> : vector<8x72xf32>
    %11 = tpu.matmul %10, %8, %cst_11 {dimension_numbers = #tpu.dot_dimension_numbers<[1], [0], [0], [1], [0, 0, 1, 1], [], []>} : vector<8x4xf32>, vector<4x72xf32>, vector<8x72xf32> -> vector<8x72xf32>
    %12 = arith.addf %6, %11 : vector<8x72xf32>
    %c0_12 = arith.constant 0 : index
    %c0_13 = arith.constant 0 : index
    %c0_14 = arith.constant 0 : index
    %c1_15 = arith.constant 1 : index
    %13 = vector.load %arg4[%c0_12, %c0_13, %c0_14, %c1_15] : memref<1x1x4x128xf32, #tpu.memory_space<vmem>>, vector<1x1x4x72xf32>
    %14 = vector.shape_cast %13 : vector<1x1x4x72xf32> to vector<4x72xf32>
    %c2 = arith.constant 2 : index
    %c0_16 = arith.constant 0 : index
    %c0_17 = arith.constant 0 : index
    %15 = vector.load %arg2[%c2, %c0_16, %c0_17] : memref<4x8x4xf32, #tpu.memory_space<vmem>>, vector<1x8x4xf32>
    %16 = vector.shape_cast %15 : vector<1x8x4xf32> to vector<8x4xf32>
    %cst_18 = arith.constant dense<0.000000e+00> : vector<8x72xf32>
    %17 = tpu.matmul %16, %14, %cst_18 {dimension_numbers = #tpu.dot_dimension_numbers<[1], [0], [0], [1], [0, 0, 1, 1], [], []>} : vector<8x4xf32>, vector<4x72xf32>, vector<8x72xf32> -> vector<8x72xf32>
    %18 = arith.addf %12, %17 : vector<8x72xf32>
    %c0_19 = arith.constant 0 : index
    %c0_20 = arith.constant 0 : index
    %c0_21 = arith.constant 0 : index
    %c0_22 = arith.constant 0 : index
    %19 = vector.load %arg4[%c0_19, %c0_20, %c0_21, %c0_22] : memref<1x1x4x128xf32, #tpu.memory_space<vmem>>, vector<1x1x4x72xf32>
    %20 = vector.shape_cast %19 : vector<1x1x4x72xf32> to vector<4x72xf32>
    %c3 = arith.constant 3 : index
    %c0_23 = arith.constant 0 : index
    %c0_24 = arith.constant 0 : index
    %21 = vector.load %arg2[%c3, %c0_23, %c0_24] : memref<4x8x4xf32, #tpu.memory_space<vmem>>, vector<1x8x4xf32>
    %22 = vector.shape_cast %21 : vector<1x8x4xf32> to vector<8x4xf32>
    %cst_25 = arith.constant dense<0.000000e+00> : vector<8x72xf32>
    %23 = tpu.matmul %22, %20, %cst_25 {dimension_numbers = #tpu.dot_dimension_numbers<[1], [0], [0], [1], [0, 0, 1, 1], [], []>} : vector<8x4xf32>, vector<4x72xf32>, vector<8x72xf32> -> vector<8x72xf32>
    %24 = arith.addf %18, %23 : vector<8x72xf32>
    %c0_26 = arith.constant 0 : index
    %c0_27 = arith.constant 0 : index
    %25 = vector.load %arg3[%c0_26, %c0_27] : memref<8x1xf32, #tpu.memory_space<vmem>>, vector<8x1xf32>
    %26 = vector.broadcast %25 : vector<8x1xf32> to vector<8x72xf32>
    %27 = arith.addf %24, %26 : vector<8x72xf32>
    %c0_28 = arith.constant 0 : index
    %c0_29 = arith.constant 0 : index
    %c0_30 = arith.constant 0 : index
    %c0_31 = arith.constant 0 : index
    %28 = vector.load %arg5[%c0_28, %c0_29, %c0_30, %c0_31] : memref<1x1x8x72xf32, #tpu.memory_space<vmem>>, vector<1x1x8x72xf32>
    %29 = vector.shape_cast %28 : vector<1x1x8x72xf32> to vector<8x72xf32>
    %30 = vector.shape_cast %27 : vector<8x72xf32> to vector<1x1x8x72xf32>
    tpu.vector_store %arg5[%c0_28, %c0_29, %c0_30, %c0_31], %30 {strides = array<i32>} : memref<1x1x8x72xf32, #tpu.memory_space<vmem>>, vector<1x1x8x72xf32>,
    return
  }
  func.func @transform_0(%arg0: i32, %arg1: i32) -> (i32, i32, i32) {
    %c0_i32 = arith.constant 0 : i32
    %c0_i32_0 = arith.constant 0 : i32
    %c0_i32_1 = arith.constant 0 : i32
    %c0_i32_2 = arith.constant 0 : i32
    return %c0_i32, %c0_i32_0, %c0_i32_1 : i32, i32, i32
  }
  func.func @transform_1(%arg0: i32, %arg1: i32) -> (i32, i32) {
    %c0_i32 = arith.constant 0 : i32
    %c0_i32_0 = arith.constant 0 : i32
    %c0_i32_1 = arith.constant 0 : i32
    return %c0_i32, %c0_i32_0 : i32, i32
  }
  func.func @transform_2(%arg0: i32, %arg1: i32) -> (i32, i32, i32, i32) {
    %c0_i32 = arith.constant 0 : i32
    %0 = arith.addi %arg1, %c0_i32 : i32
    %c0_i32_0 = arith.constant 0 : i32
    %c0_i32_1 = arith.constant 0 : i32
    %c0_i32_2 = arith.constant 0 : i32
    return %arg0, %0, %c0_i32_0, %c0_i32_1 : i32, i32, i32, i32
  }
  func.func @transform_3(%arg0: i32, %arg1: i32) -> (i32, i32, i32, i32) {
    %c0_i32 = arith.constant 0 : i32
    %c0_i32_0 = arith.constant 0 : i32
    %c0_i32_1 = arith.constant 0 : i32
    return %arg0, %arg1, %c0_i32, %c0_i32_0 : i32, i32, i32, i32
  }
}

module attributes {stable_mosaic.version = 11 : i64} {
  func.func @kernel(%arg0: i32, %arg1: i32, %arg2: memref<2x8x4xf32, #tpu.memory_space<vmem>>, %arg3: memref<8x1xf32, #tpu.memory_space<vmem>>, %arg4: memref<1x1x4x128xf32, #tpu.memory_space<vmem>>, %arg5: memref<1x1x4x128xf32, #tpu.memory_space<vmem>>, %arg6: memref<1x1x8x64xf32, #tpu.memory_space<vmem>>) attributes {dimension_semantics = [#tpu.dimension_semantics<parallel>, #tpu.dimension_semantics<parallel>], iteration_bounds = array<i64: 2, 8>, scalar_prefetch = 0 : i64, scratch_operands = 0 : i64, tpu.core_type = #tpu.core_type<tc>, window_params = [{pipeline_mode = #tpu.pipeline_mode<synchronous>, transform_indices = @transform_0, window_bounds = array<i64: 2, 8, 4>}, {pipeline_mode = #tpu.pipeline_mode<synchronous>, transform_indices = @transform_1, window_bounds = array<i64: 8, 1>}, {transform_indices = @transform_2, window_bounds = array<i64: 1, 1, 4, 128>}, {transform_indices = @transform_3, window_bounds = array<i64: 1, 1, 4, 128>}, {transform_indices = @transform_4, window_bounds = array<i64: 1, 1, 8, 64>}]} {
    %cst = arith.constant 0.000000e+00 : f32
    %0 = vector.broadcast %cst : f32 to vector<8x64xf32>
    %c0 = arith.constant 0 : index
    %c0_0 = arith.constant 0 : index
    %c0_1 = arith.constant 0 : index
    %c0_2 = arith.constant 0 : index
    %1 = vector.load %arg5[%c0, %c0_0, %c0_1, %c0_2] : memref<1x1x4x128xf32, #tpu.memory_space<vmem>>, vector<1x1x4x64xf32>
    %2 = vector.shape_cast %1 : vector<1x1x4x64xf32> to vector<4x64xf32>
    %c0_3 = arith.constant 0 : index
    %c0_4 = arith.constant 0 : index
    %c0_5 = arith.constant 0 : index
    %3 = vector.load %arg2[%c0_3, %c0_4, %c0_5] : memref<2x8x4xf32, #tpu.memory_space<vmem>>, vector<1x8x4xf32>
    %4 = vector.shape_cast %3 : vector<1x8x4xf32> to vector<8x4xf32>
    %cst_6 = arith.constant dense<0.000000e+00> : vector<8x64xf32>
    %5 = tpu.matmul %4, %2, %cst_6 {dimension_numbers = #tpu.dot_dimension_numbers<[1], [0], [0], [1], [0, 0, 1, 1], [], []>} : vector<8x4xf32>, vector<4x64xf32>, vector<8x64xf32> -> vector<8x64xf32>
    %6 = arith.addf %0, %5 : vector<8x64xf32>
    %c0_7 = arith.constant 0 : index
    %c0_8 = arith.constant 0 : index
    %c0_9 = arith.constant 0 : index
    %c0_10 = arith.constant 0 : index
    %7 = vector.load %arg4[%c0_7, %c0_8, %c0_9, %c0_10] : memref<1x1x4x128xf32, #tpu.memory_space<vmem>>, vector<1x1x4x64xf32>
    %8 = vector.shape_cast %7 : vector<1x1x4x64xf32> to vector<4x64xf32>
    %c1 = arith.constant 1 : index
    %c0_11 = arith.constant 0 : index
    %c0_12 = arith.constant 0 : index
    %9 = vector.load %arg2[%c1, %c0_11, %c0_12] : memref<2x8x4xf32, #tpu.memory_space<vmem>>, vector<1x8x4xf32>
    %10 = vector.shape_cast %9 : vector<1x8x4xf32> to vector<8x4xf32>
    %cst_13 = arith.constant dense<0.000000e+00> : vector<8x64xf32>
    %11 = tpu.matmul %10, %8, %cst_13 {dimension_numbers = #tpu.dot_dimension_numbers<[1], [0], [0], [1], [0, 0, 1, 1], [], []>} : vector<8x4xf32>, vector<4x64xf32>, vector<8x64xf32> -> vector<8x64xf32>
    %12 = arith.addf %6, %11 : vector<8x64xf32>
    %c0_14 = arith.constant 0 : index
    %c0_15 = arith.constant 0 : index
    %13 = vector.load %arg3[%c0_14, %c0_15] : memref<8x1xf32, #tpu.memory_space<vmem>>, vector<8x1xf32>
    %14 = vector.broadcast %13 : vector<8x1xf32> to vector<8x64xf32>
    %15 = arith.addf %12, %14 : vector<8x64xf32>
    %c0_16 = arith.constant 0 : index
    %c0_17 = arith.constant 0 : index
    %c0_18 = arith.constant 0 : index
    %c0_19 = arith.constant 0 : index
    %16 = vector.load %arg6[%c0_16, %c0_17, %c0_18, %c0_19] : memref<1x1x8x64xf32, #tpu.memory_space<vmem>>, vector<1x1x8x64xf32>
    %17 = vector.shape_cast %16 : vector<1x1x8x64xf32> to vector<8x64xf32>
    %18 = vector.shape_cast %15 : vector<8x64xf32> to vector<1x1x8x64xf32>
    tpu.vector_store %arg6[%c0_16, %c0_17, %c0_18, %c0_19], %18 {strides = array<i32>} : memref<1x1x8x64xf32, #tpu.memory_space<vmem>>, vector<1x1x8x64xf32>,
    return
  }
  func.func @transform_0(%arg0: i32, %arg1: i32) -> (i32, i32, i32) {
    %c0_i32 = arith.constant 0 : i32
    %c0_i32_0 = arith.constant 0 : i32
    %c0_i32_1 = arith.constant 0 : i32
    %c0_i32_2 = arith.constant 0 : i32
    return %c0_i32, %c0_i32_0, %c0_i32_1 : i32, i32, i32
  }
  func.func @transform_1(%arg0: i32, %arg1: i32) -> (i32, i32) {
    %c0_i32 = arith.constant 0 : i32
    %c0_i32_0 = arith.constant 0 : i32
    %c0_i32_1 = arith.constant 0 : i32
    return %c0_i32, %c0_i32_0 : i32, i32
  }
  func.func @transform_2(%arg0: i32, %arg1: i32) -> (i32, i32, i32, i32) {
    %c0_i32 = arith.constant 0 : i32
    %0 = arith.addi %arg1, %c0_i32 : i32
    %c0_i32_0 = arith.constant 0 : i32
    %c0_i32_1 = arith.constant 0 : i32
    %c0_i32_2 = arith.constant 0 : i32
    return %arg0, %0, %c0_i32_0, %c0_i32_1 : i32, i32, i32, i32
  }
  func.func @transform_3(%arg0: i32, %arg1: i32) -> (i32, i32, i32, i32) {
    %c1_i32 = arith.constant 1 : i32
    %0 = arith.addi %arg1, %c1_i32 : i32
    %c0_i32 = arith.constant 0 : i32
    %c0_i32_0 = arith.constant 0 : i32
    %c0_i32_1 = arith.constant 0 : i32
    return %arg0, %0, %c0_i32, %c0_i32_0 : i32, i32, i32, i32
  }
  func.func @transform_4(%arg0: i32, %arg1: i32) -> (i32, i32, i32, i32) {
    %c0_i32 = arith.constant 0 : i32
    %c0_i32_0 = arith.constant 0 : i32
    %c0_i32_1 = arith.constant 0 : i32
    return %arg0, %arg1, %c0_i32, %c0_i32_0 : i32, i32, i32, i32
  }
}

module attributes {stable_mosaic.version = 11 : i64} {
  func.func @kernel(%arg0: i32, %arg1: i32, %arg2: memref<4x8x4xf32, #tpu.memory_space<vmem>>, %arg3: memref<8x1xf32, #tpu.memory_space<vmem>>, %arg4: memref<1x1x4x128xf32, #tpu.memory_space<vmem>>, %arg5: memref<1x1x4x128xf32, #tpu.memory_space<vmem>>, %arg6: memref<1x1x8x72xf32, #tpu.memory_space<vmem>>) attributes {dimension_semantics = [#tpu.dimension_semantics<parallel>, #tpu.dimension_semantics<parallel>], iteration_bounds = array<i64: 2, 8>, scalar_prefetch = 0 : i64, scratch_operands = 0 : i64, tpu.core_type = #tpu.core_type<tc>, window_params = [{pipeline_mode = #tpu.pipeline_mode<synchronous>, transform_indices = @transform_0, window_bounds = array<i64: 4, 8, 4>}, {pipeline_mode = #tpu.pipeline_mode<synchronous>, transform_indices = @transform_1, window_bounds = array<i64: 8, 1>}, {transform_indices = @transform_2, window_bounds = array<i64: 1, 1, 4, 128>}, {transform_indices = @transform_3, window_bounds = array<i64: 1, 1, 4, 128>}, {transform_indices = @transform_4, window_bounds = array<i64: 1, 1, 8, 72>}]} {
    %cst = arith.constant 0.000000e+00 : f32
    %0 = vector.broadcast %cst : f32 to vector<8x72xf32>
    %c0 = arith.constant 0 : index
    %c0_0 = arith.constant 0 : index
    %c0_1 = arith.constant 0 : index
    %c1 = arith.constant 1 : index
    %1 = vector.load %arg5[%c0, %c0_0, %c0_1, %c1] : memref<1x1x4x128xf32, #tpu.memory_space<vmem>>, vector<1x1x4x72xf32>
    %2 = vector.shape_cast %1 : vector<1x1x4x72xf32> to vector<4x72xf32>
    %c0_2 = arith.constant 0 : index
    %c0_3 = arith.constant 0 : index
    %c0_4 = arith.constant 0 : index
    %3 = vector.load %arg2[%c0_2, %c0_3, %c0_4] : memref<4x8x4xf32, #tpu.memory_space<vmem>>, vector<1x8x4xf32>
    %4 = vector.shape_cast %3 : vector<1x8x4xf32> to vector<8x4xf32>
    %cst_5 = arith.constant dense<0.000000e+00> : vector<8x72xf32>
    %5 = tpu.matmul %4, %2, %cst_5 {dimension_numbers = #tpu.dot_dimension_numbers<[1], [0], [0], [1], [0, 0, 1, 1], [], []>} : vector<8x4xf32>, vector<4x72xf32>, vector<8x72xf32> -> vector<8x72xf32>
    %6 = arith.addf %0, %5 : vector<8x72xf32>
    %c0_6 = arith.constant 0 : index
    %c0_7 = arith.constant 0 : index
    %c0_8 = arith.constant 0 : index
    %c0_9 = arith.constant 0 : index
    %7 = vector.load %arg5[%c0_6, %c0_7, %c0_8, %c0_9] : memref<1x1x4x128xf32, #tpu.memory_space<vmem>>, vector<1x1x4x72xf32>
    %8 = vector.shape_cast %7 : vector<1x1x4x72xf32> to vector<4x72xf32>
    %c1_10 = arith.constant 1 : index
    %c0_11 = arith.constant 0 : index
    %c0_12 = arith.constant 0 : index
    %9 = vector.load %arg2[%c1_10, %c0_11, %c0_12] : memref<4x8x4xf32, #tpu.memory_space<vmem>>, vector<1x8x4xf32>
    %10 = vector.shape_cast %9 : vector<1x8x4xf32> to vector<8x4xf32>
    %cst_13 = arith.constant dense<0.000000e+00> : vector<8x72xf32>
    %11 = tpu.matmul %10, %8, %cst_13 {dimension_numbers = #tpu.dot_dimension_numbers<[1], [0], [0], [1], [0, 0, 1, 1], [], []>} : vector<8x4xf32>, vector<4x72xf32>, vector<8x72xf32> -> vector<8x72xf32>
    %12 = arith.addf %6, %11 : vector<8x72xf32>
    %c0_14 = arith.constant 0 : index
    %c0_15 = arith.constant 0 : index
    %c0_16 = arith.constant 0 : index
    %c1_17 = arith.constant 1 : index
    %13 = vector.load %arg4[%c0_14, %c0_15, %c0_16, %c1_17] : memref<1x1x4x128xf32, #tpu.memory_space<vmem>>, vector<1x1x4x72xf32>
    %14 = vector.shape_cast %13 : vector<1x1x4x72xf32> to vector<4x72xf32>
    %c2 = arith.constant 2 : index
    %c0_18 = arith.constant 0 : index
    %c0_19 = arith.constant 0 : index
    %15 = vector.load %arg2[%c2, %c0_18, %c0_19] : memref<4x8x4xf32, #tpu.memory_space<vmem>>, vector<1x8x4xf32>
    %16 = vector.shape_cast %15 : vector<1x8x4xf32> to vector<8x4xf32>
    %cst_20 = arith.constant dense<0.000000e+00> : vector<8x72xf32>
    %17 = tpu.matmul %16, %14, %cst_20 {dimension_numbers = #tpu.dot_dimension_numbers<[1], [0], [0], [1], [0, 0, 1, 1], [], []>} : vector<8x4xf32>, vector<4x72xf32>, vector<8x72xf32> -> vector<8x72xf32>
    %18 = arith.addf %12, %17 : vector<8x72xf32>
    %c0_21 = arith.constant 0 : index
    %c0_22 = arith.constant 0 : index
    %c0_23 = arith.constant 0 : index
    %c0_24 = arith.constant 0 : index
    %19 = vector.load %arg4[%c0_21, %c0_22, %c0_23, %c0_24] : memref<1x1x4x128xf32, #tpu.memory_space<vmem>>, vector<1x1x4x72xf32>
    %20 = vector.shape_cast %19 : vector<1x1x4x72xf32> to vector<4x72xf32>
    %c3 = arith.constant 3 : index
    %c0_25 = arith.constant 0 : index
    %c0_26 = arith.constant 0 : index
    %21 = vector.load %arg2[%c3, %c0_25, %c0_26] : memref<4x8x4xf32, #tpu.memory_space<vmem>>, vector<1x8x4xf32>
    %22 = vector.shape_cast %21 : vector<1x8x4xf32> to vector<8x4xf32>
    %cst_27 = arith.constant dense<0.000000e+00> : vector<8x72xf32>
    %23 = tpu.matmul %22, %20, %cst_27 {dimension_numbers = #tpu.dot_dimension_numbers<[1], [0], [0], [1], [0, 0, 1, 1], [], []>} : vector<8x4xf32>, vector<4x72xf32>, vector<8x72xf32> -> vector<8x72xf32>
    %24 = arith.addf %18, %23 : vector<8x72xf32>
    %c0_28 = arith.constant 0 : index
    %c0_29 = arith.constant 0 : index
    %25 = vector.load %arg3[%c0_28, %c0_29] : memref<8x1xf32, #tpu.memory_space<vmem>>, vector<8x1xf32>
    %26 = vector.broadcast %25 : vector<8x1xf32> to vector<8x72xf32>
    %27 = arith.addf %24, %26 : vector<8x72xf32>
    %c0_30 = arith.constant 0 : index
    %c0_31 = arith.constant 0 : index
    %c0_32 = arith.constant 0 : index
    %c0_33 = arith.constant 0 : index
    %28 = vector.load %arg6[%c0_30, %c0_31, %c0_32, %c0_33] : memref<1x1x8x72xf32, #tpu.memory_space<vmem>>, vector<1x1x8x72xf32>
    %29 = vector.shape_cast %28 : vector<1x1x8x72xf32> to vector<8x72xf32>
    %30 = vector.shape_cast %27 : vector<8x72xf32> to vector<1x1x8x72xf32>
    tpu.vector_store %arg6[%c0_30, %c0_31, %c0_32, %c0_33], %30 {strides = array<i32>} : memref<1x1x8x72xf32, #tpu.memory_space<vmem>>, vector<1x1x8x72xf32>,
    return
  }
  func.func @transform_0(%arg0: i32, %arg1: i32) -> (i32, i32, i32) {
    %c0_i32 = arith.constant 0 : i32
    %c0_i32_0 = arith.constant 0 : i32
    %c0_i32_1 = arith.constant 0 : i32
    %c0_i32_2 = arith.constant 0 : i32
    return %c0_i32, %c0_i32_0, %c0_i32_1 : i32, i32, i32
  }
  func.func @transform_1(%arg0: i32, %arg1: i32) -> (i32, i32) {
    %c0_i32 = arith.constant 0 : i32
    %c0_i32_0 = arith.constant 0 : i32
    %c0_i32_1 = arith.constant 0 : i32
    return %c0_i32, %c0_i32_0 : i32, i32
  }
  func.func @transform_2(%arg0: i32, %arg1: i32) -> (i32, i32, i32, i32) {
    %c0_i32 = arith.constant 0 : i32
    %0 = arith.addi %arg1, %c0_i32 : i32
    %c0_i32_0 = arith.constant 0 : i32
    %c0_i32_1 = arith.constant 0 : i32
    %c0_i32_2 = arith.constant 0 : i32
    return %arg0, %0, %c0_i32_0, %c0_i32_1 : i32, i32, i32, i32
  }
  func.func @transform_3(%arg0: i32, %arg1: i32) -> (i32, i32, i32, i32) {
    %c1_i32 = arith.constant 1 : i32
    %0 = arith.addi %arg1, %c1_i32 : i32
    %c0_i32 = arith.constant 0 : i32
    %c0_i32_0 = arith.constant 0 : i32
    %c0_i32_1 = arith.constant 0 : i32
    return %arg0, %0, %c0_i32, %c0_i32_0 : i32, i32, i32, i32
  }
  func.func @transform_4(%arg0: i32, %arg1: i32) -> (i32, i32, i32, i32) {
    %c0_i32 = arith.constant 0 : i32
    %c0_i32_0 = arith.constant 0 : i32
    %c0_i32_1 = arith.constant 0 : i32
    return %arg0, %arg1, %c0_i32, %c0_i32_0 : i32, i32, i32, i32
  }
}

module attributes {stable_mosaic.version = 11 : i64} {
  func.func @kernel(%arg0: i32, %arg1: i32, %arg2: memref<4x8x4xf32, #tpu.memory_space<vmem>>, %arg3: memref<8x1xf32, #tpu.memory_space<vmem>>, %arg4: memref<1x1x4x128xf32, #tpu.memory_space<vmem>>, %arg5: memref<1x1x4x128xf32, #tpu.memory_space<vmem>>, %arg6: memref<1x1x8x64xf32, #tpu.memory_space<vmem>>) attributes {dimension_semantics = [#tpu.dimension_semantics<parallel>, #tpu.dimension_semantics<parallel>], iteration_bounds = array<i64: 2, 8>, scalar_prefetch = 0 : i64, scratch_operands = 0 : i64, tpu.core_type = #tpu.core_type<tc>, window_params = [{pipeline_mode = #tpu.pipeline_mode<synchronous>, transform_indices = @transform_0, window_bounds = array<i64: 4, 8, 4>}, {pipeline_mode = #tpu.pipeline_mode<synchronous>, transform_indices = @transform_1, window_bounds = array<i64: 8, 1>}, {transform_indices = @transform_2, window_bounds = array<i64: 1, 1, 4, 128>}, {transform_indices = @transform_3, window_bounds = array<i64: 1, 1, 4, 128>}, {transform_indices = @transform_4, window_bounds = array<i64: 1, 1, 8, 64>}]} {
    %cst = arith.constant 0.000000e+00 : f32
    %0 = vector.broadcast %cst : f32 to vector<8x64xf32>
    %c0 = arith.constant 0 : index
    %c0_0 = arith.constant 0 : index
    %c0_1 = arith.constant 0 : index
    %c8 = arith.constant 8 : index
    %1 = vector.load %arg5[%c0, %c0_0, %c0_1, %c8] : memref<1x1x4x128xf32, #tpu.memory_space<vmem>>, vector<1x1x4x64xf32>
    %2 = vector.shape_cast %1 : vector<1x1x4x64xf32> to vector<4x64xf32>
    %c0_2 = arith.constant 0 : index
    %c0_3 = arith.constant 0 : index
    %c0_4 = arith.constant 0 : index
    %3 = vector.load %arg2[%c0_2, %c0_3, %c0_4] : memref<4x8x4xf32, #tpu.memory_space<vmem>>, vector<1x8x4xf32>
    %4 = vector.shape_cast %3 : vector<1x8x4xf32> to vector<8x4xf32>
    %cst_5 = arith.constant dense<0.000000e+00> : vector<8x64xf32>
    %5 = tpu.matmul %4, %2, %cst_5 {dimension_numbers = #tpu.dot_dimension_numbers<[1], [0], [0], [1], [0, 0, 1, 1], [], []>} : vector<8x4xf32>, vector<4x64xf32>, vector<8x64xf32> -> vector<8x64xf32>
    %6 = arith.addf %0, %5 : vector<8x64xf32>
    %c0_6 = arith.constant 0 : index
    %c0_7 = arith.constant 0 : index
    %c0_8 = arith.constant 0 : index
    %c0_9 = arith.constant 0 : index
    %7 = vector.load %arg5[%c0_6, %c0_7, %c0_8, %c0_9] : memref<1x1x4x128xf32, #tpu.memory_space<vmem>>, vector<1x1x4x64xf32>
    %8 = vector.shape_cast %7 : vector<1x1x4x64xf32> to vector<4x64xf32>
    %c1 = arith.constant 1 : index
    %c0_10 = arith.constant 0 : index
    %c0_11 = arith.constant 0 : index
    %9 = vector.load %arg2[%c1, %c0_10, %c0_11] : memref<4x8x4xf32, #tpu.memory_space<vmem>>, vector<1x8x4xf32>
    %10 = vector.shape_cast %9 : vector<1x8x4xf32> to vector<8x4xf32>
    %cst_12 = arith.constant dense<0.000000e+00> : vector<8x64xf32>
    %11 = tpu.matmul %10, %8, %cst_12 {dimension_numbers = #tpu.dot_dimension_numbers<[1], [0], [0], [1], [0, 0, 1, 1], [], []>} : vector<8x4xf32>, vector<4x64xf32>, vector<8x64xf32> -> vector<8x64xf32>
    %12 = arith.addf %6, %11 : vector<8x64xf32>
    %c0_13 = arith.constant 0 : index
    %c0_14 = arith.constant 0 : index
    %c0_15 = arith.constant 0 : index
    %c8_16 = arith.constant 8 : index
    %13 = vector.load %arg4[%c0_13, %c0_14, %c0_15, %c8_16] : memref<1x1x4x128xf32, #tpu.memory_space<vmem>>, vector<1x1x4x64xf32>
    %14 = vector.shape_cast %13 : vector<1x1x4x64xf32> to vector<4x64xf32>
    %c2 = arith.constant 2 : index
    %c0_17 = arith.constant 0 : index
    %c0_18 = arith.constant 0 : index
    %15 = vector.load %arg2[%c2, %c0_17, %c0_18] : memref<4x8x4xf32, #tpu.memory_space<vmem>>, vector<1x8x4xf32>
    %16 = vector.shape_cast %15 : vector<1x8x4xf32> to vector<8x4xf32>
    %cst_19 = arith.constant dense<0.000000e+00> : vector<8x64xf32>
    %17 = tpu.matmul %16, %14, %cst_19 {dimension_numbers = #tpu.dot_dimension_numbers<[1], [0], [0], [1], [0, 0, 1, 1], [], []>} : vector<8x4xf32>, vector<4x64xf32>, vector<8x64xf32> -> vector<8x64xf32>
    %18 = arith.addf %12, %17 : vector<8x64xf32>
    %c0_20 = arith.constant 0 : index
    %c0_21 = arith.constant 0 : index
    %c0_22 = arith.constant 0 : index
    %c0_23 = arith.constant 0 : index
    %19 = vector.load %arg4[%c0_20, %c0_21, %c0_22, %c0_23] : memref<1x1x4x128xf32, #tpu.memory_space<vmem>>, vector<1x1x4x64xf32>
    %20 = vector.shape_cast %19 : vector<1x1x4x64xf32> to vector<4x64xf32>
    %c3 = arith.constant 3 : index
    %c0_24 = arith.constant 0 : index
    %c0_25 = arith.constant 0 : index
    %21 = vector.load %arg2[%c3, %c0_24, %c0_25] : memref<4x8x4xf32, #tpu.memory_space<vmem>>, vector<1x8x4xf32>
    %22 = vector.shape_cast %21 : vector<1x8x4xf32> to vector<8x4xf32>
    %cst_26 = arith.constant dense<0.000000e+00> : vector<8x64xf32>
    %23 = tpu.matmul %22, %20, %cst_26 {dimension_numbers = #tpu.dot_dimension_numbers<[1], [0], [0], [1], [0, 0, 1, 1], [], []>} : vector<8x4xf32>, vector<4x64xf32>, vector<8x64xf32> -> vector<8x64xf32>
    %24 = arith.addf %18, %23 : vector<8x64xf32>
    %c0_27 = arith.constant 0 : index
    %c0_28 = arith.constant 0 : index
    %25 = vector.load %arg3[%c0_27, %c0_28] : memref<8x1xf32, #tpu.memory_space<vmem>>, vector<8x1xf32>
    %26 = vector.broadcast %25 : vector<8x1xf32> to vector<8x64xf32>
    %27 = arith.addf %24, %26 : vector<8x64xf32>
    %c0_29 = arith.constant 0 : index
    %c0_30 = arith.constant 0 : index
    %c0_31 = arith.constant 0 : index
    %c0_32 = arith.constant 0 : index
    %28 = vector.load %arg6[%c0_29, %c0_30, %c0_31, %c0_32] : memref<1x1x8x64xf32, #tpu.memory_space<vmem>>, vector<1x1x8x64xf32>
    %29 = vector.shape_cast %28 : vector<1x1x8x64xf32> to vector<8x64xf32>
    %30 = vector.shape_cast %27 : vector<8x64xf32> to vector<1x1x8x64xf32>
    tpu.vector_store %arg6[%c0_29, %c0_30, %c0_31, %c0_32], %30 {strides = array<i32>} : memref<1x1x8x64xf32, #tpu.memory_space<vmem>>, vector<1x1x8x64xf32>,
    return
  }
  func.func @transform_0(%arg0: i32, %arg1: i32) -> (i32, i32, i32) {
    %c0_i32 = arith.constant 0 : i32
    %c0_i32_0 = arith.constant 0 : i32
    %c0_i32_1 = arith.constant 0 : i32
    %c0_i32_2 = arith.constant 0 : i32
    return %c0_i32, %c0_i32_0, %c0_i32_1 : i32, i32, i32
  }
  func.func @transform_1(%arg0: i32, %arg1: i32) -> (i32, i32) {
    %c0_i32 = arith.constant 0 : i32
    %c0_i32_0 = arith.constant 0 : i32
    %c0_i32_1 = arith.constant 0 : i32
    return %c0_i32, %c0_i32_0 : i32, i32
  }
  func.func @transform_2(%arg0: i32, %arg1: i32) -> (i32, i32, i32, i32) {
    %c0_i32 = arith.constant 0 : i32
    %0 = arith.addi %arg1, %c0_i32 : i32
    %c0_i32_0 = arith.constant 0 : i32
    %c0_i32_1 = arith.constant 0 : i32
    %c0_i32_2 = arith.constant 0 : i32
    return %arg0, %0, %c0_i32_0, %c0_i32_1 : i32, i32, i32, i32
  }
  func.func @transform_3(%arg0: i32, %arg1: i32) -> (i32, i32, i32, i32) {
    %c1_i32 = arith.constant 1 : i32
    %0 = arith.addi %arg1, %c1_i32 : i32
    %c0_i32 = arith.constant 0 : i32
    %c0_i32_0 = arith.constant 0 : i32
    %c0_i32_1 = arith.constant 0 : i32
    return %arg0, %0, %c0_i32, %c0_i32_0 : i32, i32, i32, i32
  }
  func.func @transform_4(%arg0: i32, %arg1: i32) -> (i32, i32, i32, i32) {
    %c0_i32 = arith.constant 0 : i32
    %c0_i32_0 = arith.constant 0 : i32
    %c0_i32_1 = arith.constant 0 : i32
    return %arg0, %arg1, %c0_i32, %c0_i32_0 : i32, i32, i32, i32
  }
}

module attributes {stable_mosaic.version = 11 : i64} {
  func.func @kernel(%arg0: i32, %arg1: i32, %arg2: memref<8x8x4xf32, #tpu.memory_space<vmem>>, %arg3: memref<8x1xf32, #tpu.memory_space<vmem>>, %arg4: memref<1x1x4x128xf32, #tpu.memory_space<vmem>>, %arg5: memref<1x1x4x128xf32, #tpu.memory_space<vmem>>, %arg6: memref<1x1x8x72xf32, #tpu.memory_space<vmem>>) attributes {dimension_semantics = [#tpu.dimension_semantics<parallel>, #tpu.dimension_semantics<parallel>], iteration_bounds = array<i64: 2, 8>, scalar_prefetch = 0 : i64, scratch_operands = 0 : i64, tpu.core_type = #tpu.core_type<tc>, window_params = [{pipeline_mode = #tpu.pipeline_mode<synchronous>, transform_indices = @transform_0, window_bounds = array<i64: 8, 8, 4>}, {pipeline_mode = #tpu.pipeline_mode<synchronous>, transform_indices = @transform_1, window_bounds = array<i64: 8, 1>}, {transform_indices = @transform_2, window_bounds = array<i64: 1, 1, 4, 128>}, {transform_indices = @transform_3, window_bounds = array<i64: 1, 1, 4, 128>}, {transform_indices = @transform_4, window_bounds = array<i64: 1, 1, 8, 72>}]} {
    %cst = arith.constant 0.000000e+00 : f32
    %0 = vector.broadcast %cst : f32 to vector<8x72xf32>
    %c0 = arith.constant 0 : index
    %c0_0 = arith.constant 0 : index
    %c0_1 = arith.constant 0 : index
    %c10 = arith.constant 10 : index
    %1 = vector.load %arg5[%c0, %c0_0, %c0_1, %c10] : memref<1x1x4x128xf32, #tpu.memory_space<vmem>>, vector<1x1x4x72xf32>
    %2 = vector.shape_cast %1 : vector<1x1x4x72xf32> to vector<4x72xf32>
    %c0_2 = arith.constant 0 : index
    %c0_3 = arith.constant 0 : index
    %c0_4 = arith.constant 0 : index
    %3 = vector.load %arg2[%c0_2, %c0_3, %c0_4] : memref<8x8x4xf32, #tpu.memory_space<vmem>>, vector<1x8x4xf32>
    %4 = vector.shape_cast %3 : vector<1x8x4xf32> to vector<8x4xf32>
    %cst_5 = arith.constant dense<0.000000e+00> : vector<8x72xf32>
    %5 = tpu.matmul %4, %2, %cst_5 {dimension_numbers = #tpu.dot_dimension_numbers<[1], [0], [0], [1], [0, 0, 1, 1], [], []>} : vector<8x4xf32>, vector<4x72xf32>, vector<8x72xf32> -> vector<8x72xf32>
    %6 = arith.addf %0, %5 : vector<8x72xf32>
    %c0_6 = arith.constant 0 : index
    %c0_7 = arith.constant 0 : index
    %c0_8 = arith.constant 0 : index
    %c9 = arith.constant 9 : index
    %7 = vector.load %arg5[%c0_6, %c0_7, %c0_8, %c9] : memref<1x1x4x128xf32, #tpu.memory_space<vmem>>, vector<1x1x4x72xf32>
    %8 = vector.shape_cast %7 : vector<1x1x4x72xf32> to vector<4x72xf32>
    %c1 = arith.constant 1 : index
    %c0_9 = arith.constant 0 : index
    %c0_10 = arith.constant 0 : index
    %9 = vector.load %arg2[%c1, %c0_9, %c0_10] : memref<8x8x4xf32, #tpu.memory_space<vmem>>, vector<1x8x4xf32>
    %10 = vector.shape_cast %9 : vector<1x8x4xf32> to vector<8x4xf32>
    %cst_11 = arith.constant dense<0.000000e+00> : vector<8x72xf32>
    %11 = tpu.matmul %10, %8, %cst_11 {dimension_numbers = #tpu.dot_dimension_numbers<[1], [0], [0], [1], [0, 0, 1, 1], [], []>} : vector<8x4xf32>, vector<4x72xf32>, vector<8x72xf32> -> vector<8x72xf32>
    %12 = arith.addf %6, %11 : vector<8x72xf32>
    %c0_12 = arith.constant 0 : index
    %c0_13 = arith.constant 0 : index
    %c0_14 = arith.constant 0 : index
    %c1_15 = arith.constant 1 : index
    %13 = vector.load %arg5[%c0_12, %c0_13, %c0_14, %c1_15] : memref<1x1x4x128xf32, #tpu.memory_space<vmem>>, vector<1x1x4x72xf32>
    %14 = vector.shape_cast %13 : vector<1x1x4x72xf32> to vector<4x72xf32>
    %c2 = arith.constant 2 : index
    %c0_16 = arith.constant 0 : index
    %c0_17 = arith.constant 0 : index
    %15 = vector.load %arg2[%c2, %c0_16, %c0_17] : memref<8x8x4xf32, #tpu.memory_space<vmem>>, vector<1x8x4xf32>
    %16 = vector.shape_cast %15 : vector<1x8x4xf32> to vector<8x4xf32>
    %cst_18 = arith.constant dense<0.000000e+00> : vector<8x72xf32>
    %17 = tpu.matmul %16, %14, %cst_18 {dimension_numbers = #tpu.dot_dimension_numbers<[1], [0], [0], [1], [0, 0, 1, 1], [], []>} : vector<8x4xf32>, vector<4x72xf32>, vector<8x72xf32> -> vector<8x72xf32>
    %18 = arith.addf %12, %17 : vector<8x72xf32>
    %c0_19 = arith.constant 0 : index
    %c0_20 = arith.constant 0 : index
    %c0_21 = arith.constant 0 : index
    %c0_22 = arith.constant 0 : index
    %19 = vector.load %arg5[%c0_19, %c0_20, %c0_21, %c0_22] : memref<1x1x4x128xf32, #tpu.memory_space<vmem>>, vector<1x1x4x72xf32>
    %20 = vector.shape_cast %19 : vector<1x1x4x72xf32> to vector<4x72xf32>
    %c3 = arith.constant 3 : index
    %c0_23 = arith.constant 0 : index
    %c0_24 = arith.constant 0 : index
    %21 = vector.load %arg2[%c3, %c0_23, %c0_24] : memref<8x8x4xf32, #tpu.memory_space<vmem>>, vector<1x8x4xf32>
    %22 = vector.shape_cast %21 : vector<1x8x4xf32> to vector<8x4xf32>
    %cst_25 = arith.constant dense<0.000000e+00> : vector<8x72xf32>
    %23 = tpu.matmul %22, %20, %cst_25 {dimension_numbers = #tpu.dot_dimension_numbers<[1], [0], [0], [1], [0, 0, 1, 1], [], []>} : vector<8x4xf32>, vector<4x72xf32>, vector<8x72xf32> -> vector<8x72xf32>
    %24 = arith.addf %18, %23 : vector<8x72xf32>
    %c0_26 = arith.constant 0 : index
    %c0_27 = arith.constant 0 : index
    %c0_28 = arith.constant 0 : index
    %c10_29 = arith.constant 10 : index
    %25 = vector.load %arg4[%c0_26, %c0_27, %c0_28, %c10_29] : memref<1x1x4x128xf32, #tpu.memory_space<vmem>>, vector<1x1x4x72xf32>
    %26 = vector.shape_cast %25 : vector<1x1x4x72xf32> to vector<4x72xf32>
    %c4 = arith.constant 4 : index
    %c0_30 = arith.constant 0 : index
    %c0_31 = arith.constant 0 : index
    %27 = vector.load %arg2[%c4, %c0_30, %c0_31] : memref<8x8x4xf32, #tpu.memory_space<vmem>>, vector<1x8x4xf32>
    %28 = vector.shape_cast %27 : vector<1x8x4xf32> to vector<8x4xf32>
    %cst_32 = arith.constant dense<0.000000e+00> : vector<8x72xf32>
    %29 = tpu.matmul %28, %26, %cst_32 {dimension_numbers = #tpu.dot_dimension_numbers<[1], [0], [0], [1], [0, 0, 1, 1], [], []>} : vector<8x4xf32>, vector<4x72xf32>, vector<8x72xf32> -> vector<8x72xf32>
    %30 = arith.addf %24, %29 : vector<8x72xf32>
    %c0_33 = arith.constant 0 : index
    %c0_34 = arith.constant 0 : index
    %c0_35 = arith.constant 0 : index
    %c9_36 = arith.constant 9 : index
    %31 = vector.load %arg4[%c0_33, %c0_34, %c0_35, %c9_36] : memref<1x1x4x128xf32, #tpu.memory_space<vmem>>, vector<1x1x4x72xf32>
    %32 = vector.shape_cast %31 : vector<1x1x4x72xf32> to vector<4x72xf32>
    %c5 = arith.constant 5 : index
    %c0_37 = arith.constant 0 : index
    %c0_38 = arith.constant 0 : index
    %33 = vector.load %arg2[%c5, %c0_37, %c0_38] : memref<8x8x4xf32, #tpu.memory_space<vmem>>, vector<1x8x4xf32>
    %34 = vector.shape_cast %33 : vector<1x8x4xf32> to vector<8x4xf32>
    %cst_39 = arith.constant dense<0.000000e+00> : vector<8x72xf32>
    %35 = tpu.matmul %34, %32, %cst_39 {dimension_numbers = #tpu.dot_dimension_numbers<[1], [0], [0], [1], [0, 0, 1, 1], [], []>} : vector<8x4xf32>, vector<4x72xf32>, vector<8x72xf32> -> vector<8x72xf32>
    %36 = arith.addf %30, %35 : vector<8x72xf32>
    %c0_40 = arith.constant 0 : index
    %c0_41 = arith.constant 0 : index
    %c0_42 = arith.constant 0 : index
    %c1_43 = arith.constant 1 : index
    %37 = vector.load %arg4[%c0_40, %c0_41, %c0_42, %c1_43] : memref<1x1x4x128xf32, #tpu.memory_space<vmem>>, vector<1x1x4x72xf32>
    %38 = vector.shape_cast %37 : vector<1x1x4x72xf32> to vector<4x72xf32>
    %c6 = arith.constant 6 : index
    %c0_44 = arith.constant 0 : index
    %c0_45 = arith.constant 0 : index
    %39 = vector.load %arg2[%c6, %c0_44, %c0_45] : memref<8x8x4xf32, #tpu.memory_space<vmem>>, vector<1x8x4xf32>
    %40 = vector.shape_cast %39 : vector<1x8x4xf32> to vector<8x4xf32>
    %cst_46 = arith.constant dense<0.000000e+00> : vector<8x72xf32>
    %41 = tpu.matmul %40, %38, %cst_46 {dimension_numbers = #tpu.dot_dimension_numbers<[1], [0], [0], [1], [0, 0, 1, 1], [], []>} : vector<8x4xf32>, vector<4x72xf32>, vector<8x72xf32> -> vector<8x72xf32>
    %42 = arith.addf %36, %41 : vector<8x72xf32>
    %c0_47 = arith.constant 0 : index
    %c0_48 = arith.constant 0 : index
    %c0_49 = arith.constant 0 : index
    %c0_50 = arith.constant 0 : index
    %43 = vector.load %arg4[%c0_47, %c0_48, %c0_49, %c0_50] : memref<1x1x4x128xf32, #tpu.memory_space<vmem>>, vector<1x1x4x72xf32>
    %44 = vector.shape_cast %43 : vector<1x1x4x72xf32> to vector<4x72xf32>
    %c7 = arith.constant 7 : index
    %c0_51 = arith.constant 0 : index
    %c0_52 = arith.constant 0 : index
    %45 = vector.load %arg2[%c7, %c0_51, %c0_52] : memref<8x8x4xf32, #tpu.memory_space<vmem>>, vector<1x8x4xf32>
    %46 = vector.shape_cast %45 : vector<1x8x4xf32> to vector<8x4xf32>
    %cst_53 = arith.constant dense<0.000000e+00> : vector<8x72xf32>
    %47 = tpu.matmul %46, %44, %cst_53 {dimension_numbers = #tpu.dot_dimension_numbers<[1], [0], [0], [1], [0, 0, 1, 1], [], []>} : vector<8x4xf32>, vector<4x72xf32>, vector<8x72xf32> -> vector<8x72xf32>
    %48 = arith.addf %42, %47 : vector<8x72xf32>
    %c0_54 = arith.constant 0 : index
    %c0_55 = arith.constant 0 : index
    %49 = vector.load %arg3[%c0_54, %c0_55] : memref<8x1xf32, #tpu.memory_space<vmem>>, vector<8x1xf32>
    %50 = vector.broadcast %49 : vector<8x1xf32> to vector<8x72xf32>
    %51 = arith.addf %48, %50 : vector<8x72xf32>
    %c0_56 = arith.constant 0 : index
    %c0_57 = arith.constant 0 : index
    %c0_58 = arith.constant 0 : index
    %c0_59 = arith.constant 0 : index
    %52 = vector.load %arg6[%c0_56, %c0_57, %c0_58, %c0_59] : memref<1x1x8x72xf32, #tpu.memory_space<vmem>>, vector<1x1x8x72xf32>
    %53 = vector.shape_cast %52 : vector<1x1x8x72xf32> to vector<8x72xf32>
    %54 = vector.shape_cast %51 : vector<8x72xf32> to vector<1x1x8x72xf32>
    tpu.vector_store %arg6[%c0_56, %c0_57, %c0_58, %c0_59], %54 {strides = array<i32>} : memref<1x1x8x72xf32, #tpu.memory_space<vmem>>, vector<1x1x8x72xf32>,
    return
  }
  func.func @transform_0(%arg0: i32, %arg1: i32) -> (i32, i32, i32) {
    %c0_i32 = arith.constant 0 : i32
    %c0_i32_0 = arith.constant 0 : i32
    %c0_i32_1 = arith.constant 0 : i32
    %c0_i32_2 = arith.constant 0 : i32
    return %c0_i32, %c0_i32_0, %c0_i32_1 : i32, i32, i32
  }
  func.func @transform_1(%arg0: i32, %arg1: i32) -> (i32, i32) {
    %c0_i32 = arith.constant 0 : i32
    %c0_i32_0 = arith.constant 0 : i32
    %c0_i32_1 = arith.constant 0 : i32
    return %c0_i32, %c0_i32_0 : i32, i32
  }
  func.func @transform_2(%arg0: i32, %arg1: i32) -> (i32, i32, i32, i32) {
    %c0_i32 = arith.constant 0 : i32
    %0 = arith.addi %arg1, %c0_i32 : i32
    %c0_i32_0 = arith.constant 0 : i32
    %c0_i32_1 = arith.constant 0 : i32
    %c0_i32_2 = arith.constant 0 : i32
    return %arg0, %0, %c0_i32_0, %c0_i32_1 : i32, i32, i32, i32
  }
  func.func @transform_3(%arg0: i32, %arg1: i32) -> (i32, i32, i32, i32) {
    %c1_i32 = arith.constant 1 : i32
    %0 = arith.addi %arg1, %c1_i32 : i32
    %c0_i32 = arith.constant 0 : i32
    %c0_i32_0 = arith.constant 0 : i32
    %c0_i32_1 = arith.constant 0 : i32
    return %arg0, %0, %c0_i32, %c0_i32_0 : i32, i32, i32, i32
  }
  func.func @transform_4(%arg0: i32, %arg1: i32) -> (i32, i32, i32, i32) {
    %c0_i32 = arith.constant 0 : i32
    %c0_i32_0 = arith.constant 0 : i32
    %c0_i32_1 = arith.constant 0 : i32
    return %arg0, %arg1, %c0_i32, %c0_i32_0 : i32, i32, i32, i32
  }
}

</mosaic_0001>

<llo_original>
// kernel: conv_transpose3d_pallas.8
$region0: #{conv_transpose3d_pallas.8}
  #allocation0 [shape = 'u32[]', space=smem, size = 0x4, offset = 0x4, fixed_abs, tag = 'smem constant byte address 0x4 - core index']
  #allocation1 [shape = 'u32[144,128]{1,0:T(1,128)}', space=vmem, size = 0x12000, scoped, tag = 'internal scratch']
  %s0 = inlined_call_operand.vmem [shape: f32[1,8,4], index: 0, kind: input, shape index: {}]
  %s1 = inlined_call_operand.vmem [shape: f32[8,1], index: 1, kind: input, shape index: {}]
  %s2 = inlined_call_operand.vmem [shape: f32[2,8,4,128], index: 2, kind: input, shape index: {}]
  %s3 = inlined_call_operand.vmem [shape: f32[2,8,8,64], index: 3, kind: output, shape index: {}]
  %s4 = sld [smem:[#allocation0]]
  $region45: #{conv_transpose3d_pallas.8} parent=0
    _
  %s6 = ssub.s32 1, %s4
  %s7 = scalar_select 0, %s6, %s4
  loop: start=0, step=1, limit=18
  $region2: #{conv_transpose3d_pallas.8} parent=0 // loop_pre_header
    _
  $region3: #{conv_transpose3d_pallas.8} parent=0 // loop_header
    %s9 = sphi 0, %s13
    %p10 = scmp.ge.s32.totalorder %s9, 18
    %s16 = sphi 0, %s28
    %s17 = sphi 0, %s24
    %s18 = sphi 0, %s16
    %s19 = sphi 0, %s17
    %s20 = sphi 0, %s18
    %s21 = sphi 0, %s19
    %s29 = sphi 0, %s29
    %s31 = sphi 0, %s29
    %s32 = sphi 0, %s31
    %s46 = sphi 0, %s32
    %s50 = sphi 0, %s50
    %s52 = sphi 0, %s50
    %s53 = sphi 0, %s52
    %s67 = sphi 0, %s53
    %s75 = sphi 0, %s77
    %s78 = sphi 0, %s75
    %s79 = sphi 0, %s78
    %s95 = sphi 0, %s79
    %s103 = sphi 0, %s105
    %s106 = sphi 0, %s103
    %s107 = sphi 0, %s106
    %s123 = sphi 0, %s107
  $region4: #{conv_transpose3d_pallas.8} parent=0 // loop_header_branch
    %12 = sbr.rel (%p10) target = $region8
  $region5: #{conv_transpose3d_pallas.8} parent=0 // loop_body
    %s14 = ssub.s32 %s9, 1
    %s15 = ssub.s32 %s9, 2
    %s22 = sadd.s32 1, %s17
    %p23 = scmp.ge.s32.totalorder %s22, 8
    %s24 = scalar_select %p23, 0, %s22
    %s25 = sadd.s32 1, %s16
    %s26 = scalar_select %p23, %s25, %s16
    %p27 = scmp.ge.s32.totalorder %s26, 2
    %s28 = scalar_select %p27, 0, %s26
    %s30 = sadd.s32 %s29, 1
    %p33 = scmp.eq.s32.totalorder %s9, 15
    %p34 = scmp.ne.s32.totalorder %s29, %s31
    %p35 = scmp.eq.s32.totalorder %s9, 0
    %p36 = por %p34, %p35
    %p37 = scmp.ne.s32.totalorder %s29, %s31
    %p38 = scmp.eq.s32.totalorder %s14, 15
    %p39 = por %p37, %p38
    %p40 = scmp.ne.s32.totalorder %s31, %s32
    %p41 = scmp.eq.s32.totalorder %s14, 0
    %p42 = por %p40, %p41
    %p43 = scmp.ne.s32.totalorder %s31, %s32
    %p44 = scmp.eq.s32.totalorder %s15, 15
    %p45 = por %p43, %p44
    %p47 = scmp.ne.s32.totalorder %s32, %s46
    %p48 = scmp.eq.s32.totalorder %s15, 0
    %p49 = por %p47, %p48
    %s51 = sadd.s32 %s50, 1
    %p54 = scmp.eq.s32.totalorder %s9, 15
    %p55 = scmp.ne.s32.totalorder %s50, %s52
    %p56 = scmp.eq.s32.totalorder %s9, 0
    %p57 = por %p55, %p56
    %p58 = scmp.ne.s32.totalorder %s50, %s52
    %p59 = scmp.eq.s32.totalorder %s14, 15
    %p60 = por %p58, %p59
    %p61 = scmp.ne.s32.totalorder %s52, %s53
    %p62 = scmp.eq.s32.totalorder %s14, 0
    %p63 = por %p61, %p62
    %p64 = scmp.ne.s32.totalorder %s52, %s53
    %p65 = scmp.eq.s32.totalorder %s15, 15
    %p66 = por %p64, %p65
    %p68 = scmp.ne.s32.totalorder %s53, %s67
    %p69 = scmp.eq.s32.totalorder %s15, 0
    %p70 = por %p68, %p69
    %s71 = ssub.s32 %s16, %s28
    %s72 = ssub.s32 %s17, %s24
    %s73 = sor.u32 %s71, %s72
    %p74 = scmp.eq.s32.totalorder %s73, 0
    %s76 = sadd.s32 %s75, 1
    %s77 = scalar_select %p74, %s75, %s76
    %p80 = pneg %p74
    %p81 = scmp.eq.s32.totalorder %s9, 15
    %p82 = por %p80, %p81
    %p83 = scmp.ne.s32.totalorder %s75, %s78
    %p84 = scmp.eq.s32.totalorder %s9, 0
    %p85 = por %p83, %p84
    %p86 = scmp.ne.s32.totalorder %s75, %s78
    %p87 = scmp.eq.s32.totalorder %s14, 15
    %p88 = por %p86, %p87
    %p89 = scmp.ne.s32.totalorder %s78, %s79
    %p90 = scmp.eq.s32.totalorder %s14, 0
    %p91 = por %p89, %p90
    %p92 = scmp.ne.s32.totalorder %s78, %s79
    %p93 = scmp.eq.s32.totalorder %s15, 15
    %p94 = por %p92, %p93
    %p96 = scmp.ne.s32.totalorder %s79, %s95
    %p97 = scmp.eq.s32.totalorder %s15, 0
    %p98 = por %p96, %p97
    %s99 = ssub.s32 %s16, %s28
    %s100 = ssub.s32 %s17, %s24
    %s101 = sor.u32 %s99, %s100
    %p102 = scmp.eq.s32.totalorder %s101, 0
    %s104 = sadd.s32 %s103, 1
    %s105 = scalar_select %p102, %s103, %s104
    %p108 = pneg %p102
    %p109 = scmp.eq.s32.totalorder %s9, 15
    %p110 = por %p108, %p109
    %p111 = scmp.ne.s32.totalorder %s103, %s106
    %p112 = scmp.eq.s32.totalorder %s9, 0
    %p113 = por %p111, %p112
    %p114 = scmp.ne.s32.totalorder %s103, %s106
    %p115 = scmp.eq.s32.totalorder %s14, 15
    %p116 = por %p114, %p115
    %p117 = scmp.ne.s32.totalorder %s106, %s107
    %p118 = scmp.eq.s32.totalorder %s14, 0
    %p119 = por %p117, %p118
    %p120 = scmp.ne.s32.totalorder %s106, %s107
    %p121 = scmp.eq.s32.totalorder %s15, 15
    %p122 = por %p120, %p121
    %p124 = scmp.ne.s32.totalorder %s107, %s123
    %p125 = scmp.eq.s32.totalorder %s15, 0
    %p126 = por %p124, %p125
    %p127 = scmp.le.s32.totalorder 1, %s9
    %p128 = scmp.lt.s32.totalorder %s9, 17
    %p129 = pnand %p127, %p128
    %p130 = pneg %p129
    // Predicated region
    $region9: #{conv_transpose3d_pallas.8} parent=5 // pred_check
      _
    $region10: #{conv_transpose3d_pallas.8} parent=5 // pred_check_branch
      %132 = sbr.rel (%p129) target = $region12
    $region11: #{conv_transpose3d_pallas.8} parent=5 // pred_region
      %s133 = ssub.s32 %s9, 1
      // Predicated region
      $region13: #{conv_transpose3d_pallas.8} parent=11 // pred_check
        %p134 = pneg %p42
      $region14: #{conv_transpose3d_pallas.8} parent=11 // pred_check_branch
        %136 = sbr.rel (%p134) target = $region16
      $region15: #{conv_transpose3d_pallas.8} parent=11 // pred_region
        _
      $region16: #{conv_transpose3d_pallas.8} parent=11 // pred_fallthru
        _
      // Predicated region
      $region17: #{conv_transpose3d_pallas.8} parent=11 // pred_check
        %p137 = pneg %p63
      $region18: #{conv_transpose3d_pallas.8} parent=11 // pred_check_branch
        %139 = sbr.rel (%p137) target = $region20
      $region19: #{conv_transpose3d_pallas.8} parent=11 // pred_region
        _
      $region20: #{conv_transpose3d_pallas.8} parent=11 // pred_fallthru
        _
    $region12: #{conv_transpose3d_pallas.8} parent=5 // pred_fallthru
      _
    %p140 = scmp.lt.s32.totalorder %s9, 16
    // Predicated region
    $region21: #{conv_transpose3d_pallas.8} parent=5 // pred_check
      %p141 = pneg %p140
    $region22: #{conv_transpose3d_pallas.8} parent=5 // pred_check_branch
      %143 = sbr.rel (%p141) target = $region24
    $region23: #{conv_transpose3d_pallas.8} parent=5 // pred_region
      // Predicated region
      $region25: #{conv_transpose3d_pallas.8} parent=23 // pred_check
        %p144 = pneg %p85
      $region26: #{conv_transpose3d_pallas.8} parent=23 // pred_check_branch
        %146 = sbr.rel (%p144) target = $region28
      $region27: #{conv_transpose3d_pallas.8} parent=23 // pred_region
        %p147 = scmp.lt.s32.totalorder %s16, 1
        %s148 = scalar_select %p147, %s16, 1
        %p149 = scmp.lt.s32.totalorder %s17, 7
        %s150 = scalar_select %p149, %s17, 7
        %s151 = smul.addr %s148, 8
        %s152 = sadd.s32 %s150, %s151
        %s153 = smul.addr %s152, 4
        %s154 = scalar_lea.vmem %s2, %s153
      $region28: #{conv_transpose3d_pallas.8} parent=23 // pred_fallthru
        _
    $region24: #{conv_transpose3d_pallas.8} parent=5 // pred_fallthru
      _
    %p155 = scmp.le.s32.totalorder 1, %s9
    %p156 = scmp.lt.s32.totalorder %s9, 17
    %p157 = pnand %p155, %p156
    %p158 = pneg %p157
    // Predicated region
    $region29: #{conv_transpose3d_pallas.8} parent=5 // pred_check
      _
    $region30: #{conv_transpose3d_pallas.8} parent=5 // pred_check_branch
      %160 = sbr.rel (%p157) target = $region32
    $region31: #{conv_transpose3d_pallas.8} parent=5 // pred_region
      %s161 = ssub.s32 %s9, 1
      %p162 = pneg %p42
      %p163 = pneg %p39
      %p164 = pneg %p63
      %p165 = pneg %p60
      %p166 = scmp.lt.s32.totalorder %s18, 1
      %s167 = scalar_select %p166, %s18, 1
      %p168 = scmp.lt.s32.totalorder %s19, 7
      %s169 = scalar_select %p168, %s19, 7
      %s170 = smul.addr %s167, 8
      %s171 = sadd.s32 %s169, %s170
      %s172 = smul.addr %s171, 4
      %s173 = scalar_lea.vmem %s2, %s172
      %p174 = pneg %p91
      %p175 = pneg %p88
      %p176 = pneg %p119
      %p177 = pneg %p116
      %p178 = scmp.lt.s32.totalorder %s18, 1
      %s179 = scalar_select %p178, %s18, 1
      %p180 = scmp.lt.s32.totalorder %s19, 7
      %s181 = scalar_select %p180, %s19, 7
      %s182 = smul.addr %s179, 8
      %s183 = sadd.s32 %s181, %s182
      %s184 = smul.addr %s183, 8
      %s185 = scalar_lea.vmem %s3, %s184
      %p186 = scmp.lt.s32.totalorder %s18, 1
      %s187 = scalar_select %p186, %s18, 1
      %p188 = scmp.lt.s32.totalorder %s19, 7
      %s189 = scalar_select %p188, %s19, 7
      %s190 = smul.addr %s187, 8
      %s191 = sadd.s32 %s189, %s190
      %s192 = smul.addr %s191, 4
      %s193 = scalar_lea.vmem %s2, %s192
      %p194 = scmp.lt.s32.totalorder %s18, 1
      %s195 = scalar_select %p194, %s18, 1
      %p196 = scmp.lt.s32.totalorder %s19, 7
      %s197 = scalar_select %p196, %s19, 7
      %s198 = smul.addr %s195, 8
      %s199 = sadd.s32 %s197, %s198
      %s200 = smul.addr %s199, 8
      %s201 = scalar_lea.vmem %s3, %s200
      %v202 = vld [vmem:[%s193] sm:$0xf]
      %v203 = vld [vmem:[%s0] sm:$0xff]
      %v204 = vld [vmem:[%s1] sm:$0xff]
      %206 = vset.pattern.permute.xlu0 0
      %207 = vperm.xlu0 %206, %v204
      %v208 = vpop.permute.xlu0 %207
      %vm210 = vcmask 31744
      %v212 = vsel %vm210, %v203, 0
      %vm214 = vcmask 1043456
      %v216 = vsel %vm214, %v202, 0
      %218 = vmatprep.subr.mxu0 0.0
      %219 = vmatpush1.msra.mxu0 %v216
      %220 = vmatprep.subr.mxu0 0.0
      %221 = vmatpush1.msra.mxu0 0.0
      %222 = vmatprep.subr.mxu0 0.0
      %223 = vmatpush1.msra.mxu0 0.0
      %224 = vmatprep.subr.mxu0 0.0
      %225 = vmatpush1.msra.mxu0 0.0
      %226 = vmatprep.subr.mxu0 0.0
      %227 = vmatpush1.msra.mxu0 0.0
      %228 = vmatprep.subr.mxu0 0.0
      %229 = vmatpush1.msra.mxu0 0.0
      %230 = vmatprep.subr.mxu0 0.0
      %231 = vmatpush1.msra.mxu0 0.0
      %232 = vmatprep.subr.mxu0 0.0
      %233 = vmatpush1.msra.mxu0 0.0
      %234 = vmatprep.subr.mxu0 0.0
      %235 = vmatpush1.msra.mxu0 0.0
      %236 = vmatprep.subr.mxu0 0.0
      %237 = vmatpush1.msra.mxu0 0.0
      %238 = vmatprep.subr.mxu0 0.0
      %239 = vmatpush1.msra.mxu0 0.0
      %240 = vmatprep.subr.mxu0 0.0
      %241 = vmatpush1.msra.mxu0 0.0
      %242 = vmatprep.subr.mxu0 0.0
      %243 = vmatpush1.msra.mxu0 0.0
      %244 = vmatprep.subr.mxu0 0.0
      %245 = vmatpush1.msra.mxu0 0.0
      %246 = vmatprep.subr.mxu0 0.0
      %247 = vmatpush1.msra.mxu0 0.0
      %248 = vmatprep.subr.mxu0 0.0
      %249 = vmatpush1.msra.mxu0 0.0
      %250 = vmatprep.subr.mxu0 0.0
      %251 = vmatpush1.msra.mxu0 0.0
      %252 = vmatprep.subr.mxu0 0.0
      %253 = vmatpush1.msra.mxu0 0.0
      %254 = vmatprep.subr.mxu0 0.0
      %255 = vmatpush1.msra.mxu0 0.0
      %256 = vmatprep.subr.mxu0 0.0
      %257 = vmatpush1.msra.mxu0 0.0
      %258 = vmatprep.subr.mxu0 0.0
      %259 = vmatpush1.msra.mxu0 0.0
      %260 = vmatprep.subr.mxu0 0.0
      %261 = vmatpush1.msra.mxu0 0.0
      %262 = vmatprep.subr.mxu0 0.0
      %263 = vmatpush1.msra.mxu0 0.0
      %264 = vmatprep.subr.mxu0 0.0
      %265 = vmatpush1.msra.mxu0 0.0
      %266 = vmatprep.subr.mxu0 0.0
      %267 = vmatpush1.msra.mxu0 0.0
      %268 = vmatprep.subr.mxu0 0.0
      %269 = vmatpush1.msra.mxu0 0.0
      %270 = vmatprep.subr.mxu0 0.0
      %271 = vmatpush1.msra.mxu0 0.0
      %272 = vmatprep.subr.mxu0 0.0
      %273 = vmatpush1.msra.mxu0 0.0
      %274 = vmatprep.subr.mxu0 0.0
      %275 = vmatpush1.msra.mxu0 0.0
      %276 = vmatprep.subr.mxu0 0.0
      %277 = vmatpush1.msra.mxu0 0.0
      %278 = vmatprep.subr.mxu0 0.0
      %279 = vmatpush1.msra.mxu0 0.0
      %280 = vmatprep.subr.mxu0 0.0
      %281 = vmatpush1.msra.mxu0 0.0
      %282 = vmatprep.mubr.f32.mxu0 0.0
      %283 = vmatmul.mubr.f32.gmra.mrb[0].mxu0 %v212
      %v284 = vpop.f32.mrb[0].mxu0
      %v285 = vadd.f32 %v208, %v284
      %v286 = vpop.f32.mrb[0].mxu0
      %287 = vdwg.mxu0
      %vm288 = vcmask 523264
      %289 = vst.msk [vmem:[%s201] sm:$0xff] %vm288, %v285
      %p290 = scmp.lt.s32.totalorder %s18, 1
      %s291 = scalar_select %p290, %s18, 1
      %p292 = scmp.lt.s32.totalorder %s19, 7
      %s293 = scalar_select %p292, %s19, 7
      %s294 = smul.addr %s291, 8
      %s295 = sadd.s32 %s293, %s294
      %s296 = smul.addr %s295, 8
      %s297 = scalar_lea.vmem %s3, %s296
      // Predicated region
      $region33: #{conv_transpose3d_pallas.8} parent=31 // pred_check
        %p298 = pneg %p116
      $region34: #{conv_transpose3d_pallas.8} parent=31 // pred_check_branch
        %300 = sbr.rel (%p298) target = $region36
      $region35: #{conv_transpose3d_pallas.8} parent=31 // pred_region
        _
      $region36: #{conv_transpose3d_pallas.8} parent=31 // pred_fallthru
        _
    $region32: #{conv_transpose3d_pallas.8} parent=5 // pred_fallthru
      _
    %p301 = scmp.le.s32.totalorder 2, %s9
    // Predicated region
    $region37: #{conv_transpose3d_pallas.8} parent=5 // pred_check
      %p302 = pneg %p301
    $region38: #{conv_transpose3d_pallas.8} parent=5 // pred_check_branch
      %304 = sbr.rel (%p302) target = $region40
    $region39: #{conv_transpose3d_pallas.8} parent=5 // pred_region
      %s305 = ssub.s32 %s9, 2
      // Predicated region
      $region41: #{conv_transpose3d_pallas.8} parent=39 // pred_check
        %p306 = pneg %p122
      $region42: #{conv_transpose3d_pallas.8} parent=39 // pred_check_branch
        %308 = sbr.rel (%p306) target = $region44
      $region43: #{conv_transpose3d_pallas.8} parent=39 // pred_region
        %p309 = scmp.lt.s32.totalorder %s20, 1
        %s310 = scalar_select %p309, %s20, 1
        %p311 = scmp.lt.s32.totalorder %s21, 7
        %s312 = scalar_select %p311, %s21, 7
        %s313 = smul.addr %s310, 8
        %s314 = sadd.s32 %s312, %s313
        %s315 = smul.addr %s314, 8
        %s316 = scalar_lea.vmem %s3, %s315
      $region44: #{conv_transpose3d_pallas.8} parent=39 // pred_fallthru
        _
    $region40: #{conv_transpose3d_pallas.8} parent=5 // pred_fallthru
      _
  $region6: #{conv_transpose3d_pallas.8} parent=0 // loop_footer
    %s13 = sadd.s32 1, %s9
  $region7: #{conv_transpose3d_pallas.8} parent=0 // loop_footer_branch
    %8 = sbr.rel target = $region3
  $region8: #{conv_transpose3d_pallas.8} parent=0 // loop_exit
    _

// kernel: conv_transpose3d_pallas.9
$region0: #{conv_transpose3d_pallas.9}
  #allocation0 [shape = 'u32[]', space=smem, size = 0x4, offset = 0x4, fixed_abs, tag = 'smem constant byte address 0x4 - core index']
  #allocation1 [shape = 'u32[144,128]{1,0:T(1,128)}', space=vmem, size = 0x12000, scoped, tag = 'internal scratch']
  %s0 = inlined_call_operand.vmem [shape: f32[2,8,4], index: 0, kind: input, shape index: {}]
  %s1 = inlined_call_operand.vmem [shape: f32[8,1], index: 1, kind: input, shape index: {}]
  %s2 = inlined_call_operand.vmem [shape: f32[2,8,4,128], index: 2, kind: input, shape index: {}]
  %s3 = inlined_call_operand.vmem [shape: f32[2,8,8,72], index: 3, kind: output, shape index: {}]
  %s4 = sld [smem:[#allocation0]]
  $region45: #{conv_transpose3d_pallas.9} parent=0
    _
  %s6 = ssub.s32 1, %s4
  %s7 = scalar_select 0, %s6, %s4
  loop: start=0, step=1, limit=18
  $region2: #{conv_transpose3d_pallas.9} parent=0 // loop_pre_header
    _
  $region3: #{conv_transpose3d_pallas.9} parent=0 // loop_header
    %s9 = sphi 0, %s13
    %p10 = scmp.ge.s32.totalorder %s9, 18
    %s16 = sphi 0, %s28
    %s17 = sphi 0, %s24
    %s18 = sphi 0, %s16
    %s19 = sphi 0, %s17
    %s20 = sphi 0, %s18
    %s21 = sphi 0, %s19
    %s29 = sphi 0, %s29
    %s31 = sphi 0, %s29
    %s32 = sphi 0, %s31
    %s46 = sphi 0, %s32
    %s50 = sphi 0, %s50
    %s52 = sphi 0, %s50
    %s53 = sphi 0, %s52
    %s67 = sphi 0, %s53
    %s75 = sphi 0, %s77
    %s78 = sphi 0, %s75
    %s79 = sphi 0, %s78
    %s95 = sphi 0, %s79
    %s103 = sphi 0, %s105
    %s106 = sphi 0, %s103
    %s107 = sphi 0, %s106
    %s123 = sphi 0, %s107
  $region4: #{conv_transpose3d_pallas.9} parent=0 // loop_header_branch
    %12 = sbr.rel (%p10) target = $region8
  $region5: #{conv_transpose3d_pallas.9} parent=0 // loop_body
    %s14 = ssub.s32 %s9, 1
    %s15 = ssub.s32 %s9, 2
    %s22 = sadd.s32 1, %s17
    %p23 = scmp.ge.s32.totalorder %s22, 8
    %s24 = scalar_select %p23, 0, %s22
    %s25 = sadd.s32 1, %s16
    %s26 = scalar_select %p23, %s25, %s16
    %p27 = scmp.ge.s32.totalorder %s26, 2
    %s28 = scalar_select %p27, 0, %s26
    %s30 = sadd.s32 %s29, 1
    %p33 = scmp.eq.s32.totalorder %s9, 15
    %p34 = scmp.ne.s32.totalorder %s29, %s31
    %p35 = scmp.eq.s32.totalorder %s9, 0
    %p36 = por %p34, %p35
    %p37 = scmp.ne.s32.totalorder %s29, %s31
    %p38 = scmp.eq.s32.totalorder %s14, 15
    %p39 = por %p37, %p38
    %p40 = scmp.ne.s32.totalorder %s31, %s32
    %p41 = scmp.eq.s32.totalorder %s14, 0
    %p42 = por %p40, %p41
    %p43 = scmp.ne.s32.totalorder %s31, %s32
    %p44 = scmp.eq.s32.totalorder %s15, 15
    %p45 = por %p43, %p44
    %p47 = scmp.ne.s32.totalorder %s32, %s46
    %p48 = scmp.eq.s32.totalorder %s15, 0
    %p49 = por %p47, %p48
    %s51 = sadd.s32 %s50, 1
    %p54 = scmp.eq.s32.totalorder %s9, 15
    %p55 = scmp.ne.s32.totalorder %s50, %s52
    %p56 = scmp.eq.s32.totalorder %s9, 0
    %p57 = por %p55, %p56
    %p58 = scmp.ne.s32.totalorder %s50, %s52
    %p59 = scmp.eq.s32.totalorder %s14, 15
    %p60 = por %p58, %p59
    %p61 = scmp.ne.s32.totalorder %s52, %s53
    %p62 = scmp.eq.s32.totalorder %s14, 0
    %p63 = por %p61, %p62
    %p64 = scmp.ne.s32.totalorder %s52, %s53
    %p65 = scmp.eq.s32.totalorder %s15, 15
    %p66 = por %p64, %p65
    %p68 = scmp.ne.s32.totalorder %s53, %s67
    %p69 = scmp.eq.s32.totalorder %s15, 0
    %p70 = por %p68, %p69
    %s71 = ssub.s32 %s16, %s28
    %s72 = ssub.s32 %s17, %s24
    %s73 = sor.u32 %s71, %s72
    %p74 = scmp.eq.s32.totalorder %s73, 0
    %s76 = sadd.s32 %s75, 1
    %s77 = scalar_select %p74, %s75, %s76
    %p80 = pneg %p74
    %p81 = scmp.eq.s32.totalorder %s9, 15
    %p82 = por %p80, %p81
    %p83 = scmp.ne.s32.totalorder %s75, %s78
    %p84 = scmp.eq.s32.totalorder %s9, 0
    %p85 = por %p83, %p84
    %p86 = scmp.ne.s32.totalorder %s75, %s78
    %p87 = scmp.eq.s32.totalorder %s14, 15
    %p88 = por %p86, %p87
    %p89 = scmp.ne.s32.totalorder %s78, %s79
    %p90 = scmp.eq.s32.totalorder %s14, 0
    %p91 = por %p89, %p90
    %p92 = scmp.ne.s32.totalorder %s78, %s79
    %p93 = scmp.eq.s32.totalorder %s15, 15
    %p94 = por %p92, %p93
    %p96 = scmp.ne.s32.totalorder %s79, %s95
    %p97 = scmp.eq.s32.totalorder %s15, 0
    %p98 = por %p96, %p97
    %s99 = ssub.s32 %s16, %s28
    %s100 = ssub.s32 %s17, %s24
    %s101 = sor.u32 %s99, %s100
    %p102 = scmp.eq.s32.totalorder %s101, 0
    %s104 = sadd.s32 %s103, 1
    %s105 = scalar_select %p102, %s103, %s104
    %p108 = pneg %p102
    %p109 = scmp.eq.s32.totalorder %s9, 15
    %p110 = por %p108, %p109
    %p111 = scmp.ne.s32.totalorder %s103, %s106
    %p112 = scmp.eq.s32.totalorder %s9, 0
    %p113 = por %p111, %p112
    %p114 = scmp.ne.s32.totalorder %s103, %s106
    %p115 = scmp.eq.s32.totalorder %s14, 15
    %p116 = por %p114, %p115
    %p117 = scmp.ne.s32.totalorder %s106, %s107
    %p118 = scmp.eq.s32.totalorder %s14, 0
    %p119 = por %p117, %p118
    %p120 = scmp.ne.s32.totalorder %s106, %s107
    %p121 = scmp.eq.s32.totalorder %s15, 15
    %p122 = por %p120, %p121
    %p124 = scmp.ne.s32.totalorder %s107, %s123
    %p125 = scmp.eq.s32.totalorder %s15, 0
    %p126 = por %p124, %p125
    %p127 = scmp.le.s32.totalorder 1, %s9
    %p128 = scmp.lt.s32.totalorder %s9, 17
    %p129 = pnand %p127, %p128
    %p130 = pneg %p129
    // Predicated region
    $region9: #{conv_transpose3d_pallas.9} parent=5 // pred_check
      _
    $region10: #{conv_transpose3d_pallas.9} parent=5 // pred_check_branch
      %132 = sbr.rel (%p129) target = $region12
    $region11: #{conv_transpose3d_pallas.9} parent=5 // pred_region
      %s133 = ssub.s32 %s9, 1
      // Predicated region
      $region13: #{conv_transpose3d_pallas.9} parent=11 // pred_check
        %p134 = pneg %p42
      $region14: #{conv_transpose3d_pallas.9} parent=11 // pred_check_branch
        %136 = sbr.rel (%p134) target = $region16
      $region15: #{conv_transpose3d_pallas.9} parent=11 // pred_region
        _
      $region16: #{conv_transpose3d_pallas.9} parent=11 // pred_fallthru
        _
      // Predicated region
      $region17: #{conv_transpose3d_pallas.9} parent=11 // pred_check
        %p137 = pneg %p63
      $region18: #{conv_transpose3d_pallas.9} parent=11 // pred_check_branch
        %139 = sbr.rel (%p137) target = $region20
      $region19: #{conv_transpose3d_pallas.9} parent=11 // pred_region
        _
      $region20: #{conv_transpose3d_pallas.9} parent=11 // pred_fallthru
        _
    $region12: #{conv_transpose3d_pallas.9} parent=5 // pred_fallthru
      _
    %p140 = scmp.lt.s32.totalorder %s9, 16
    // Predicated region
    $region21: #{conv_transpose3d_pallas.9} parent=5 // pred_check
      %p141 = pneg %p140
    $region22: #{conv_transpose3d_pallas.9} parent=5 // pred_check_branch
      %143 = sbr.rel (%p141) target = $region24
    $region23: #{conv_transpose3d_pallas.9} parent=5 // pred_region
      // Predicated region
      $region25: #{conv_transpose3d_pallas.9} parent=23 // pred_check
        %p144 = pneg %p85
      $region26: #{conv_transpose3d_pallas.9} parent=23 // pred_check_branch
        %146 = sbr.rel (%p144) target = $region28
      $region27: #{conv_transpose3d_pallas.9} parent=23 // pred_region
        %p147 = scmp.lt.s32.totalorder %s16, 1
        %s148 = scalar_select %p147, %s16, 1
        %p149 = scmp.lt.s32.totalorder %s17, 7
        %s150 = scalar_select %p149, %s17, 7
        %s151 = smul.addr %s148, 8
        %s152 = sadd.s32 %s150, %s151
        %s153 = smul.addr %s152, 4
        %s154 = scalar_lea.vmem %s2, %s153
      $region28: #{conv_transpose3d_pallas.9} parent=23 // pred_fallthru
        _
    $region24: #{conv_transpose3d_pallas.9} parent=5 // pred_fallthru
      _
    %p155 = scmp.le.s32.totalorder 1, %s9
    %p156 = scmp.lt.s32.totalorder %s9, 17
    %p157 = pnand %p155, %p156
    %p158 = pneg %p157
    // Predicated region
    $region29: #{conv_transpose3d_pallas.9} parent=5 // pred_check
      _
    $region30: #{conv_transpose3d_pallas.9} parent=5 // pred_check_branch
      %160 = sbr.rel (%p157) target = $region32
    $region31: #{conv_transpose3d_pallas.9} parent=5 // pred_region
      %s161 = ssub.s32 %s9, 1
      %p162 = pneg %p42
      %p163 = pneg %p39
      %p164 = pneg %p63
      %p165 = pneg %p60
      %p166 = scmp.lt.s32.totalorder %s18, 1
      %s167 = scalar_select %p166, %s18, 1
      %p168 = scmp.lt.s32.totalorder %s19, 7
      %s169 = scalar_select %p168, %s19, 7
      %s170 = smul.addr %s167, 8
      %s171 = sadd.s32 %s169, %s170
      %s172 = smul.addr %s171, 4
      %s173 = scalar_lea.vmem %s2, %s172
      %p174 = pneg %p91
      %p175 = pneg %p88
      %p176 = pneg %p119
      %p177 = pneg %p116
      %p178 = scmp.lt.s32.totalorder %s18, 1
      %s179 = scalar_select %p178, %s18, 1
      %p180 = scmp.lt.s32.totalorder %s19, 7
      %s181 = scalar_select %p180, %s19, 7
      %s182 = smul.addr %s179, 8
      %s183 = sadd.s32 %s181, %s182
      %s184 = smul.addr %s183, 8
      %s185 = scalar_lea.vmem %s3, %s184
      %p186 = scmp.lt.s32.totalorder %s18, 1
      %s187 = scalar_select %p186, %s18, 1
      %p188 = scmp.lt.s32.totalorder %s19, 7
      %s189 = scalar_select %p188, %s19, 7
      %s190 = smul.addr %s187, 8
      %s191 = sadd.s32 %s189, %s190
      %s192 = smul.addr %s191, 4
      %s193 = scalar_lea.vmem %s2, %s192
      %p194 = scmp.lt.s32.totalorder %s18, 1
      %s195 = scalar_select %p194, %s18, 1
      %p196 = scmp.lt.s32.totalorder %s19, 7
      %s197 = scalar_select %p196, %s19, 7
      %s198 = smul.addr %s195, 8
      %s199 = sadd.s32 %s197, %s198
      %s200 = smul.addr %s199, 8
      %s201 = scalar_lea.vmem %s3, %s200
      %v202 = vld [vmem:[%s193] sm:$0xf]
      %v203 = vld [vmem:[%s0] sm:$0xff]
      %s204 = scalar_lea.vmem %s0, 8
      %v205 = vld [vmem:[%s204] sm:$0xff]
      %vm206 = vcmask 31744
      %v208 = vsel %vm206, %v205, 0
      %vm210 = vcmask 1043456
      %v212 = vsel %vm210, %v202, 0
      %214 = vmatprep.subr.mxu0 0.0
      %215 = vmatpush1.msra.mxu0 %v212
      %216 = vmatprep.subr.mxu0 0.0
      %217 = vmatpush1.msra.mxu0 0.0
      %218 = vmatprep.subr.mxu0 0.0
      %219 = vmatpush1.msra.mxu0 0.0
      %220 = vmatprep.subr.mxu0 0.0
      %221 = vmatpush1.msra.mxu0 0.0
      %222 = vmatprep.subr.mxu0 0.0
      %223 = vmatpush1.msra.mxu0 0.0
      %224 = vmatprep.subr.mxu0 0.0
      %225 = vmatpush1.msra.mxu0 0.0
      %226 = vmatprep.subr.mxu0 0.0
      %227 = vmatpush1.msra.mxu0 0.0
      %228 = vmatprep.subr.mxu0 0.0
      %229 = vmatpush1.msra.mxu0 0.0
      %230 = vmatprep.subr.mxu0 0.0
      %231 = vmatpush1.msra.mxu0 0.0
      %232 = vmatprep.subr.mxu0 0.0
      %233 = vmatpush1.msra.mxu0 0.0
      %234 = vmatprep.subr.mxu0 0.0
      %235 = vmatpush1.msra.mxu0 0.0
      %236 = vmatprep.subr.mxu0 0.0
      %237 = vmatpush1.msra.mxu0 0.0
      %238 = vmatprep.subr.mxu0 0.0
      %239 = vmatpush1.msra.mxu0 0.0
      %240 = vmatprep.subr.mxu0 0.0
      %241 = vmatpush1.msra.mxu0 0.0
      %242 = vmatprep.subr.mxu0 0.0
      %243 = vmatpush1.msra.mxu0 0.0
      %244 = vmatprep.subr.mxu0 0.0
      %245 = vmatpush1.msra.mxu0 0.0
      %246 = vmatprep.subr.mxu0 0.0
      %247 = vmatpush1.msra.mxu0 0.0
      %248 = vmatprep.subr.mxu0 0.0
      %249 = vmatpush1.msra.mxu0 0.0
      %250 = vmatprep.subr.mxu0 0.0
      %251 = vmatpush1.msra.mxu0 0.0
      %252 = vmatprep.subr.mxu0 0.0
      %253 = vmatpush1.msra.mxu0 0.0
      %254 = vmatprep.subr.mxu0 0.0
      %255 = vmatpush1.msra.mxu0 0.0
      %256 = vmatprep.subr.mxu0 0.0
      %257 = vmatpush1.msra.mxu0 0.0
      %258 = vmatprep.subr.mxu0 0.0
      %259 = vmatpush1.msra.mxu0 0.0
      %260 = vmatprep.subr.mxu0 0.0
      %261 = vmatpush1.msra.mxu0 0.0
      %262 = vmatprep.subr.mxu0 0.0
      %263 = vmatpush1.msra.mxu0 0.0
      %264 = vmatprep.subr.mxu0 0.0
      %265 = vmatpush1.msra.mxu0 0.0
      %266 = vmatprep.subr.mxu0 0.0
      %267 = vmatpush1.msra.mxu0 0.0
      %268 = vmatprep.subr.mxu0 0.0
      %269 = vmatpush1.msra.mxu0 0.0
      %270 = vmatprep.subr.mxu0 0.0
      %271 = vmatpush1.msra.mxu0 0.0
      %272 = vmatprep.subr.mxu0 0.0
      %273 = vmatpush1.msra.mxu0 0.0
      %274 = vmatprep.subr.mxu0 0.0
      %275 = vmatpush1.msra.mxu0 0.0
      %276 = vmatprep.subr.mxu0 0.0
      %277 = vmatpush1.msra.mxu0 0.0
      %278 = vmatprep.mubr.f32.mxu0 0.0
      %279 = vmatmul.mubr.f32.gmra.mrb[0].mxu0 %v208
      %v280 = vpop.f32.mrb[0].mxu0
      %v281 = vadd.f32 0.0, %v280
      %v282 = vpop.f32.mrb[0].mxu0
      %283 = vdwg.mxu0
      %284 = vrot.lane.b32.xlu0 %v202, 127
      %v285 = vpop.permute.xlu0 %284
      %v287 = vsel %vm206, %v203, 0
      %v289 = vsel %vm210, %v285, 0
      %291 = vmatprep.subr.mxu0 0.0
      %292 = vmatpush1.msra.mxu0 %v289
      %293 = vmatprep.subr.mxu0 0.0
      %294 = vmatpush1.msra.mxu0 0.0
      %295 = vmatprep.subr.mxu0 0.0
      %296 = vmatpush1.msra.mxu0 0.0
      %297 = vmatprep.subr.mxu0 0.0
      %298 = vmatpush1.msra.mxu0 0.0
      %299 = vmatprep.subr.mxu0 0.0
      %300 = vmatpush1.msra.mxu0 0.0
      %301 = vmatprep.subr.mxu0 0.0
      %302 = vmatpush1.msra.mxu0 0.0
      %303 = vmatprep.subr.mxu0 0.0
      %304 = vmatpush1.msra.mxu0 0.0
      %305 = vmatprep.subr.mxu0 0.0
      %306 = vmatpush1.msra.mxu0 0.0
      %307 = vmatprep.subr.mxu0 0.0
      %308 = vmatpush1.msra.mxu0 0.0
      %309 = vmatprep.subr.mxu0 0.0
      %310 = vmatpush1.msra.mxu0 0.0
      %311 = vmatprep.subr.mxu0 0.0
      %312 = vmatpush1.msra.mxu0 0.0
      %313 = vmatprep.subr.mxu0 0.0
      %314 = vmatpush1.msra.mxu0 0.0
      %315 = vmatprep.subr.mxu0 0.0
      %316 = vmatpush1.msra.mxu0 0.0
      %317 = vmatprep.subr.mxu0 0.0
      %318 = vmatpush1.msra.mxu0 0.0
      %319 = vmatprep.subr.mxu0 0.0
      %320 = vmatpush1.msra.mxu0 0.0
      %321 = vmatprep.subr.mxu0 0.0
      %322 = vmatpush1.msra.mxu0 0.0
      %323 = vmatprep.subr.mxu0 0.0
      %324 = vmatpush1.msra.mxu0 0.0
      %325 = vmatprep.subr.mxu0 0.0
      %326 = vmatpush1.msra.mxu0 0.0
      %327 = vmatprep.subr.mxu0 0.0
      %328 = vmatpush1.msra.mxu0 0.0
      %329 = vmatprep.subr.mxu0 0.0
      %330 = vmatpush1.msra.mxu0 0.0
      %331 = vmatprep.subr.mxu0 0.0
      %332 = vmatpush1.msra.mxu0 0.0
      %333 = vmatprep.subr.mxu0 0.0
      %334 = vmatpush1.msra.mxu0 0.0
      %335 = vmatprep.subr.mxu0 0.0
      %336 = vmatpush1.msra.mxu0 0.0
      %337 = vmatprep.subr.mxu0 0.0
      %338 = vmatpush1.msra.mxu0 0.0
      %339 = vmatprep.subr.mxu0 0.0
      %340 = vmatpush1.msra.mxu0 0.0
      %341 = vmatprep.subr.mxu0 0.0
      %342 = vmatpush1.msra.mxu0 0.0
      %343 = vmatprep.subr.mxu0 0.0
      %344 = vmatpush1.msra.mxu0 0.0
      %345 = vmatprep.subr.mxu0 0.0
      %346 = vmatpush1.msra.mxu0 0.0
      %347 = vmatprep.subr.mxu0 0.0
      %348 = vmatpush1.msra.mxu0 0.0
      %349 = vmatprep.subr.mxu0 0.0
      %350 = vmatpush1.msra.mxu0 0.0
      %351 = vmatprep.subr.mxu0 0.0
      %352 = vmatpush1.msra.mxu0 0.0
      %353 = vmatprep.subr.mxu0 0.0
      %354 = vmatpush1.msra.mxu0 0.0
      %355 = vmatprep.mubr.f32.mxu0 0.0
      %356 = vmatmul.mubr.f32.gmra.mrb[0].mxu0 %v287
      %v357 = vpop.f32.mrb[0].mxu0
      %v358 = vadd.f32 %v281, %v357
      %v359 = vpop.f32.mrb[0].mxu0
      %360 = vdwg.mxu0
      %v361 = vld [vmem:[%s1] sm:$0xff]
      %363 = vset.pattern.permute.xlu0 0
      %364 = vperm.xlu0 %363, %v361
      %v365 = vpop.permute.xlu0 %364
      %v367 = vadd.f32 %v358, %v365
      %vm368 = vcmask 588800
      %369 = vst.msk [vmem:[%s201] sm:$0xff] %vm368, %v367
      %p370 = scmp.lt.s32.totalorder %s18, 1
      %s371 = scalar_select %p370, %s18, 1
      %p372 = scmp.lt.s32.totalorder %s19, 7
      %s373 = scalar_select %p372, %s19, 7
      %s374 = smul.addr %s371, 8
      %s375 = sadd.s32 %s373, %s374
      %s376 = smul.addr %s375, 8
      %s377 = scalar_lea.vmem %s3, %s376
      // Predicated region
      $region33: #{conv_transpose3d_pallas.9} parent=31 // pred_check
        %p378 = pneg %p116
      $region34: #{conv_transpose3d_pallas.9} parent=31 // pred_check_branch
        %380 = sbr.rel (%p378) target = $region36
      $region35: #{conv_transpose3d_pallas.9} parent=31 // pred_region
        _
      $region36: #{conv_transpose3d_pallas.9} parent=31 // pred_fallthru
        _
    $region32: #{conv_transpose3d_pallas.9} parent=5 // pred_fallthru
      _
    %p381 = scmp.le.s32.totalorder 2, %s9
    // Predicated region
    $region37: #{conv_transpose3d_pallas.9} parent=5 // pred_check
      %p382 = pneg %p381
    $region38: #{conv_transpose3d_pallas.9} parent=5 // pred_check_branch
      %384 = sbr.rel (%p382) target = $region40
    $region39: #{conv_transpose3d_pallas.9} parent=5 // pred_region
      %s385 = ssub.s32 %s9, 2
      // Predicated region
      $region41: #{conv_transpose3d_pallas.9} parent=39 // pred_check
        %p386 = pneg %p122
      $region42: #{conv_transpose3d_pallas.9} parent=39 // pred_check_branch
        %388 = sbr.rel (%p386) target = $region44
      $region43: #{conv_transpose3d_pallas.9} parent=39 // pred_region
        %p389 = scmp.lt.s32.totalorder %s20, 1
        %s390 = scalar_select %p389, %s20, 1
        %p391 = scmp.lt.s32.totalorder %s21, 7
        %s392 = scalar_select %p391, %s21, 7
        %s393 = smul.addr %s390, 8
        %s394 = sadd.s32 %s392, %s393
        %s395 = smul.addr %s394, 8
        %s396 = scalar_lea.vmem %s3, %s395
      $region44: #{conv_transpose3d_pallas.9} parent=39 // pred_fallthru
        _
    $region40: #{conv_transpose3d_pallas.9} parent=5 // pred_fallthru
      _
  $region6: #{conv_transpose3d_pallas.9} parent=0 // loop_footer
    %s13 = sadd.s32 1, %s9
  $region7: #{conv_transpose3d_pallas.9} parent=0 // loop_footer_branch
    %8 = sbr.rel target = $region3
  $region8: #{conv_transpose3d_pallas.9} parent=0 // loop_exit
    _

// kernel: conv_transpose3d_pallas.10
$region0: #{conv_transpose3d_pallas.10}
  #allocation0 [shape = 'u32[]', space=smem, size = 0x4, offset = 0x4, fixed_abs, tag = 'smem constant byte address 0x4 - core index']
  #allocation1 [shape = 'u32[144,128]{1,0:T(1,128)}', space=vmem, size = 0x12000, scoped, tag = 'internal scratch']
  %s0 = inlined_call_operand.vmem [shape: f32[2,8,4], index: 0, kind: input, shape index: {}]
  %s1 = inlined_call_operand.vmem [shape: f32[8,1], index: 1, kind: input, shape index: {}]
  %s2 = inlined_call_operand.vmem [shape: f32[2,8,4,128], index: 2, kind: input, shape index: {}]
  %s3 = inlined_call_operand.vmem [shape: f32[2,8,8,64], index: 3, kind: output, shape index: {}]
  %s4 = sld [smem:[#allocation0]]
  $region45: #{conv_transpose3d_pallas.10} parent=0
    _
  %s6 = ssub.s32 1, %s4
  %s7 = scalar_select 0, %s6, %s4
  loop: start=0, step=1, limit=18
  $region2: #{conv_transpose3d_pallas.10} parent=0 // loop_pre_header
    _
  $region3: #{conv_transpose3d_pallas.10} parent=0 // loop_header
    %s9 = sphi 0, %s13
    %p10 = scmp.ge.s32.totalorder %s9, 18
    %s16 = sphi 0, %s28
    %s17 = sphi 0, %s24
    %s18 = sphi 0, %s16
    %s19 = sphi 0, %s17
    %s20 = sphi 0, %s18
    %s21 = sphi 0, %s19
    %s29 = sphi 0, %s29
    %s31 = sphi 0, %s29
    %s32 = sphi 0, %s31
    %s46 = sphi 0, %s32
    %s50 = sphi 0, %s50
    %s52 = sphi 0, %s50
    %s53 = sphi 0, %s52
    %s67 = sphi 0, %s53
    %s75 = sphi 0, %s77
    %s78 = sphi 0, %s75
    %s79 = sphi 0, %s78
    %s95 = sphi 0, %s79
    %s103 = sphi 0, %s105
    %s106 = sphi 0, %s103
    %s107 = sphi 0, %s106
    %s123 = sphi 0, %s107
  $region4: #{conv_transpose3d_pallas.10} parent=0 // loop_header_branch
    %12 = sbr.rel (%p10) target = $region8
  $region5: #{conv_transpose3d_pallas.10} parent=0 // loop_body
    %s14 = ssub.s32 %s9, 1
    %s15 = ssub.s32 %s9, 2
    %s22 = sadd.s32 1, %s17
    %p23 = scmp.ge.s32.totalorder %s22, 8
    %s24 = scalar_select %p23, 0, %s22
    %s25 = sadd.s32 1, %s16
    %s26 = scalar_select %p23, %s25, %s16
    %p27 = scmp.ge.s32.totalorder %s26, 2
    %s28 = scalar_select %p27, 0, %s26
    %s30 = sadd.s32 %s29, 1
    %p33 = scmp.eq.s32.totalorder %s9, 15
    %p34 = scmp.ne.s32.totalorder %s29, %s31
    %p35 = scmp.eq.s32.totalorder %s9, 0
    %p36 = por %p34, %p35
    %p37 = scmp.ne.s32.totalorder %s29, %s31
    %p38 = scmp.eq.s32.totalorder %s14, 15
    %p39 = por %p37, %p38
    %p40 = scmp.ne.s32.totalorder %s31, %s32
    %p41 = scmp.eq.s32.totalorder %s14, 0
    %p42 = por %p40, %p41
    %p43 = scmp.ne.s32.totalorder %s31, %s32
    %p44 = scmp.eq.s32.totalorder %s15, 15
    %p45 = por %p43, %p44
    %p47 = scmp.ne.s32.totalorder %s32, %s46
    %p48 = scmp.eq.s32.totalorder %s15, 0
    %p49 = por %p47, %p48
    %s51 = sadd.s32 %s50, 1
    %p54 = scmp.eq.s32.totalorder %s9, 15
    %p55 = scmp.ne.s32.totalorder %s50, %s52
    %p56 = scmp.eq.s32.totalorder %s9, 0
    %p57 = por %p55, %p56
    %p58 = scmp.ne.s32.totalorder %s50, %s52
    %p59 = scmp.eq.s32.totalorder %s14, 15
    %p60 = por %p58, %p59
    %p61 = scmp.ne.s32.totalorder %s52, %s53
    %p62 = scmp.eq.s32.totalorder %s14, 0
    %p63 = por %p61, %p62
    %p64 = scmp.ne.s32.totalorder %s52, %s53
    %p65 = scmp.eq.s32.totalorder %s15, 15
    %p66 = por %p64, %p65
    %p68 = scmp.ne.s32.totalorder %s53, %s67
    %p69 = scmp.eq.s32.totalorder %s15, 0
    %p70 = por %p68, %p69
    %s71 = ssub.s32 %s16, %s28
    %s72 = ssub.s32 %s17, %s24
    %s73 = sor.u32 %s71, %s72
    %p74 = scmp.eq.s32.totalorder %s73, 0
    %s76 = sadd.s32 %s75, 1
    %s77 = scalar_select %p74, %s75, %s76
    %p80 = pneg %p74
    %p81 = scmp.eq.s32.totalorder %s9, 15
    %p82 = por %p80, %p81
    %p83 = scmp.ne.s32.totalorder %s75, %s78
    %p84 = scmp.eq.s32.totalorder %s9, 0
    %p85 = por %p83, %p84
    %p86 = scmp.ne.s32.totalorder %s75, %s78
    %p87 = scmp.eq.s32.totalorder %s14, 15
    %p88 = por %p86, %p87
    %p89 = scmp.ne.s32.totalorder %s78, %s79
    %p90 = scmp.eq.s32.totalorder %s14, 0
    %p91 = por %p89, %p90
    %p92 = scmp.ne.s32.totalorder %s78, %s79
    %p93 = scmp.eq.s32.totalorder %s15, 15
    %p94 = por %p92, %p93
    %p96 = scmp.ne.s32.totalorder %s79, %s95
    %p97 = scmp.eq.s32.totalorder %s15, 0
    %p98 = por %p96, %p97
    %s99 = ssub.s32 %s16, %s28
    %s100 = ssub.s32 %s17, %s24
    %s101 = sor.u32 %s99, %s100
    %p102 = scmp.eq.s32.totalorder %s101, 0
    %s104 = sadd.s32 %s103, 1
    %s105 = scalar_select %p102, %s103, %s104
    %p108 = pneg %p102
    %p109 = scmp.eq.s32.totalorder %s9, 15
    %p110 = por %p108, %p109
    %p111 = scmp.ne.s32.totalorder %s103, %s106
    %p112 = scmp.eq.s32.totalorder %s9, 0
    %p113 = por %p111, %p112
    %p114 = scmp.ne.s32.totalorder %s103, %s106
    %p115 = scmp.eq.s32.totalorder %s14, 15
    %p116 = por %p114, %p115
    %p117 = scmp.ne.s32.totalorder %s106, %s107
    %p118 = scmp.eq.s32.totalorder %s14, 0
    %p119 = por %p117, %p118
    %p120 = scmp.ne.s32.totalorder %s106, %s107
    %p121 = scmp.eq.s32.totalorder %s15, 15
    %p122 = por %p120, %p121
    %p124 = scmp.ne.s32.totalorder %s107, %s123
    %p125 = scmp.eq.s32.totalorder %s15, 0
    %p126 = por %p124, %p125
    %p127 = scmp.le.s32.totalorder 1, %s9
    %p128 = scmp.lt.s32.totalorder %s9, 17
    %p129 = pnand %p127, %p128
    %p130 = pneg %p129
    // Predicated region
    $region9: #{conv_transpose3d_pallas.10} parent=5 // pred_check
      _
    $region10: #{conv_transpose3d_pallas.10} parent=5 // pred_check_branch
      %132 = sbr.rel (%p129) target = $region12
    $region11: #{conv_transpose3d_pallas.10} parent=5 // pred_region
      %s133 = ssub.s32 %s9, 1
      // Predicated region
      $region13: #{conv_transpose3d_pallas.10} parent=11 // pred_check
        %p134 = pneg %p42
      $region14: #{conv_transpose3d_pallas.10} parent=11 // pred_check_branch
        %136 = sbr.rel (%p134) target = $region16
      $region15: #{conv_transpose3d_pallas.10} parent=11 // pred_region
        _
      $region16: #{conv_transpose3d_pallas.10} parent=11 // pred_fallthru
        _
      // Predicated region
      $region17: #{conv_transpose3d_pallas.10} parent=11 // pred_check
        %p137 = pneg %p63
      $region18: #{conv_transpose3d_pallas.10} parent=11 // pred_check_branch
        %139 = sbr.rel (%p137) target = $region20
      $region19: #{conv_transpose3d_pallas.10} parent=11 // pred_region
        _
      $region20: #{conv_transpose3d_pallas.10} parent=11 // pred_fallthru
        _
    $region12: #{conv_transpose3d_pallas.10} parent=5 // pred_fallthru
      _
    %p140 = scmp.lt.s32.totalorder %s9, 16
    // Predicated region
    $region21: #{conv_transpose3d_pallas.10} parent=5 // pred_check
      %p141 = pneg %p140
    $region22: #{conv_transpose3d_pallas.10} parent=5 // pred_check_branch
      %143 = sbr.rel (%p141) target = $region24
    $region23: #{conv_transpose3d_pallas.10} parent=5 // pred_region
      // Predicated region
      $region25: #{conv_transpose3d_pallas.10} parent=23 // pred_check
        %p144 = pneg %p85
      $region26: #{conv_transpose3d_pallas.10} parent=23 // pred_check_branch
        %146 = sbr.rel (%p144) target = $region28
      $region27: #{conv_transpose3d_pallas.10} parent=23 // pred_region
        %p147 = scmp.lt.s32.totalorder %s16, 1
        %s148 = scalar_select %p147, %s16, 1
        %p149 = scmp.lt.s32.totalorder %s17, 7
        %s150 = scalar_select %p149, %s17, 7
        %s151 = smul.addr %s148, 8
        %s152 = sadd.s32 %s150, %s151
        %s153 = smul.addr %s152, 4
        %s154 = scalar_lea.vmem %s2, %s153
      $region28: #{conv_transpose3d_pallas.10} parent=23 // pred_fallthru
        _
    $region24: #{conv_transpose3d_pallas.10} parent=5 // pred_fallthru
      _
    %p155 = scmp.le.s32.totalorder 1, %s9
    %p156 = scmp.lt.s32.totalorder %s9, 17
    %p157 = pnand %p155, %p156
    %p158 = pneg %p157
    // Predicated region
    $region29: #{conv_transpose3d_pallas.10} parent=5 // pred_check
      _
    $region30: #{conv_transpose3d_pallas.10} parent=5 // pred_check_branch
      %160 = sbr.rel (%p157) target = $region32
    $region31: #{conv_transpose3d_pallas.10} parent=5 // pred_region
      %s161 = ssub.s32 %s9, 1
      %p162 = pneg %p42
      %p163 = pneg %p39
      %p164 = pneg %p63
      %p165 = pneg %p60
      %p166 = scmp.lt.s32.totalorder %s18, 1
      %s167 = scalar_select %p166, %s18, 1
      %p168 = scmp.lt.s32.totalorder %s19, 7
      %s169 = scalar_select %p168, %s19, 7
      %s170 = smul.addr %s167, 8
      %s171 = sadd.s32 %s169, %s170
      %s172 = smul.addr %s171, 4
      %s173 = scalar_lea.vmem %s2, %s172
      %p174 = pneg %p91
      %p175 = pneg %p88
      %p176 = pneg %p119
      %p177 = pneg %p116
      %p178 = scmp.lt.s32.totalorder %s18, 1
      %s179 = scalar_select %p178, %s18, 1
      %p180 = scmp.lt.s32.totalorder %s19, 7
      %s181 = scalar_select %p180, %s19, 7
      %s182 = smul.addr %s179, 8
      %s183 = sadd.s32 %s181, %s182
      %s184 = smul.addr %s183, 8
      %s185 = scalar_lea.vmem %s3, %s184
      %p186 = scmp.lt.s32.totalorder %s18, 1
      %s187 = scalar_select %p186, %s18, 1
      %p188 = scmp.lt.s32.totalorder %s19, 7
      %s189 = scalar_select %p188, %s19, 7
      %s190 = smul.addr %s187, 8
      %s191 = sadd.s32 %s189, %s190
      %s192 = smul.addr %s191, 4
      %s193 = scalar_lea.vmem %s2, %s192
      %p194 = scmp.lt.s32.totalorder %s18, 1
      %s195 = scalar_select %p194, %s18, 1
      %p196 = scmp.lt.s32.totalorder %s19, 7
      %s197 = scalar_select %p196, %s19, 7
      %s198 = smul.addr %s195, 8
      %s199 = sadd.s32 %s197, %s198
      %s200 = smul.addr %s199, 8
      %s201 = scalar_lea.vmem %s3, %s200
      %v202 = vld [vmem:[%s193] sm:$0xf]
      %v203 = vld [vmem:[%s0] sm:$0xff]
      %s204 = scalar_lea.vmem %s0, 8
      %v205 = vld [vmem:[%s204] sm:$0xff]
      %vm206 = vcmask 31744
      %v208 = vsel %vm206, %v205, 0
      %vm210 = vcmask 1043456
      %v212 = vsel %vm210, %v202, 0
      %214 = vmatprep.subr.mxu0 0.0
      %215 = vmatpush1.msra.mxu0 %v212
      %216 = vmatprep.subr.mxu0 0.0
      %217 = vmatpush1.msra.mxu0 0.0
      %218 = vmatprep.subr.mxu0 0.0
      %219 = vmatpush1.msra.mxu0 0.0
      %220 = vmatprep.subr.mxu0 0.0
      %221 = vmatpush1.msra.mxu0 0.0
      %222 = vmatprep.subr.mxu0 0.0
      %223 = vmatpush1.msra.mxu0 0.0
      %224 = vmatprep.subr.mxu0 0.0
      %225 = vmatpush1.msra.mxu0 0.0
      %226 = vmatprep.subr.mxu0 0.0
      %227 = vmatpush1.msra.mxu0 0.0
      %228 = vmatprep.subr.mxu0 0.0
      %229 = vmatpush1.msra.mxu0 0.0
      %230 = vmatprep.subr.mxu0 0.0
      %231 = vmatpush1.msra.mxu0 0.0
      %232 = vmatprep.subr.mxu0 0.0
      %233 = vmatpush1.msra.mxu0 0.0
      %234 = vmatprep.subr.mxu0 0.0
      %235 = vmatpush1.msra.mxu0 0.0
      %236 = vmatprep.subr.mxu0 0.0
      %237 = vmatpush1.msra.mxu0 0.0
      %238 = vmatprep.subr.mxu0 0.0
      %239 = vmatpush1.msra.mxu0 0.0
      %240 = vmatprep.subr.mxu0 0.0
      %241 = vmatpush1.msra.mxu0 0.0
      %242 = vmatprep.subr.mxu0 0.0
      %243 = vmatpush1.msra.mxu0 0.0
      %244 = vmatprep.subr.mxu0 0.0
      %245 = vmatpush1.msra.mxu0 0.0
      %246 = vmatprep.subr.mxu0 0.0
      %247 = vmatpush1.msra.mxu0 0.0
      %248 = vmatprep.subr.mxu0 0.0
      %249 = vmatpush1.msra.mxu0 0.0
      %250 = vmatprep.subr.mxu0 0.0
      %251 = vmatpush1.msra.mxu0 0.0
      %252 = vmatprep.subr.mxu0 0.0
      %253 = vmatpush1.msra.mxu0 0.0
      %254 = vmatprep.subr.mxu0 0.0
      %255 = vmatpush1.msra.mxu0 0.0
      %256 = vmatprep.subr.mxu0 0.0
      %257 = vmatpush1.msra.mxu0 0.0
      %258 = vmatprep.subr.mxu0 0.0
      %259 = vmatpush1.msra.mxu0 0.0
      %260 = vmatprep.subr.mxu0 0.0
      %261 = vmatpush1.msra.mxu0 0.0
      %262 = vmatprep.subr.mxu0 0.0
      %263 = vmatpush1.msra.mxu0 0.0
      %264 = vmatprep.subr.mxu0 0.0
      %265 = vmatpush1.msra.mxu0 0.0
      %266 = vmatprep.subr.mxu0 0.0
      %267 = vmatpush1.msra.mxu0 0.0
      %268 = vmatprep.subr.mxu0 0.0
      %269 = vmatpush1.msra.mxu0 0.0
      %270 = vmatprep.subr.mxu0 0.0
      %271 = vmatpush1.msra.mxu0 0.0
      %272 = vmatprep.subr.mxu0 0.0
      %273 = vmatpush1.msra.mxu0 0.0
      %274 = vmatprep.subr.mxu0 0.0
      %275 = vmatpush1.msra.mxu0 0.0
      %276 = vmatprep.subr.mxu0 0.0
      %277 = vmatpush1.msra.mxu0 0.0
      %278 = vmatprep.mubr.f32.mxu0 0.0
      %279 = vmatmul.mubr.f32.gmra.mrb[0].mxu0 %v208
      %v280 = vpop.f32.mrb[0].mxu0
      %v281 = vadd.f32 0.0, %v280
      %v282 = vpop.f32.mrb[0].mxu0
      %283 = vdwg.mxu0
      %284 = vrot.lane.b32.xlu0 %v202, 120
      %v285 = vpop.permute.xlu0 %284
      %v287 = vsel %vm206, %v203, 0
      %v289 = vsel %vm210, %v285, 0
      %291 = vmatprep.subr.mxu0 0.0
      %292 = vmatpush1.msra.mxu0 %v289
      %293 = vmatprep.subr.mxu0 0.0
      %294 = vmatpush1.msra.mxu0 0.0
      %295 = vmatprep.subr.mxu0 0.0
      %296 = vmatpush1.msra.mxu0 0.0
      %297 = vmatprep.subr.mxu0 0.0
      %298 = vmatpush1.msra.mxu0 0.0
      %299 = vmatprep.subr.mxu0 0.0
      %300 = vmatpush1.msra.mxu0 0.0
      %301 = vmatprep.subr.mxu0 0.0
      %302 = vmatpush1.msra.mxu0 0.0
      %303 = vmatprep.subr.mxu0 0.0
      %304 = vmatpush1.msra.mxu0 0.0
      %305 = vmatprep.subr.mxu0 0.0
      %306 = vmatpush1.msra.mxu0 0.0
      %307 = vmatprep.subr.mxu0 0.0
      %308 = vmatpush1.msra.mxu0 0.0
      %309 = vmatprep.subr.mxu0 0.0
      %310 = vmatpush1.msra.mxu0 0.0
      %311 = vmatprep.subr.mxu0 0.0
      %312 = vmatpush1.msra.mxu0 0.0
      %313 = vmatprep.subr.mxu0 0.0
      %314 = vmatpush1.msra.mxu0 0.0
      %315 = vmatprep.subr.mxu0 0.0
      %316 = vmatpush1.msra.mxu0 0.0
      %317 = vmatprep.subr.mxu0 0.0
      %318 = vmatpush1.msra.mxu0 0.0
      %319 = vmatprep.subr.mxu0 0.0
      %320 = vmatpush1.msra.mxu0 0.0
      %321 = vmatprep.subr.mxu0 0.0
      %322 = vmatpush1.msra.mxu0 0.0
      %323 = vmatprep.subr.mxu0 0.0
      %324 = vmatpush1.msra.mxu0 0.0
      %325 = vmatprep.subr.mxu0 0.0
      %326 = vmatpush1.msra.mxu0 0.0
      %327 = vmatprep.subr.mxu0 0.0
      %328 = vmatpush1.msra.mxu0 0.0
      %329 = vmatprep.subr.mxu0 0.0
      %330 = vmatpush1.msra.mxu0 0.0
      %331 = vmatprep.subr.mxu0 0.0
      %332 = vmatpush1.msra.mxu0 0.0
      %333 = vmatprep.subr.mxu0 0.0
      %334 = vmatpush1.msra.mxu0 0.0
      %335 = vmatprep.subr.mxu0 0.0
      %336 = vmatpush1.msra.mxu0 0.0
      %337 = vmatprep.subr.mxu0 0.0
      %338 = vmatpush1.msra.mxu0 0.0
      %339 = vmatprep.subr.mxu0 0.0
      %340 = vmatpush1.msra.mxu0 0.0
      %341 = vmatprep.subr.mxu0 0.0
      %342 = vmatpush1.msra.mxu0 0.0
      %343 = vmatprep.subr.mxu0 0.0
      %344 = vmatpush1.msra.mxu0 0.0
      %345 = vmatprep.subr.mxu0 0.0
      %346 = vmatpush1.msra.mxu0 0.0
      %347 = vmatprep.subr.mxu0 0.0
      %348 = vmatpush1.msra.mxu0 0.0
      %349 = vmatprep.subr.mxu0 0.0
      %350 = vmatpush1.msra.mxu0 0.0
      %351 = vmatprep.subr.mxu0 0.0
      %352 = vmatpush1.msra.mxu0 0.0
      %353 = vmatprep.subr.mxu0 0.0
      %354 = vmatpush1.msra.mxu0 0.0
      %355 = vmatprep.mubr.f32.mxu0 0.0
      %356 = vmatmul.mubr.f32.gmra.mrb[0].mxu0 %v287
      %v357 = vpop.f32.mrb[0].mxu0
      %v358 = vadd.f32 %v281, %v357
      %v359 = vpop.f32.mrb[0].mxu0
      %360 = vdwg.mxu0
      %v361 = vld [vmem:[%s1] sm:$0xff]
      %363 = vset.pattern.permute.xlu0 0
      %364 = vperm.xlu0 %363, %v361
      %v365 = vpop.permute.xlu0 %364
      %v367 = vadd.f32 %v358, %v365
      %vm368 = vcmask 523264
      %369 = vst.msk [vmem:[%s201] sm:$0xff] %vm368, %v367
      %p370 = scmp.lt.s32.totalorder %s18, 1
      %s371 = scalar_select %p370, %s18, 1
      %p372 = scmp.lt.s32.totalorder %s19, 7
      %s373 = scalar_select %p372, %s19, 7
      %s374 = smul.addr %s371, 8
      %s375 = sadd.s32 %s373, %s374
      %s376 = smul.addr %s375, 8
      %s377 = scalar_lea.vmem %s3, %s376
      // Predicated region
      $region33: #{conv_transpose3d_pallas.10} parent=31 // pred_check
        %p378 = pneg %p116
      $region34: #{conv_transpose3d_pallas.10} parent=31 // pred_check_branch
        %380 = sbr.rel (%p378) target = $region36
      $region35: #{conv_transpose3d_pallas.10} parent=31 // pred_region
        _
      $region36: #{conv_transpose3d_pallas.10} parent=31 // pred_fallthru
        _
    $region32: #{conv_transpose3d_pallas.10} parent=5 // pred_fallthru
      _
    %p381 = scmp.le.s32.totalorder 2, %s9
    // Predicated region
    $region37: #{conv_transpose3d_pallas.10} parent=5 // pred_check
      %p382 = pneg %p381
    $region38: #{conv_transpose3d_pallas.10} parent=5 // pred_check_branch
      %384 = sbr.rel (%p382) target = $region40
    $region39: #{conv_transpose3d_pallas.10} parent=5 // pred_region
      %s385 = ssub.s32 %s9, 2
      // Predicated region
      $region41: #{conv_transpose3d_pallas.10} parent=39 // pred_check
        %p386 = pneg %p122
      $region42: #{conv_transpose3d_pallas.10} parent=39 // pred_check_branch
        %388 = sbr.rel (%p386) target = $region44
      $region43: #{conv_transpose3d_pallas.10} parent=39 // pred_region
        %p389 = scmp.lt.s32.totalorder %s20, 1
        %s390 = scalar_select %p389, %s20, 1
        %p391 = scmp.lt.s32.totalorder %s21, 7
        %s392 = scalar_select %p391, %s21, 7
        %s393 = smul.addr %s390, 8
        %s394 = sadd.s32 %s392, %s393
        %s395 = smul.addr %s394, 8
        %s396 = scalar_lea.vmem %s3, %s395
      $region44: #{conv_transpose3d_pallas.10} parent=39 // pred_fallthru
        _
    $region40: #{conv_transpose3d_pallas.10} parent=5 // pred_fallthru
      _
  $region6: #{conv_transpose3d_pallas.10} parent=0 // loop_footer
    %s13 = sadd.s32 1, %s9
  $region7: #{conv_transpose3d_pallas.10} parent=0 // loop_footer_branch
    %8 = sbr.rel target = $region3
  $region8: #{conv_transpose3d_pallas.10} parent=0 // loop_exit
    _

// kernel: conv_transpose3d_pallas.11
$region0: #{conv_transpose3d_pallas.11}
  #allocation0 [shape = 'u32[]', space=smem, size = 0x4, offset = 0x4, fixed_abs, tag = 'smem constant byte address 0x4 - core index']
  #allocation1 [shape = 'u32[144,128]{1,0:T(1,128)}', space=vmem, size = 0x12000, scoped, tag = 'internal scratch']
  %s0 = inlined_call_operand.vmem [shape: f32[4,8,4], index: 0, kind: input, shape index: {}]
  %s1 = inlined_call_operand.vmem [shape: f32[8,1], index: 1, kind: input, shape index: {}]
  %s2 = inlined_call_operand.vmem [shape: f32[2,8,4,128], index: 2, kind: input, shape index: {}]
  %s3 = inlined_call_operand.vmem [shape: f32[2,8,8,72], index: 3, kind: output, shape index: {}]
  %s4 = sld [smem:[#allocation0]]
  $region45: #{conv_transpose3d_pallas.11} parent=0
    _
  %s6 = ssub.s32 1, %s4
  %s7 = scalar_select 0, %s6, %s4
  loop: start=0, step=1, limit=18
  $region2: #{conv_transpose3d_pallas.11} parent=0 // loop_pre_header
    _
  $region3: #{conv_transpose3d_pallas.11} parent=0 // loop_header
    %s9 = sphi 0, %s13
    %p10 = scmp.ge.s32.totalorder %s9, 18
    %s16 = sphi 0, %s28
    %s17 = sphi 0, %s24
    %s18 = sphi 0, %s16
    %s19 = sphi 0, %s17
    %s20 = sphi 0, %s18
    %s21 = sphi 0, %s19
    %s29 = sphi 0, %s29
    %s31 = sphi 0, %s29
    %s32 = sphi 0, %s31
    %s46 = sphi 0, %s32
    %s50 = sphi 0, %s50
    %s52 = sphi 0, %s50
    %s53 = sphi 0, %s52
    %s67 = sphi 0, %s53
    %s75 = sphi 0, %s77
    %s78 = sphi 0, %s75
    %s79 = sphi 0, %s78
    %s95 = sphi 0, %s79
    %s103 = sphi 0, %s105
    %s106 = sphi 0, %s103
    %s107 = sphi 0, %s106
    %s123 = sphi 0, %s107
  $region4: #{conv_transpose3d_pallas.11} parent=0 // loop_header_branch
    %12 = sbr.rel (%p10) target = $region8
  $region5: #{conv_transpose3d_pallas.11} parent=0 // loop_body
    %s14 = ssub.s32 %s9, 1
    %s15 = ssub.s32 %s9, 2
    %s22 = sadd.s32 1, %s17
    %p23 = scmp.ge.s32.totalorder %s22, 8
    %s24 = scalar_select %p23, 0, %s22
    %s25 = sadd.s32 1, %s16
    %s26 = scalar_select %p23, %s25, %s16
    %p27 = scmp.ge.s32.totalorder %s26, 2
    %s28 = scalar_select %p27, 0, %s26
    %s30 = sadd.s32 %s29, 1
    %p33 = scmp.eq.s32.totalorder %s9, 15
    %p34 = scmp.ne.s32.totalorder %s29, %s31
    %p35 = scmp.eq.s32.totalorder %s9, 0
    %p36 = por %p34, %p35
    %p37 = scmp.ne.s32.totalorder %s29, %s31
    %p38 = scmp.eq.s32.totalorder %s14, 15
    %p39 = por %p37, %p38
    %p40 = scmp.ne.s32.totalorder %s31, %s32
    %p41 = scmp.eq.s32.totalorder %s14, 0
    %p42 = por %p40, %p41
    %p43 = scmp.ne.s32.totalorder %s31, %s32
    %p44 = scmp.eq.s32.totalorder %s15, 15
    %p45 = por %p43, %p44
    %p47 = scmp.ne.s32.totalorder %s32, %s46
    %p48 = scmp.eq.s32.totalorder %s15, 0
    %p49 = por %p47, %p48
    %s51 = sadd.s32 %s50, 1
    %p54 = scmp.eq.s32.totalorder %s9, 15
    %p55 = scmp.ne.s32.totalorder %s50, %s52
    %p56 = scmp.eq.s32.totalorder %s9, 0
    %p57 = por %p55, %p56
    %p58 = scmp.ne.s32.totalorder %s50, %s52
    %p59 = scmp.eq.s32.totalorder %s14, 15
    %p60 = por %p58, %p59
    %p61 = scmp.ne.s32.totalorder %s52, %s53
    %p62 = scmp.eq.s32.totalorder %s14, 0
    %p63 = por %p61, %p62
    %p64 = scmp.ne.s32.totalorder %s52, %s53
    %p65 = scmp.eq.s32.totalorder %s15, 15
    %p66 = por %p64, %p65
    %p68 = scmp.ne.s32.totalorder %s53, %s67
    %p69 = scmp.eq.s32.totalorder %s15, 0
    %p70 = por %p68, %p69
    %s71 = ssub.s32 %s16, %s28
    %s72 = ssub.s32 %s17, %s24
    %s73 = sor.u32 %s71, %s72
    %p74 = scmp.eq.s32.totalorder %s73, 0
    %s76 = sadd.s32 %s75, 1
    %s77 = scalar_select %p74, %s75, %s76
    %p80 = pneg %p74
    %p81 = scmp.eq.s32.totalorder %s9, 15
    %p82 = por %p80, %p81
    %p83 = scmp.ne.s32.totalorder %s75, %s78
    %p84 = scmp.eq.s32.totalorder %s9, 0
    %p85 = por %p83, %p84
    %p86 = scmp.ne.s32.totalorder %s75, %s78
    %p87 = scmp.eq.s32.totalorder %s14, 15
    %p88 = por %p86, %p87
    %p89 = scmp.ne.s32.totalorder %s78, %s79
    %p90 = scmp.eq.s32.totalorder %s14, 0
    %p91 = por %p89, %p90
    %p92 = scmp.ne.s32.totalorder %s78, %s79
    %p93 = scmp.eq.s32.totalorder %s15, 15
    %p94 = por %p92, %p93
    %p96 = scmp.ne.s32.totalorder %s79, %s95
    %p97 = scmp.eq.s32.totalorder %s15, 0
    %p98 = por %p96, %p97
    %s99 = ssub.s32 %s16, %s28
    %s100 = ssub.s32 %s17, %s24
    %s101 = sor.u32 %s99, %s100
    %p102 = scmp.eq.s32.totalorder %s101, 0
    %s104 = sadd.s32 %s103, 1
    %s105 = scalar_select %p102, %s103, %s104
    %p108 = pneg %p102
    %p109 = scmp.eq.s32.totalorder %s9, 15
    %p110 = por %p108, %p109
    %p111 = scmp.ne.s32.totalorder %s103, %s106
    %p112 = scmp.eq.s32.totalorder %s9, 0
    %p113 = por %p111, %p112
    %p114 = scmp.ne.s32.totalorder %s103, %s106
    %p115 = scmp.eq.s32.totalorder %s14, 15
    %p116 = por %p114, %p115
    %p117 = scmp.ne.s32.totalorder %s106, %s107
    %p118 = scmp.eq.s32.totalorder %s14, 0
    %p119 = por %p117, %p118
    %p120 = scmp.ne.s32.totalorder %s106, %s107
    %p121 = scmp.eq.s32.totalorder %s15, 15
    %p122 = por %p120, %p121
    %p124 = scmp.ne.s32.totalorder %s107, %s123
    %p125 = scmp.eq.s32.totalorder %s15, 0
    %p126 = por %p124, %p125
    %p127 = scmp.le.s32.totalorder 1, %s9
    %p128 = scmp.lt.s32.totalorder %s9, 17
    %p129 = pnand %p127, %p128
    %p130 = pneg %p129
    // Predicated region
    $region9: #{conv_transpose3d_pallas.11} parent=5 // pred_check
      _
    $region10: #{conv_transpose3d_pallas.11} parent=5 // pred_check_branch
      %132 = sbr.rel (%p129) target = $region12
    $region11: #{conv_transpose3d_pallas.11} parent=5 // pred_region
      %s133 = ssub.s32 %s9, 1
      // Predicated region
      $region13: #{conv_transpose3d_pallas.11} parent=11 // pred_check
        %p134 = pneg %p42
      $region14: #{conv_transpose3d_pallas.11} parent=11 // pred_check_branch
        %136 = sbr.rel (%p134) target = $region16
      $region15: #{conv_transpose3d_pallas.11} parent=11 // pred_region
        _
      $region16: #{conv_transpose3d_pallas.11} parent=11 // pred_fallthru
        _
      // Predicated region
      $region17: #{conv_transpose3d_pallas.11} parent=11 // pred_check
        %p137 = pneg %p63
      $region18: #{conv_transpose3d_pallas.11} parent=11 // pred_check_branch
        %139 = sbr.rel (%p137) target = $region20
      $region19: #{conv_transpose3d_pallas.11} parent=11 // pred_region
        _
      $region20: #{conv_transpose3d_pallas.11} parent=11 // pred_fallthru
        _
    $region12: #{conv_transpose3d_pallas.11} parent=5 // pred_fallthru
      _
    %p140 = scmp.lt.s32.totalorder %s9, 16
    // Predicated region
    $region21: #{conv_transpose3d_pallas.11} parent=5 // pred_check
      %p141 = pneg %p140
    $region22: #{conv_transpose3d_pallas.11} parent=5 // pred_check_branch
      %143 = sbr.rel (%p141) target = $region24
    $region23: #{conv_transpose3d_pallas.11} parent=5 // pred_region
      // Predicated region
      $region25: #{conv_transpose3d_pallas.11} parent=23 // pred_check
        %p144 = pneg %p85
      $region26: #{conv_transpose3d_pallas.11} parent=23 // pred_check_branch
        %146 = sbr.rel (%p144) target = $region28
      $region27: #{conv_transpose3d_pallas.11} parent=23 // pred_region
        %p147 = scmp.lt.s32.totalorder %s16, 1
        %s148 = scalar_select %p147, %s16, 1
        %p149 = scmp.lt.s32.totalorder %s17, 7
        %s150 = scalar_select %p149, %s17, 7
        %s151 = smul.addr %s148, 8
        %s152 = sadd.s32 %s150, %s151
        %s153 = smul.addr %s152, 4
        %s154 = scalar_lea.vmem %s2, %s153
      $region28: #{conv_transpose3d_pallas.11} parent=23 // pred_fallthru
        _
    $region24: #{conv_transpose3d_pallas.11} parent=5 // pred_fallthru
      _
    %p155 = scmp.le.s32.totalorder 1, %s9
    %p156 = scmp.lt.s32.totalorder %s9, 17
    %p157 = pnand %p155, %p156
    %p158 = pneg %p157
    // Predicated region
    $region29: #{conv_transpose3d_pallas.11} parent=5 // pred_check
      _
    $region30: #{conv_transpose3d_pallas.11} parent=5 // pred_check_branch
      %160 = sbr.rel (%p157) target = $region32
    $region31: #{conv_transpose3d_pallas.11} parent=5 // pred_region
      %s161 = ssub.s32 %s9, 1
      %p162 = pneg %p42
      %p163 = pneg %p39
      %p164 = pneg %p63
      %p165 = pneg %p60
      %p166 = scmp.lt.s32.totalorder %s18, 1
      %s167 = scalar_select %p166, %s18, 1
      %p168 = scmp.lt.s32.totalorder %s19, 7
      %s169 = scalar_select %p168, %s19, 7
      %s170 = smul.addr %s167, 8
      %s171 = sadd.s32 %s169, %s170
      %s172 = smul.addr %s171, 4
      %s173 = scalar_lea.vmem %s2, %s172
      %p174 = pneg %p91
      %p175 = pneg %p88
      %p176 = pneg %p119
      %p177 = pneg %p116
      %p178 = scmp.lt.s32.totalorder %s18, 1
      %s179 = scalar_select %p178, %s18, 1
      %p180 = scmp.lt.s32.totalorder %s19, 7
      %s181 = scalar_select %p180, %s19, 7
      %s182 = smul.addr %s179, 8
      %s183 = sadd.s32 %s181, %s182
      %s184 = smul.addr %s183, 8
      %s185 = scalar_lea.vmem %s3, %s184
      %p186 = scmp.lt.s32.totalorder %s18, 1
      %s187 = scalar_select %p186, %s18, 1
      %p188 = scmp.lt.s32.totalorder %s19, 7
      %s189 = scalar_select %p188, %s19, 7
      %s190 = smul.addr %s187, 8
      %s191 = sadd.s32 %s189, %s190
      %s192 = smul.addr %s191, 4
      %s193 = scalar_lea.vmem %s2, %s192
      %p194 = scmp.lt.s32.totalorder %s18, 1
      %s195 = scalar_select %p194, %s18, 1
      %p196 = scmp.lt.s32.totalorder %s19, 7
      %s197 = scalar_select %p196, %s19, 7
      %s198 = smul.addr %s195, 8
      %s199 = sadd.s32 %s197, %s198
      %s200 = smul.addr %s199, 8
      %s201 = scalar_lea.vmem %s3, %s200
      %v202 = vld [vmem:[%s193] sm:$0xf]
      %v203 = vld [vmem:[%s0] sm:$0xff]
      %s204 = scalar_lea.vmem %s0, 8
      %v205 = vld [vmem:[%s204] sm:$0xff]
      %207 = vrot.lane.b32.xlu0 %v202, 119
      %v208 = vpop.permute.xlu0 %207
      %vm209 = vcmask 31744
      %v211 = vsel %vm209, %v205, 0
      %vm213 = vcmask 1043456
      %v214 = vsel %vm213, %v208, 0
      %216 = vmatprep.subr.mxu0 0.0
      %217 = vmatpush1.msra.mxu0 %v214
      %218 = vmatprep.subr.mxu0 0.0
      %219 = vmatpush1.msra.mxu0 0.0
      %220 = vmatprep.subr.mxu0 0.0
      %221 = vmatpush1.msra.mxu0 0.0
      %222 = vmatprep.subr.mxu0 0.0
      %223 = vmatpush1.msra.mxu0 0.0
      %224 = vmatprep.subr.mxu0 0.0
      %225 = vmatpush1.msra.mxu0 0.0
      %226 = vmatprep.subr.mxu0 0.0
      %227 = vmatpush1.msra.mxu0 0.0
      %228 = vmatprep.subr.mxu0 0.0
      %229 = vmatpush1.msra.mxu0 0.0
      %230 = vmatprep.subr.mxu0 0.0
      %231 = vmatpush1.msra.mxu0 0.0
      %232 = vmatprep.subr.mxu0 0.0
      %233 = vmatpush1.msra.mxu0 0.0
      %234 = vmatprep.subr.mxu0 0.0
      %235 = vmatpush1.msra.mxu0 0.0
      %236 = vmatprep.subr.mxu0 0.0
      %237 = vmatpush1.msra.mxu0 0.0
      %238 = vmatprep.subr.mxu0 0.0
      %239 = vmatpush1.msra.mxu0 0.0
      %240 = vmatprep.subr.mxu0 0.0
      %241 = vmatpush1.msra.mxu0 0.0
      %242 = vmatprep.subr.mxu0 0.0
      %243 = vmatpush1.msra.mxu0 0.0
      %244 = vmatprep.subr.mxu0 0.0
      %245 = vmatpush1.msra.mxu0 0.0
      %246 = vmatprep.subr.mxu0 0.0
      %247 = vmatpush1.msra.mxu0 0.0
      %248 = vmatprep.subr.mxu0 0.0
      %249 = vmatpush1.msra.mxu0 0.0
      %250 = vmatprep.subr.mxu0 0.0
      %251 = vmatpush1.msra.mxu0 0.0
      %252 = vmatprep.subr.mxu0 0.0
      %253 = vmatpush1.msra.mxu0 0.0
      %254 = vmatprep.subr.mxu0 0.0
      %255 = vmatpush1.msra.mxu0 0.0
      %256 = vmatprep.subr.mxu0 0.0
      %257 = vmatpush1.msra.mxu0 0.0
      %258 = vmatprep.subr.mxu0 0.0
      %259 = vmatpush1.msra.mxu0 0.0
      %260 = vmatprep.subr.mxu0 0.0
      %261 = vmatpush1.msra.mxu0 0.0
      %262 = vmatprep.subr.mxu0 0.0
      %263 = vmatpush1.msra.mxu0 0.0
      %264 = vmatprep.subr.mxu0 0.0
      %265 = vmatpush1.msra.mxu0 0.0
      %266 = vmatprep.subr.mxu0 0.0
      %267 = vmatpush1.msra.mxu0 0.0
      %268 = vmatprep.subr.mxu0 0.0
      %269 = vmatpush1.msra.mxu0 0.0
      %270 = vmatprep.subr.mxu0 0.0
      %271 = vmatpush1.msra.mxu0 0.0
      %272 = vmatprep.subr.mxu0 0.0
      %273 = vmatpush1.msra.mxu0 0.0
      %274 = vmatprep.subr.mxu0 0.0
      %275 = vmatpush1.msra.mxu0 0.0
      %276 = vmatprep.subr.mxu0 0.0
      %277 = vmatpush1.msra.mxu0 0.0
      %278 = vmatprep.subr.mxu0 0.0
      %279 = vmatpush1.msra.mxu0 0.0
      %280 = vmatprep.mubr.f32.mxu0 0.0
      %281 = vmatmul.mubr.f32.gmra.mrb[0].mxu0 %v211
      %v282 = vpop.f32.mrb[0].mxu0
      %v283 = vadd.f32 0.0, %v282
      %v284 = vpop.f32.mrb[0].mxu0
      %285 = vdwg.mxu0
      %286 = vrot.lane.b32.xlu0 %v202, 118
      %v287 = vpop.permute.xlu0 %286
      %v289 = vsel %vm209, %v203, 0
      %v291 = vsel %vm213, %v287, 0
      %293 = vmatprep.subr.mxu0 0.0
      %294 = vmatpush1.msra.mxu0 %v291
      %295 = vmatprep.subr.mxu0 0.0
      %296 = vmatpush1.msra.mxu0 0.0
      %297 = vmatprep.subr.mxu0 0.0
      %298 = vmatpush1.msra.mxu0 0.0
      %299 = vmatprep.subr.mxu0 0.0
      %300 = vmatpush1.msra.mxu0 0.0
      %301 = vmatprep.subr.mxu0 0.0
      %302 = vmatpush1.msra.mxu0 0.0
      %303 = vmatprep.subr.mxu0 0.0
      %304 = vmatpush1.msra.mxu0 0.0
      %305 = vmatprep.subr.mxu0 0.0
      %306 = vmatpush1.msra.mxu0 0.0
      %307 = vmatprep.subr.mxu0 0.0
      %308 = vmatpush1.msra.mxu0 0.0
      %309 = vmatprep.subr.mxu0 0.0
      %310 = vmatpush1.msra.mxu0 0.0
      %311 = vmatprep.subr.mxu0 0.0
      %312 = vmatpush1.msra.mxu0 0.0
      %313 = vmatprep.subr.mxu0 0.0
      %314 = vmatpush1.msra.mxu0 0.0
      %315 = vmatprep.subr.mxu0 0.0
      %316 = vmatpush1.msra.mxu0 0.0
      %317 = vmatprep.subr.mxu0 0.0
      %318 = vmatpush1.msra.mxu0 0.0
      %319 = vmatprep.subr.mxu0 0.0
      %320 = vmatpush1.msra.mxu0 0.0
      %321 = vmatprep.subr.mxu0 0.0
      %322 = vmatpush1.msra.mxu0 0.0
      %323 = vmatprep.subr.mxu0 0.0
      %324 = vmatpush1.msra.mxu0 0.0
      %325 = vmatprep.subr.mxu0 0.0
      %326 = vmatpush1.msra.mxu0 0.0
      %327 = vmatprep.subr.mxu0 0.0
      %328 = vmatpush1.msra.mxu0 0.0
      %329 = vmatprep.subr.mxu0 0.0
      %330 = vmatpush1.msra.mxu0 0.0
      %331 = vmatprep.subr.mxu0 0.0
      %332 = vmatpush1.msra.mxu0 0.0
      %333 = vmatprep.subr.mxu0 0.0
      %334 = vmatpush1.msra.mxu0 0.0
      %335 = vmatprep.subr.mxu0 0.0
      %336 = vmatpush1.msra.mxu0 0.0
      %337 = vmatprep.subr.mxu0 0.0
      %338 = vmatpush1.msra.mxu0 0.0
      %339 = vmatprep.subr.mxu0 0.0
      %340 = vmatpush1.msra.mxu0 0.0
      %341 = vmatprep.subr.mxu0 0.0
      %342 = vmatpush1.msra.mxu0 0.0
      %343 = vmatprep.subr.mxu0 0.0
      %344 = vmatpush1.msra.mxu0 0.0
      %345 = vmatprep.subr.mxu0 0.0
      %346 = vmatpush1.msra.mxu0 0.0
      %347 = vmatprep.subr.mxu0 0.0
      %348 = vmatpush1.msra.mxu0 0.0
      %349 = vmatprep.subr.mxu0 0.0
      %350 = vmatpush1.msra.mxu0 0.0
      %351 = vmatprep.subr.mxu0 0.0
      %352 = vmatpush1.msra.mxu0 0.0
      %353 = vmatprep.subr.mxu0 0.0
      %354 = vmatpush1.msra.mxu0 0.0
      %355 = vmatprep.subr.mxu0 0.0
      %356 = vmatpush1.msra.mxu0 0.0
      %357 = vmatprep.mubr.f32.mxu0 0.0
      %358 = vmatmul.mubr.f32.gmra.mrb[0].mxu0 %v289
      %v359 = vpop.f32.mrb[0].mxu0
      %v360 = vadd.f32 %v283, %v359
      %v361 = vpop.f32.mrb[0].mxu0
      %362 = vdwg.mxu0
      %s363 = scalar_lea.vmem %s0, 16
      %v364 = vld [vmem:[%s363] sm:$0xff]
      %365 = vrot.lane.b32.xlu0 %v202, 127
      %v366 = vpop.permute.xlu0 %365
      %v368 = vsel %vm209, %v364, 0
      %v370 = vsel %vm213, %v366, 0
      %372 = vmatprep.subr.mxu0 0.0
      %373 = vmatpush1.msra.mxu0 %v370
      %374 = vmatprep.subr.mxu0 0.0
      %375 = vmatpush1.msra.mxu0 0.0
      %376 = vmatprep.subr.mxu0 0.0
      %377 = vmatpush1.msra.mxu0 0.0
      %378 = vmatprep.subr.mxu0 0.0
      %379 = vmatpush1.msra.mxu0 0.0
      %380 = vmatprep.subr.mxu0 0.0
      %381 = vmatpush1.msra.mxu0 0.0
      %382 = vmatprep.subr.mxu0 0.0
      %383 = vmatpush1.msra.mxu0 0.0
      %384 = vmatprep.subr.mxu0 0.0
      %385 = vmatpush1.msra.mxu0 0.0
      %386 = vmatprep.subr.mxu0 0.0
      %387 = vmatpush1.msra.mxu0 0.0
      %388 = vmatprep.subr.mxu0 0.0
      %389 = vmatpush1.msra.mxu0 0.0
      %390 = vmatprep.subr.mxu0 0.0
      %391 = vmatpush1.msra.mxu0 0.0
      %392 = vmatprep.subr.mxu0 0.0
      %393 = vmatpush1.msra.mxu0 0.0
      %394 = vmatprep.subr.mxu0 0.0
      %395 = vmatpush1.msra.mxu0 0.0
      %396 = vmatprep.subr.mxu0 0.0
      %397 = vmatpush1.msra.mxu0 0.0
      %398 = vmatprep.subr.mxu0 0.0
      %399 = vmatpush1.msra.mxu0 0.0
      %400 = vmatprep.subr.mxu0 0.0
      %401 = vmatpush1.msra.mxu0 0.0
      %402 = vmatprep.subr.mxu0 0.0
      %403 = vmatpush1.msra.mxu0 0.0
      %404 = vmatprep.subr.mxu0 0.0
      %405 = vmatpush1.msra.mxu0 0.0
      %406 = vmatprep.subr.mxu0 0.0
      %407 = vmatpush1.msra.mxu0 0.0
      %408 = vmatprep.subr.mxu0 0.0
      %409 = vmatpush1.msra.mxu0 0.0
      %410 = vmatprep.subr.mxu0 0.0
      %411 = vmatpush1.msra.mxu0 0.0
      %412 = vmatprep.subr.mxu0 0.0
      %413 = vmatpush1.msra.mxu0 0.0
      %414 = vmatprep.subr.mxu0 0.0
      %415 = vmatpush1.msra.mxu0 0.0
      %416 = vmatprep.subr.mxu0 0.0
      %417 = vmatpush1.msra.mxu0 0.0
      %418 = vmatprep.subr.mxu0 0.0
      %419 = vmatpush1.msra.mxu0 0.0
      %420 = vmatprep.subr.mxu0 0.0
      %421 = vmatpush1.msra.mxu0 0.0
      %422 = vmatprep.subr.mxu0 0.0
      %423 = vmatpush1.msra.mxu0 0.0
      %424 = vmatprep.subr.mxu0 0.0
      %425 = vmatpush1.msra.mxu0 0.0
      %426 = vmatprep.subr.mxu0 0.0
      %427 = vmatpush1.msra.mxu0 0.0
      %428 = vmatprep.subr.mxu0 0.0
      %429 = vmatpush1.msra.mxu0 0.0
      %430 = vmatprep.subr.mxu0 0.0
      %431 = vmatpush1.msra.mxu0 0.0
      %432 = vmatprep.subr.mxu0 0.0
      %433 = vmatpush1.msra.mxu0 0.0
      %434 = vmatprep.subr.mxu0 0.0
      %435 = vmatpush1.msra.mxu0 0.0
      %436 = vmatprep.mubr.f32.mxu0 0.0
      %437 = vmatmul.mubr.f32.gmra.mrb[0].mxu0 %v368
      %v438 = vpop.f32.mrb[0].mxu0
      %v439 = vadd.f32 0.0, %v438
      %v440 = vpop.f32.mrb[0].mxu0
      %441 = vdwg.mxu0
      %v442 = vadd.f32 %v360, %v439
      %s443 = scalar_lea.vmem %s0, 24
      %v444 = vld [vmem:[%s443] sm:$0xff]
      %v446 = vsel %vm209, %v444, 0
      %v448 = vsel %vm213, %v202, 0
      %450 = vmatprep.subr.mxu0 0.0
      %451 = vmatpush1.msra.mxu0 %v448
      %452 = vmatprep.subr.mxu0 0.0
      %453 = vmatpush1.msra.mxu0 0.0
      %454 = vmatprep.subr.mxu0 0.0
      %455 = vmatpush1.msra.mxu0 0.0
      %456 = vmatprep.subr.mxu0 0.0
      %457 = vmatpush1.msra.mxu0 0.0
      %458 = vmatprep.subr.mxu0 0.0
      %459 = vmatpush1.msra.mxu0 0.0
      %460 = vmatprep.subr.mxu0 0.0
      %461 = vmatpush1.msra.mxu0 0.0
      %462 = vmatprep.subr.mxu0 0.0
      %463 = vmatpush1.msra.mxu0 0.0
      %464 = vmatprep.subr.mxu0 0.0
      %465 = vmatpush1.msra.mxu0 0.0
      %466 = vmatprep.subr.mxu0 0.0
      %467 = vmatpush1.msra.mxu0 0.0
      %468 = vmatprep.subr.mxu0 0.0
      %469 = vmatpush1.msra.mxu0 0.0
      %470 = vmatprep.subr.mxu0 0.0
      %471 = vmatpush1.msra.mxu0 0.0
      %472 = vmatprep.subr.mxu0 0.0
      %473 = vmatpush1.msra.mxu0 0.0
      %474 = vmatprep.subr.mxu0 0.0
      %475 = vmatpush1.msra.mxu0 0.0
      %476 = vmatprep.subr.mxu0 0.0
      %477 = vmatpush1.msra.mxu0 0.0
      %478 = vmatprep.subr.mxu0 0.0
      %479 = vmatpush1.msra.mxu0 0.0
      %480 = vmatprep.subr.mxu0 0.0
      %481 = vmatpush1.msra.mxu0 0.0
      %482 = vmatprep.subr.mxu0 0.0
      %483 = vmatpush1.msra.mxu0 0.0
      %484 = vmatprep.subr.mxu0 0.0
      %485 = vmatpush1.msra.mxu0 0.0
      %486 = vmatprep.subr.mxu0 0.0
      %487 = vmatpush1.msra.mxu0 0.0
      %488 = vmatprep.subr.mxu0 0.0
      %489 = vmatpush1.msra.mxu0 0.0
      %490 = vmatprep.subr.mxu0 0.0
      %491 = vmatpush1.msra.mxu0 0.0
      %492 = vmatprep.subr.mxu0 0.0
      %493 = vmatpush1.msra.mxu0 0.0
      %494 = vmatprep.subr.mxu0 0.0
      %495 = vmatpush1.msra.mxu0 0.0
      %496 = vmatprep.subr.mxu0 0.0
      %497 = vmatpush1.msra.mxu0 0.0
      %498 = vmatprep.subr.mxu0 0.0
      %499 = vmatpush1.msra.mxu0 0.0
      %500 = vmatprep.subr.mxu0 0.0
      %501 = vmatpush1.msra.mxu0 0.0
      %502 = vmatprep.subr.mxu0 0.0
      %503 = vmatpush1.msra.mxu0 0.0
      %504 = vmatprep.subr.mxu0 0.0
      %505 = vmatpush1.msra.mxu0 0.0
      %506 = vmatprep.subr.mxu0 0.0
      %507 = vmatpush1.msra.mxu0 0.0
      %508 = vmatprep.subr.mxu0 0.0
      %509 = vmatpush1.msra.mxu0 0.0
      %510 = vmatprep.subr.mxu0 0.0
      %511 = vmatpush1.msra.mxu0 0.0
      %512 = vmatprep.subr.mxu0 0.0
      %513 = vmatpush1.msra.mxu0 0.0
      %514 = vmatprep.mubr.f32.mxu0 0.0
      %515 = vmatmul.mubr.f32.gmra.mrb[0].mxu0 %v446
      %v516 = vpop.f32.mrb[0].mxu0
      %v517 = vadd.f32 0.0, %v516
      %v518 = vpop.f32.mrb[0].mxu0
      %519 = vdwg.mxu0
      %v520 = vadd.f32 %v442, %v517
      %v521 = vld [vmem:[%s1] sm:$0xff]
      %523 = vset.pattern.permute.xlu0 0
      %524 = vperm.xlu0 %523, %v521
      %v525 = vpop.permute.xlu0 %524
      %v527 = vadd.f32 %v520, %v525
      %vm528 = vcmask 588800
      %529 = vst.msk [vmem:[%s201] sm:$0xff] %vm528, %v527
      %p530 = scmp.lt.s32.totalorder %s18, 1
      %s531 = scalar_select %p530, %s18, 1
      %p532 = scmp.lt.s32.totalorder %s19, 7
      %s533 = scalar_select %p532, %s19, 7
      %s534 = smul.addr %s531, 8
      %s535 = sadd.s32 %s533, %s534
      %s536 = smul.addr %s535, 8
      %s537 = scalar_lea.vmem %s3, %s536
      // Predicated region
      $region33: #{conv_transpose3d_pallas.11} parent=31 // pred_check
        %p538 = pneg %p116
      $region34: #{conv_transpose3d_pallas.11} parent=31 // pred_check_branch
        %540 = sbr.rel (%p538) target = $region36
      $region35: #{conv_transpose3d_pallas.11} parent=31 // pred_region
        _
      $region36: #{conv_transpose3d_pallas.11} parent=31 // pred_fallthru
        _
    $region32: #{conv_transpose3d_pallas.11} parent=5 // pred_fallthru
      _
    %p541 = scmp.le.s32.totalorder 2, %s9
    // Predicated region
    $region37: #{conv_transpose3d_pallas.11} parent=5 // pred_check
      %p542 = pneg %p541
    $region38: #{conv_transpose3d_pallas.11} parent=5 // pred_check_branch
      %544 = sbr.rel (%p542) target = $region40
    $region39: #{conv_transpose3d_pallas.11} parent=5 // pred_region
      %s545 = ssub.s32 %s9, 2
      // Predicated region
      $region41: #{conv_transpose3d_pallas.11} parent=39 // pred_check
        %p546 = pneg %p122
      $region42: #{conv_transpose3d_pallas.11} parent=39 // pred_check_branch
        %548 = sbr.rel (%p546) target = $region44
      $region43: #{conv_transpose3d_pallas.11} parent=39 // pred_region
        %p549 = scmp.lt.s32.totalorder %s20, 1
        %s550 = scalar_select %p549, %s20, 1
        %p551 = scmp.lt.s32.totalorder %s21, 7
        %s552 = scalar_select %p551, %s21, 7
        %s553 = smul.addr %s550, 8
        %s554 = sadd.s32 %s552, %s553
        %s555 = smul.addr %s554, 8
        %s556 = scalar_lea.vmem %s3, %s555
      $region44: #{conv_transpose3d_pallas.11} parent=39 // pred_fallthru
        _
    $region40: #{conv_transpose3d_pallas.11} parent=5 // pred_fallthru
      _
  $region6: #{conv_transpose3d_pallas.11} parent=0 // loop_footer
    %s13 = sadd.s32 1, %s9
  $region7: #{conv_transpose3d_pallas.11} parent=0 // loop_footer_branch
    %8 = sbr.rel target = $region3
  $region8: #{conv_transpose3d_pallas.11} parent=0 // loop_exit
    _

// kernel: conv_transpose3d_pallas.12
$region0: #{conv_transpose3d_pallas.12}
  #allocation0 [shape = 'u32[]', space=smem, size = 0x4, offset = 0x4, fixed_abs, tag = 'smem constant byte address 0x4 - core index']
  #allocation1 [shape = 'u32[144,128]{1,0:T(1,128)}', space=vmem, size = 0x12000, scoped, tag = 'internal scratch']
  %s0 = inlined_call_operand.vmem [shape: f32[2,8,4], index: 0, kind: input, shape index: {}]
  %s1 = inlined_call_operand.vmem [shape: f32[8,1], index: 1, kind: input, shape index: {}]
  %s2 = inlined_call_operand.vmem [shape: f32[2,9,4,128], index: 2, kind: input, shape index: {}, may-alias: {2,3}]
  %s3 = inlined_call_operand.vmem [shape: f32[2,9,4,128], index: 3, kind: input, shape index: {}, may-alias: {2,3}]
  %s4 = inlined_call_operand.vmem [shape: f32[2,8,8,64], index: 4, kind: output, shape index: {}]
  %s5 = sld [smem:[#allocation0]]
  $region49: #{conv_transpose3d_pallas.12} parent=0
    _
  %s7 = ssub.s32 1, %s5
  %s8 = scalar_select 0, %s7, %s5
  loop: start=0, step=1, limit=18
  $region2: #{conv_transpose3d_pallas.12} parent=0 // loop_pre_header
    _
  $region3: #{conv_transpose3d_pallas.12} parent=0 // loop_header
    %s10 = sphi 0, %s14
    %p11 = scmp.ge.s32.totalorder %s10, 18
    %s17 = sphi 0, %s29
    %s18 = sphi 0, %s25
    %s19 = sphi 0, %s17
    %s20 = sphi 0, %s18
    %s21 = sphi 0, %s19
    %s22 = sphi 0, %s20
    %s30 = sphi 0, %s30
    %s32 = sphi 0, %s30
    %s33 = sphi 0, %s32
    %s47 = sphi 0, %s33
    %s51 = sphi 0, %s51
    %s53 = sphi 0, %s51
    %s54 = sphi 0, %s53
    %s68 = sphi 0, %s54
    %s76 = sphi 0, %s78
    %s79 = sphi 0, %s76
    %s80 = sphi 0, %s79
    %s96 = sphi 0, %s80
    %s106 = sphi 0, %s108
    %s109 = sphi 0, %s106
    %s110 = sphi 0, %s109
    %s126 = sphi 0, %s110
    %s134 = sphi 0, %s136
    %s137 = sphi 0, %s134
    %s138 = sphi 0, %s137
    %s154 = sphi 0, %s138
  $region4: #{conv_transpose3d_pallas.12} parent=0 // loop_header_branch
    %13 = sbr.rel (%p11) target = $region8
  $region5: #{conv_transpose3d_pallas.12} parent=0 // loop_body
    %s15 = ssub.s32 %s10, 1
    %s16 = ssub.s32 %s10, 2
    %s23 = sadd.s32 1, %s18
    %p24 = scmp.ge.s32.totalorder %s23, 8
    %s25 = scalar_select %p24, 0, %s23
    %s26 = sadd.s32 1, %s17
    %s27 = scalar_select %p24, %s26, %s17
    %p28 = scmp.ge.s32.totalorder %s27, 2
    %s29 = scalar_select %p28, 0, %s27
    %s31 = sadd.s32 %s30, 1
    %p34 = scmp.eq.s32.totalorder %s10, 15
    %p35 = scmp.ne.s32.totalorder %s30, %s32
    %p36 = scmp.eq.s32.totalorder %s10, 0
    %p37 = por %p35, %p36
    %p38 = scmp.ne.s32.totalorder %s30, %s32
    %p39 = scmp.eq.s32.totalorder %s15, 15
    %p40 = por %p38, %p39
    %p41 = scmp.ne.s32.totalorder %s32, %s33
    %p42 = scmp.eq.s32.totalorder %s15, 0
    %p43 = por %p41, %p42
    %p44 = scmp.ne.s32.totalorder %s32, %s33
    %p45 = scmp.eq.s32.totalorder %s16, 15
    %p46 = por %p44, %p45
    %p48 = scmp.ne.s32.totalorder %s33, %s47
    %p49 = scmp.eq.s32.totalorder %s16, 0
    %p50 = por %p48, %p49
    %s52 = sadd.s32 %s51, 1
    %p55 = scmp.eq.s32.totalorder %s10, 15
    %p56 = scmp.ne.s32.totalorder %s51, %s53
    %p57 = scmp.eq.s32.totalorder %s10, 0
    %p58 = por %p56, %p57
    %p59 = scmp.ne.s32.totalorder %s51, %s53
    %p60 = scmp.eq.s32.totalorder %s15, 15
    %p61 = por %p59, %p60
    %p62 = scmp.ne.s32.totalorder %s53, %s54
    %p63 = scmp.eq.s32.totalorder %s15, 0
    %p64 = por %p62, %p63
    %p65 = scmp.ne.s32.totalorder %s53, %s54
    %p66 = scmp.eq.s32.totalorder %s16, 15
    %p67 = por %p65, %p66
    %p69 = scmp.ne.s32.totalorder %s54, %s68
    %p70 = scmp.eq.s32.totalorder %s16, 0
    %p71 = por %p69, %p70
    %s72 = ssub.s32 %s17, %s29
    %s73 = ssub.s32 %s18, %s25
    %s74 = sor.u32 %s72, %s73
    %p75 = scmp.eq.s32.totalorder %s74, 0
    %s77 = sadd.s32 %s76, 1
    %s78 = scalar_select %p75, %s76, %s77
    %p81 = pneg %p75
    %p82 = scmp.eq.s32.totalorder %s10, 15
    %p83 = por %p81, %p82
    %p84 = scmp.ne.s32.totalorder %s76, %s79
    %p85 = scmp.eq.s32.totalorder %s10, 0
    %p86 = por %p84, %p85
    %p87 = scmp.ne.s32.totalorder %s76, %s79
    %p88 = scmp.eq.s32.totalorder %s15, 15
    %p89 = por %p87, %p88
    %p90 = scmp.ne.s32.totalorder %s79, %s80
    %p91 = scmp.eq.s32.totalorder %s15, 0
    %p92 = por %p90, %p91
    %p93 = scmp.ne.s32.totalorder %s79, %s80
    %p94 = scmp.eq.s32.totalorder %s16, 15
    %p95 = por %p93, %p94
    %p97 = scmp.ne.s32.totalorder %s80, %s96
    %p98 = scmp.eq.s32.totalorder %s16, 0
    %p99 = por %p97, %p98
    %s100 = sadd.s32 %s18, 1
    %s101 = sadd.s32 %s25, 1
    %s102 = ssub.s32 %s17, %s29
    %s103 = ssub.s32 %s100, %s101
    %s104 = sor.u32 %s102, %s103
    %p105 = scmp.eq.s32.totalorder %s104, 0
    %s107 = sadd.s32 %s106, 1
    %s108 = scalar_select %p105, %s106, %s107
    %p111 = pneg %p105
    %p112 = scmp.eq.s32.totalorder %s10, 15
    %p113 = por %p111, %p112
    %p114 = scmp.ne.s32.totalorder %s106, %s109
    %p115 = scmp.eq.s32.totalorder %s10, 0
    %p116 = por %p114, %p115
    %p117 = scmp.ne.s32.totalorder %s106, %s109
    %p118 = scmp.eq.s32.totalorder %s15, 15
    %p119 = por %p117, %p118
    %p120 = scmp.ne.s32.totalorder %s109, %s110
    %p121 = scmp.eq.s32.totalorder %s15, 0
    %p122 = por %p120, %p121
    %p123 = scmp.ne.s32.totalorder %s109, %s110
    %p124 = scmp.eq.s32.totalorder %s16, 15
    %p125 = por %p123, %p124
    %p127 = scmp.ne.s32.totalorder %s110, %s126
    %p128 = scmp.eq.s32.totalorder %s16, 0
    %p129 = por %p127, %p128
    %s130 = ssub.s32 %s17, %s29
    %s131 = ssub.s32 %s18, %s25
    %s132 = sor.u32 %s130, %s131
    %p133 = scmp.eq.s32.totalorder %s132, 0
    %s135 = sadd.s32 %s134, 1
    %s136 = scalar_select %p133, %s134, %s135
    %p139 = pneg %p133
    %p140 = scmp.eq.s32.totalorder %s10, 15
    %p141 = por %p139, %p140
    %p142 = scmp.ne.s32.totalorder %s134, %s137
    %p143 = scmp.eq.s32.totalorder %s10, 0
    %p144 = por %p142, %p143
    %p145 = scmp.ne.s32.totalorder %s134, %s137
    %p146 = scmp.eq.s32.totalorder %s15, 15
    %p147 = por %p145, %p146
    %p148 = scmp.ne.s32.totalorder %s137, %s138
    %p149 = scmp.eq.s32.totalorder %s15, 0
    %p150 = por %p148, %p149
    %p151 = scmp.ne.s32.totalorder %s137, %s138
    %p152 = scmp.eq.s32.totalorder %s16, 15
    %p153 = por %p151, %p152
    %p155 = scmp.ne.s32.totalorder %s138, %s154
    %p156 = scmp.eq.s32.totalorder %s16, 0
    %p157 = por %p155, %p156
    %p158 = scmp.le.s32.totalorder 1, %s10
    %p159 = scmp.lt.s32.totalorder %s10, 17
    %p160 = pnand %p158, %p159
    %p161 = pneg %p160
    // Predicated region
    $region9: #{conv_transpose3d_pallas.12} parent=5 // pred_check
      _
    $region10: #{conv_transpose3d_pallas.12} parent=5 // pred_check_branch
      %163 = sbr.rel (%p160) target = $region12
    $region11: #{conv_transpose3d_pallas.12} parent=5 // pred_region
      %s164 = ssub.s32 %s10, 1
      // Predicated region
      $region13: #{conv_transpose3d_pallas.12} parent=11 // pred_check
        %p165 = pneg %p43
      $region14: #{conv_transpose3d_pallas.12} parent=11 // pred_check_branch
        %167 = sbr.rel (%p165) target = $region16
      $region15: #{conv_transpose3d_pallas.12} parent=11 // pred_region
        _
      $region16: #{conv_transpose3d_pallas.12} parent=11 // pred_fallthru
        _
      // Predicated region
      $region17: #{conv_transpose3d_pallas.12} parent=11 // pred_check
        %p168 = pneg %p64
      $region18: #{conv_transpose3d_pallas.12} parent=11 // pred_check_branch
        %170 = sbr.rel (%p168) target = $region20
      $region19: #{conv_transpose3d_pallas.12} parent=11 // pred_region
        _
      $region20: #{conv_transpose3d_pallas.12} parent=11 // pred_fallthru
        _
    $region12: #{conv_transpose3d_pallas.12} parent=5 // pred_fallthru
      _
    %p171 = scmp.lt.s32.totalorder %s10, 16
    // Predicated region
    $region21: #{conv_transpose3d_pallas.12} parent=5 // pred_check
      %p172 = pneg %p171
    $region22: #{conv_transpose3d_pallas.12} parent=5 // pred_check_branch
      %174 = sbr.rel (%p172) target = $region24
    $region23: #{conv_transpose3d_pallas.12} parent=5 // pred_region
      // Predicated region
      $region25: #{conv_transpose3d_pallas.12} parent=23 // pred_check
        %p175 = pneg %p86
      $region26: #{conv_transpose3d_pallas.12} parent=23 // pred_check_branch
        %177 = sbr.rel (%p175) target = $region28
      $region27: #{conv_transpose3d_pallas.12} parent=23 // pred_region
        %p178 = scmp.lt.s32.totalorder %s17, 1
        %s179 = scalar_select %p178, %s17, 1
        %p180 = scmp.lt.s32.totalorder %s18, 8
        %s181 = scalar_select %p180, %s18, 8
        %s182 = smul.addr %s179, 9
        %s183 = sadd.s32 %s181, %s182
        %s184 = smul.addr %s183, 4
        %s185 = scalar_lea.vmem %s2, %s184
      $region28: #{conv_transpose3d_pallas.12} parent=23 // pred_fallthru
        _
      // Predicated region
      $region29: #{conv_transpose3d_pallas.12} parent=23 // pred_check
        %p186 = pneg %p116
      $region30: #{conv_transpose3d_pallas.12} parent=23 // pred_check_branch
        %188 = sbr.rel (%p186) target = $region32
      $region31: #{conv_transpose3d_pallas.12} parent=23 // pred_region
        %s189 = sadd.s32 %s18, 1
        %p190 = scmp.lt.s32.totalorder %s17, 1
        %s191 = scalar_select %p190, %s17, 1
        %p192 = scmp.lt.s32.totalorder %s189, 8
        %s193 = scalar_select %p192, %s189, 8
        %s194 = smul.addr %s191, 9
        %s195 = sadd.s32 %s193, %s194
        %s196 = smul.addr %s195, 4
        %s197 = scalar_lea.vmem %s3, %s196
        %s198 = sadd.s32 %s18, 1
      $region32: #{conv_transpose3d_pallas.12} parent=23 // pred_fallthru
        _
    $region24: #{conv_transpose3d_pallas.12} parent=5 // pred_fallthru
      _
    %p199 = scmp.le.s32.totalorder 1, %s10
    %p200 = scmp.lt.s32.totalorder %s10, 17
    %p201 = pnand %p199, %p200
    %p202 = pneg %p201
    // Predicated region
    $region33: #{conv_transpose3d_pallas.12} parent=5 // pred_check
      _
    $region34: #{conv_transpose3d_pallas.12} parent=5 // pred_check_branch
      %204 = sbr.rel (%p201) target = $region36
    $region35: #{conv_transpose3d_pallas.12} parent=5 // pred_region
      %s205 = ssub.s32 %s10, 1
      %p206 = pneg %p43
      %p207 = pneg %p40
      %p208 = pneg %p64
      %p209 = pneg %p61
      %p210 = scmp.lt.s32.totalorder %s19, 1
      %s211 = scalar_select %p210, %s19, 1
      %p212 = scmp.lt.s32.totalorder %s20, 8
      %s213 = scalar_select %p212, %s20, 8
      %s214 = smul.addr %s211, 9
      %s215 = sadd.s32 %s213, %s214
      %s216 = smul.addr %s215, 4
      %s217 = scalar_lea.vmem %s2, %s216
      %p218 = pneg %p92
      %p219 = pneg %p89
      %s220 = sadd.s32 %s20, 1
      %p221 = scmp.lt.s32.totalorder %s19, 1
      %s222 = scalar_select %p221, %s19, 1
      %p223 = scmp.lt.s32.totalorder %s220, 8
      %s224 = scalar_select %p223, %s220, 8
      %s225 = smul.addr %s222, 9
      %s226 = sadd.s32 %s224, %s225
      %s227 = smul.addr %s226, 4
      %s228 = scalar_lea.vmem %s3, %s227
      %p229 = pneg %p122
      %p230 = pneg %p119
      %p231 = pneg %p150
      %p232 = pneg %p147
      %p233 = scmp.lt.s32.totalorder %s19, 1
      %s234 = scalar_select %p233, %s19, 1
      %p235 = scmp.lt.s32.totalorder %s20, 7
      %s236 = scalar_select %p235, %s20, 7
      %s237 = smul.addr %s234, 8
      %s238 = sadd.s32 %s236, %s237
      %s239 = smul.addr %s238, 8
      %s240 = scalar_lea.vmem %s4, %s239
      %p241 = scmp.lt.s32.totalorder %s19, 1
      %s242 = scalar_select %p241, %s19, 1
      %p243 = scmp.lt.s32.totalorder %s20, 8
      %s244 = scalar_select %p243, %s20, 8
      %s245 = smul.addr %s242, 9
      %s246 = sadd.s32 %s244, %s245
      %s247 = smul.addr %s246, 4
      %s248 = scalar_lea.vmem %s2, %s247
      %s249 = sadd.s32 %s20, 1
      %p250 = scmp.lt.s32.totalorder %s19, 1
      %s251 = scalar_select %p250, %s19, 1
      %p252 = scmp.lt.s32.totalorder %s249, 8
      %s253 = scalar_select %p252, %s249, 8
      %s254 = smul.addr %s251, 9
      %s255 = sadd.s32 %s253, %s254
      %s256 = smul.addr %s255, 4
      %s257 = scalar_lea.vmem %s3, %s256
      %s258 = sadd.s32 %s20, 1
      %p259 = scmp.lt.s32.totalorder %s19, 1
      %s260 = scalar_select %p259, %s19, 1
      %p261 = scmp.lt.s32.totalorder %s20, 7
      %s262 = scalar_select %p261, %s20, 7
      %s263 = smul.addr %s260, 8
      %s264 = sadd.s32 %s262, %s263
      %s265 = smul.addr %s264, 8
      %s266 = scalar_lea.vmem %s4, %s265
      %v267 = vld [vmem:[%s257] sm:$0xf]
      %v268 = vld [vmem:[%s0] sm:$0xff]
      %v269 = vld [vmem:[%s248] sm:$0xf]
      %s270 = scalar_lea.vmem %s0, 8
      %v271 = vld [vmem:[%s270] sm:$0xff]
      %vm272 = vcmask 31744
      %v274 = vsel %vm272, %v271, 0
      %vm276 = vcmask 1043456
      %v278 = vsel %vm276, %v269, 0
      %280 = vmatprep.subr.mxu0 0.0
      %281 = vmatpush1.msra.mxu0 %v278
      %282 = vmatprep.subr.mxu0 0.0
      %283 = vmatpush1.msra.mxu0 0.0
      %284 = vmatprep.subr.mxu0 0.0
      %285 = vmatpush1.msra.mxu0 0.0
      %286 = vmatprep.subr.mxu0 0.0
      %287 = vmatpush1.msra.mxu0 0.0
      %288 = vmatprep.subr.mxu0 0.0
      %289 = vmatpush1.msra.mxu0 0.0
      %290 = vmatprep.subr.mxu0 0.0
      %291 = vmatpush1.msra.mxu0 0.0
      %292 = vmatprep.subr.mxu0 0.0
      %293 = vmatpush1.msra.mxu0 0.0
      %294 = vmatprep.subr.mxu0 0.0
      %295 = vmatpush1.msra.mxu0 0.0
      %296 = vmatprep.subr.mxu0 0.0
      %297 = vmatpush1.msra.mxu0 0.0
      %298 = vmatprep.subr.mxu0 0.0
      %299 = vmatpush1.msra.mxu0 0.0
      %300 = vmatprep.subr.mxu0 0.0
      %301 = vmatpush1.msra.mxu0 0.0
      %302 = vmatprep.subr.mxu0 0.0
      %303 = vmatpush1.msra.mxu0 0.0
      %304 = vmatprep.subr.mxu0 0.0
      %305 = vmatpush1.msra.mxu0 0.0
      %306 = vmatprep.subr.mxu0 0.0
      %307 = vmatpush1.msra.mxu0 0.0
      %308 = vmatprep.subr.mxu0 0.0
      %309 = vmatpush1.msra.mxu0 0.0
      %310 = vmatprep.subr.mxu0 0.0
      %311 = vmatpush1.msra.mxu0 0.0
      %312 = vmatprep.subr.mxu0 0.0
      %313 = vmatpush1.msra.mxu0 0.0
      %314 = vmatprep.subr.mxu0 0.0
      %315 = vmatpush1.msra.mxu0 0.0
      %316 = vmatprep.subr.mxu0 0.0
      %317 = vmatpush1.msra.mxu0 0.0
      %318 = vmatprep.subr.mxu0 0.0
      %319 = vmatpush1.msra.mxu0 0.0
      %320 = vmatprep.subr.mxu0 0.0
      %321 = vmatpush1.msra.mxu0 0.0
      %322 = vmatprep.subr.mxu0 0.0
      %323 = vmatpush1.msra.mxu0 0.0
      %324 = vmatprep.subr.mxu0 0.0
      %325 = vmatpush1.msra.mxu0 0.0
      %326 = vmatprep.subr.mxu0 0.0
      %327 = vmatpush1.msra.mxu0 0.0
      %328 = vmatprep.subr.mxu0 0.0
      %329 = vmatpush1.msra.mxu0 0.0
      %330 = vmatprep.subr.mxu0 0.0
      %331 = vmatpush1.msra.mxu0 0.0
      %332 = vmatprep.subr.mxu0 0.0
      %333 = vmatpush1.msra.mxu0 0.0
      %334 = vmatprep.subr.mxu0 0.0
      %335 = vmatpush1.msra.mxu0 0.0
      %336 = vmatprep.subr.mxu0 0.0
      %337 = vmatpush1.msra.mxu0 0.0
      %338 = vmatprep.subr.mxu0 0.0
      %339 = vmatpush1.msra.mxu0 0.0
      %340 = vmatprep.subr.mxu0 0.0
      %341 = vmatpush1.msra.mxu0 0.0
      %342 = vmatprep.subr.mxu0 0.0
      %343 = vmatpush1.msra.mxu0 0.0
      %344 = vmatprep.mubr.f32.mxu0 0.0
      %345 = vmatmul.mubr.f32.gmra.mrb[0].mxu0 %v274
      %v346 = vpop.f32.mrb[0].mxu0
      %v347 = vadd.f32 0.0, %v346
      %v348 = vpop.f32.mrb[0].mxu0
      %349 = vdwg.mxu0
      %v351 = vsel %vm272, %v268, 0
      %v354 = vsel %vm276, %v267, 0
      %356 = vmatprep.subr.mxu0 0.0
      %357 = vmatpush1.msra.mxu0 %v354
      %358 = vmatprep.subr.mxu0 0.0
      %359 = vmatpush1.msra.mxu0 0.0
      %360 = vmatprep.subr.mxu0 0.0
      %361 = vmatpush1.msra.mxu0 0.0
      %362 = vmatprep.subr.mxu0 0.0
      %363 = vmatpush1.msra.mxu0 0.0
      %364 = vmatprep.subr.mxu0 0.0
      %365 = vmatpush1.msra.mxu0 0.0
      %366 = vmatprep.subr.mxu0 0.0
      %367 = vmatpush1.msra.mxu0 0.0
      %368 = vmatprep.subr.mxu0 0.0
      %369 = vmatpush1.msra.mxu0 0.0
      %370 = vmatprep.subr.mxu0 0.0
      %371 = vmatpush1.msra.mxu0 0.0
      %372 = vmatprep.subr.mxu0 0.0
      %373 = vmatpush1.msra.mxu0 0.0
      %374 = vmatprep.subr.mxu0 0.0
      %375 = vmatpush1.msra.mxu0 0.0
      %376 = vmatprep.subr.mxu0 0.0
      %377 = vmatpush1.msra.mxu0 0.0
      %378 = vmatprep.subr.mxu0 0.0
      %379 = vmatpush1.msra.mxu0 0.0
      %380 = vmatprep.subr.mxu0 0.0
      %381 = vmatpush1.msra.mxu0 0.0
      %382 = vmatprep.subr.mxu0 0.0
      %383 = vmatpush1.msra.mxu0 0.0
      %384 = vmatprep.subr.mxu0 0.0
      %385 = vmatpush1.msra.mxu0 0.0
      %386 = vmatprep.subr.mxu0 0.0
      %387 = vmatpush1.msra.mxu0 0.0
      %388 = vmatprep.subr.mxu0 0.0
      %389 = vmatpush1.msra.mxu0 0.0
      %390 = vmatprep.subr.mxu0 0.0
      %391 = vmatpush1.msra.mxu0 0.0
      %392 = vmatprep.subr.mxu0 0.0
      %393 = vmatpush1.msra.mxu0 0.0
      %394 = vmatprep.subr.mxu0 0.0
      %395 = vmatpush1.msra.mxu0 0.0
      %396 = vmatprep.subr.mxu0 0.0
      %397 = vmatpush1.msra.mxu0 0.0
      %398 = vmatprep.subr.mxu0 0.0
      %399 = vmatpush1.msra.mxu0 0.0
      %400 = vmatprep.subr.mxu0 0.0
      %401 = vmatpush1.msra.mxu0 0.0
      %402 = vmatprep.subr.mxu0 0.0
      %403 = vmatpush1.msra.mxu0 0.0
      %404 = vmatprep.subr.mxu0 0.0
      %405 = vmatpush1.msra.mxu0 0.0
      %406 = vmatprep.subr.mxu0 0.0
      %407 = vmatpush1.msra.mxu0 0.0
      %408 = vmatprep.subr.mxu0 0.0
      %409 = vmatpush1.msra.mxu0 0.0
      %410 = vmatprep.subr.mxu0 0.0
      %411 = vmatpush1.msra.mxu0 0.0
      %412 = vmatprep.subr.mxu0 0.0
      %413 = vmatpush1.msra.mxu0 0.0
      %414 = vmatprep.subr.mxu0 0.0
      %415 = vmatpush1.msra.mxu0 0.0
      %416 = vmatprep.subr.mxu0 0.0
      %417 = vmatpush1.msra.mxu0 0.0
      %418 = vmatprep.subr.mxu0 0.0
      %419 = vmatpush1.msra.mxu0 0.0
      %420 = vmatprep.mubr.f32.mxu0 0.0
      %421 = vmatmul.mubr.f32.gmra.mrb[0].mxu0 %v351
      %v422 = vpop.f32.mrb[0].mxu0
      %v423 = vadd.f32 %v347, %v422
      %v424 = vpop.f32.mrb[0].mxu0
      %425 = vdwg.mxu0
      %v426 = vld [vmem:[%s1] sm:$0xff]
      %428 = vset.pattern.permute.xlu0 0
      %429 = vperm.xlu0 %428, %v426
      %v430 = vpop.permute.xlu0 %429
      %v432 = vadd.f32 %v423, %v430
      %vm433 = vcmask 523264
      %434 = vst.msk [vmem:[%s266] sm:$0xff] %vm433, %v432
      %p435 = scmp.lt.s32.totalorder %s19, 1
      %s436 = scalar_select %p435, %s19, 1
      %p437 = scmp.lt.s32.totalorder %s20, 7
      %s438 = scalar_select %p437, %s20, 7
      %s439 = smul.addr %s436, 8
      %s440 = sadd.s32 %s438, %s439
      %s441 = smul.addr %s440, 8
      %s442 = scalar_lea.vmem %s4, %s441
      // Predicated region
      $region37: #{conv_transpose3d_pallas.12} parent=35 // pred_check
        %p443 = pneg %p147
      $region38: #{conv_transpose3d_pallas.12} parent=35 // pred_check_branch
        %445 = sbr.rel (%p443) target = $region40
      $region39: #{conv_transpose3d_pallas.12} parent=35 // pred_region
        _
      $region40: #{conv_transpose3d_pallas.12} parent=35 // pred_fallthru
        _
    $region36: #{conv_transpose3d_pallas.12} parent=5 // pred_fallthru
      _
    %p446 = scmp.le.s32.totalorder 2, %s10
    // Predicated region
    $region41: #{conv_transpose3d_pallas.12} parent=5 // pred_check
      %p447 = pneg %p446
    $region42: #{conv_transpose3d_pallas.12} parent=5 // pred_check_branch
      %449 = sbr.rel (%p447) target = $region44
    $region43: #{conv_transpose3d_pallas.12} parent=5 // pred_region
      %s450 = ssub.s32 %s10, 2
      // Predicated region
      $region45: #{conv_transpose3d_pallas.12} parent=43 // pred_check
        %p451 = pneg %p153
      $region46: #{conv_transpose3d_pallas.12} parent=43 // pred_check_branch
        %453 = sbr.rel (%p451) target = $region48
      $region47: #{conv_transpose3d_pallas.12} parent=43 // pred_region
        %p454 = scmp.lt.s32.totalorder %s21, 1
        %s455 = scalar_select %p454, %s21, 1
        %p456 = scmp.lt.s32.totalorder %s22, 7
        %s457 = scalar_select %p456, %s22, 7
        %s458 = smul.addr %s455, 8
        %s459 = sadd.s32 %s457, %s458
        %s460 = smul.addr %s459, 8
        %s461 = scalar_lea.vmem %s4, %s460
      $region48: #{conv_transpose3d_pallas.12} parent=43 // pred_fallthru
        _
    $region44: #{conv_transpose3d_pallas.12} parent=5 // pred_fallthru
      _
  $region6: #{conv_transpose3d_pallas.12} parent=0 // loop_footer
    %s14 = sadd.s32 1, %s10
  $region7: #{conv_transpose3d_pallas.12} parent=0 // loop_footer_branch
    %9 = sbr.rel target = $region3
  $region8: #{conv_transpose3d_pallas.12} parent=0 // loop_exit
    _

// kernel: conv_transpose3d_pallas.13
$region0: #{conv_transpose3d_pallas.13}
  #allocation0 [shape = 'u32[]', space=smem, size = 0x4, offset = 0x4, fixed_abs, tag = 'smem constant byte address 0x4 - core index']
  #allocation1 [shape = 'u32[144,128]{1,0:T(1,128)}', space=vmem, size = 0x12000, scoped, tag = 'internal scratch']
  %s0 = inlined_call_operand.vmem [shape: f32[4,8,4], index: 0, kind: input, shape index: {}]
  %s1 = inlined_call_operand.vmem [shape: f32[8,1], index: 1, kind: input, shape index: {}]
  %s2 = inlined_call_operand.vmem [shape: f32[2,9,4,128], index: 2, kind: input, shape index: {}, may-alias: {2,3}]
  %s3 = inlined_call_operand.vmem [shape: f32[2,9,4,128], index: 3, kind: input, shape index: {}, may-alias: {2,3}]
  %s4 = inlined_call_operand.vmem [shape: f32[2,8,8,72], index: 4, kind: output, shape index: {}]
  %s5 = sld [smem:[#allocation0]]
  $region49: #{conv_transpose3d_pallas.13} parent=0
    _
  %s7 = ssub.s32 1, %s5
  %s8 = scalar_select 0, %s7, %s5
  loop: start=0, step=1, limit=18
  $region2: #{conv_transpose3d_pallas.13} parent=0 // loop_pre_header
    _
  $region3: #{conv_transpose3d_pallas.13} parent=0 // loop_header
    %s10 = sphi 0, %s14
    %p11 = scmp.ge.s32.totalorder %s10, 18
    %s17 = sphi 0, %s29
    %s18 = sphi 0, %s25
    %s19 = sphi 0, %s17
    %s20 = sphi 0, %s18
    %s21 = sphi 0, %s19
    %s22 = sphi 0, %s20
    %s30 = sphi 0, %s30
    %s32 = sphi 0, %s30
    %s33 = sphi 0, %s32
    %s47 = sphi 0, %s33
    %s51 = sphi 0, %s51
    %s53 = sphi 0, %s51
    %s54 = sphi 0, %s53
    %s68 = sphi 0, %s54
    %s76 = sphi 0, %s78
    %s79 = sphi 0, %s76
    %s80 = sphi 0, %s79
    %s96 = sphi 0, %s80
    %s106 = sphi 0, %s108
    %s109 = sphi 0, %s106
    %s110 = sphi 0, %s109
    %s126 = sphi 0, %s110
    %s134 = sphi 0, %s136
    %s137 = sphi 0, %s134
    %s138 = sphi 0, %s137
    %s154 = sphi 0, %s138
  $region4: #{conv_transpose3d_pallas.13} parent=0 // loop_header_branch
    %13 = sbr.rel (%p11) target = $region8
  $region5: #{conv_transpose3d_pallas.13} parent=0 // loop_body
    %s15 = ssub.s32 %s10, 1
    %s16 = ssub.s32 %s10, 2
    %s23 = sadd.s32 1, %s18
    %p24 = scmp.ge.s32.totalorder %s23, 8
    %s25 = scalar_select %p24, 0, %s23
    %s26 = sadd.s32 1, %s17
    %s27 = scalar_select %p24, %s26, %s17
    %p28 = scmp.ge.s32.totalorder %s27, 2
    %s29 = scalar_select %p28, 0, %s27
    %s31 = sadd.s32 %s30, 1
    %p34 = scmp.eq.s32.totalorder %s10, 15
    %p35 = scmp.ne.s32.totalorder %s30, %s32
    %p36 = scmp.eq.s32.totalorder %s10, 0
    %p37 = por %p35, %p36
    %p38 = scmp.ne.s32.totalorder %s30, %s32
    %p39 = scmp.eq.s32.totalorder %s15, 15
    %p40 = por %p38, %p39
    %p41 = scmp.ne.s32.totalorder %s32, %s33
    %p42 = scmp.eq.s32.totalorder %s15, 0
    %p43 = por %p41, %p42
    %p44 = scmp.ne.s32.totalorder %s32, %s33
    %p45 = scmp.eq.s32.totalorder %s16, 15
    %p46 = por %p44, %p45
    %p48 = scmp.ne.s32.totalorder %s33, %s47
    %p49 = scmp.eq.s32.totalorder %s16, 0
    %p50 = por %p48, %p49
    %s52 = sadd.s32 %s51, 1
    %p55 = scmp.eq.s32.totalorder %s10, 15
    %p56 = scmp.ne.s32.totalorder %s51, %s53
    %p57 = scmp.eq.s32.totalorder %s10, 0
    %p58 = por %p56, %p57
    %p59 = scmp.ne.s32.totalorder %s51, %s53
    %p60 = scmp.eq.s32.totalorder %s15, 15
    %p61 = por %p59, %p60
    %p62 = scmp.ne.s32.totalorder %s53, %s54
    %p63 = scmp.eq.s32.totalorder %s15, 0
    %p64 = por %p62, %p63
    %p65 = scmp.ne.s32.totalorder %s53, %s54
    %p66 = scmp.eq.s32.totalorder %s16, 15
    %p67 = por %p65, %p66
    %p69 = scmp.ne.s32.totalorder %s54, %s68
    %p70 = scmp.eq.s32.totalorder %s16, 0
    %p71 = por %p69, %p70
    %s72 = ssub.s32 %s17, %s29
    %s73 = ssub.s32 %s18, %s25
    %s74 = sor.u32 %s72, %s73
    %p75 = scmp.eq.s32.totalorder %s74, 0
    %s77 = sadd.s32 %s76, 1
    %s78 = scalar_select %p75, %s76, %s77
    %p81 = pneg %p75
    %p82 = scmp.eq.s32.totalorder %s10, 15
    %p83 = por %p81, %p82
    %p84 = scmp.ne.s32.totalorder %s76, %s79
    %p85 = scmp.eq.s32.totalorder %s10, 0
    %p86 = por %p84, %p85
    %p87 = scmp.ne.s32.totalorder %s76, %s79
    %p88 = scmp.eq.s32.totalorder %s15, 15
    %p89 = por %p87, %p88
    %p90 = scmp.ne.s32.totalorder %s79, %s80
    %p91 = scmp.eq.s32.totalorder %s15, 0
    %p92 = por %p90, %p91
    %p93 = scmp.ne.s32.totalorder %s79, %s80
    %p94 = scmp.eq.s32.totalorder %s16, 15
    %p95 = por %p93, %p94
    %p97 = scmp.ne.s32.totalorder %s80, %s96
    %p98 = scmp.eq.s32.totalorder %s16, 0
    %p99 = por %p97, %p98
    %s100 = sadd.s32 %s18, 1
    %s101 = sadd.s32 %s25, 1
    %s102 = ssub.s32 %s17, %s29
    %s103 = ssub.s32 %s100, %s101
    %s104 = sor.u32 %s102, %s103
    %p105 = scmp.eq.s32.totalorder %s104, 0
    %s107 = sadd.s32 %s106, 1
    %s108 = scalar_select %p105, %s106, %s107
    %p111 = pneg %p105
    %p112 = scmp.eq.s32.totalorder %s10, 15
    %p113 = por %p111, %p112
    %p114 = scmp.ne.s32.totalorder %s106, %s109
    %p115 = scmp.eq.s32.totalorder %s10, 0
    %p116 = por %p114, %p115
    %p117 = scmp.ne.s32.totalorder %s106, %s109
    %p118 = scmp.eq.s32.totalorder %s15, 15
    %p119 = por %p117, %p118
    %p120 = scmp.ne.s32.totalorder %s109, %s110
    %p121 = scmp.eq.s32.totalorder %s15, 0
    %p122 = por %p120, %p121
    %p123 = scmp.ne.s32.totalorder %s109, %s110
    %p124 = scmp.eq.s32.totalorder %s16, 15
    %p125 = por %p123, %p124
    %p127 = scmp.ne.s32.totalorder %s110, %s126
    %p128 = scmp.eq.s32.totalorder %s16, 0
    %p129 = por %p127, %p128
    %s130 = ssub.s32 %s17, %s29
    %s131 = ssub.s32 %s18, %s25
    %s132 = sor.u32 %s130, %s131
    %p133 = scmp.eq.s32.totalorder %s132, 0
    %s135 = sadd.s32 %s134, 1
    %s136 = scalar_select %p133, %s134, %s135
    %p139 = pneg %p133
    %p140 = scmp.eq.s32.totalorder %s10, 15
    %p141 = por %p139, %p140
    %p142 = scmp.ne.s32.totalorder %s134, %s137
    %p143 = scmp.eq.s32.totalorder %s10, 0
    %p144 = por %p142, %p143
    %p145 = scmp.ne.s32.totalorder %s134, %s137
    %p146 = scmp.eq.s32.totalorder %s15, 15
    %p147 = por %p145, %p146
    %p148 = scmp.ne.s32.totalorder %s137, %s138
    %p149 = scmp.eq.s32.totalorder %s15, 0
    %p150 = por %p148, %p149
    %p151 = scmp.ne.s32.totalorder %s137, %s138
    %p152 = scmp.eq.s32.totalorder %s16, 15
    %p153 = por %p151, %p152
    %p155 = scmp.ne.s32.totalorder %s138, %s154
    %p156 = scmp.eq.s32.totalorder %s16, 0
    %p157 = por %p155, %p156
    %p158 = scmp.le.s32.totalorder 1, %s10
    %p159 = scmp.lt.s32.totalorder %s10, 17
    %p160 = pnand %p158, %p159
    %p161 = pneg %p160
    // Predicated region
    $region9: #{conv_transpose3d_pallas.13} parent=5 // pred_check
      _
    $region10: #{conv_transpose3d_pallas.13} parent=5 // pred_check_branch
      %163 = sbr.rel (%p160) target = $region12
    $region11: #{conv_transpose3d_pallas.13} parent=5 // pred_region
      %s164 = ssub.s32 %s10, 1
      // Predicated region
      $region13: #{conv_transpose3d_pallas.13} parent=11 // pred_check
        %p165 = pneg %p43
      $region14: #{conv_transpose3d_pallas.13} parent=11 // pred_check_branch
        %167 = sbr.rel (%p165) target = $region16
      $region15: #{conv_transpose3d_pallas.13} parent=11 // pred_region
        _
      $region16: #{conv_transpose3d_pallas.13} parent=11 // pred_fallthru
        _
      // Predicated region
      $region17: #{conv_transpose3d_pallas.13} parent=11 // pred_check
        %p168 = pneg %p64
      $region18: #{conv_transpose3d_pallas.13} parent=11 // pred_check_branch
        %170 = sbr.rel (%p168) target = $region20
      $region19: #{conv_transpose3d_pallas.13} parent=11 // pred_region
        _
      $region20: #{conv_transpose3d_pallas.13} parent=11 // pred_fallthru
        _
    $region12: #{conv_transpose3d_pallas.13} parent=5 // pred_fallthru
      _
    %p171 = scmp.lt.s32.totalorder %s10, 16
    // Predicated region
    $region21: #{conv_transpose3d_pallas.13} parent=5 // pred_check
      %p172 = pneg %p171
    $region22: #{conv_transpose3d_pallas.13} parent=5 // pred_check_branch
      %174 = sbr.rel (%p172) target = $region24
    $region23: #{conv_transpose3d_pallas.13} parent=5 // pred_region
      // Predicated region
      $region25: #{conv_transpose3d_pallas.13} parent=23 // pred_check
        %p175 = pneg %p86
      $region26: #{conv_transpose3d_pallas.13} parent=23 // pred_check_branch
        %177 = sbr.rel (%p175) target = $region28
      $region27: #{conv_transpose3d_pallas.13} parent=23 // pred_region
        %p178 = scmp.lt.s32.totalorder %s17, 1
        %s179 = scalar_select %p178, %s17, 1
        %p180 = scmp.lt.s32.totalorder %s18, 8
        %s181 = scalar_select %p180, %s18, 8
        %s182 = smul.addr %s179, 9
        %s183 = sadd.s32 %s181, %s182
        %s184 = smul.addr %s183, 4
        %s185 = scalar_lea.vmem %s2, %s184
      $region28: #{conv_transpose3d_pallas.13} parent=23 // pred_fallthru
        _
      // Predicated region
      $region29: #{conv_transpose3d_pallas.13} parent=23 // pred_check
        %p186 = pneg %p116
      $region30: #{conv_transpose3d_pallas.13} parent=23 // pred_check_branch
        %188 = sbr.rel (%p186) target = $region32
      $region31: #{conv_transpose3d_pallas.13} parent=23 // pred_region
        %s189 = sadd.s32 %s18, 1
        %p190 = scmp.lt.s32.totalorder %s17, 1
        %s191 = scalar_select %p190, %s17, 1
        %p192 = scmp.lt.s32.totalorder %s189, 8
        %s193 = scalar_select %p192, %s189, 8
        %s194 = smul.addr %s191, 9
        %s195 = sadd.s32 %s193, %s194
        %s196 = smul.addr %s195, 4
        %s197 = scalar_lea.vmem %s3, %s196
        %s198 = sadd.s32 %s18, 1
      $region32: #{conv_transpose3d_pallas.13} parent=23 // pred_fallthru
        _
    $region24: #{conv_transpose3d_pallas.13} parent=5 // pred_fallthru
      _
    %p199 = scmp.le.s32.totalorder 1, %s10
    %p200 = scmp.lt.s32.totalorder %s10, 17
    %p201 = pnand %p199, %p200
    %p202 = pneg %p201
    // Predicated region
    $region33: #{conv_transpose3d_pallas.13} parent=5 // pred_check
      _
    $region34: #{conv_transpose3d_pallas.13} parent=5 // pred_check_branch
      %204 = sbr.rel (%p201) target = $region36
    $region35: #{conv_transpose3d_pallas.13} parent=5 // pred_region
      %s205 = ssub.s32 %s10, 1
      %p206 = pneg %p43
      %p207 = pneg %p40
      %p208 = pneg %p64
      %p209 = pneg %p61
      %p210 = scmp.lt.s32.totalorder %s19, 1
      %s211 = scalar_select %p210, %s19, 1
      %p212 = scmp.lt.s32.totalorder %s20, 8
      %s213 = scalar_select %p212, %s20, 8
      %s214 = smul.addr %s211, 9
      %s215 = sadd.s32 %s213, %s214
      %s216 = smul.addr %s215, 4
      %s217 = scalar_lea.vmem %s2, %s216
      %p218 = pneg %p92
      %p219 = pneg %p89
      %s220 = sadd.s32 %s20, 1
      %p221 = scmp.lt.s32.totalorder %s19, 1
      %s222 = scalar_select %p221, %s19, 1
      %p223 = scmp.lt.s32.totalorder %s220, 8
      %s224 = scalar_select %p223, %s220, 8
      %s225 = smul.addr %s222, 9
      %s226 = sadd.s32 %s224, %s225
      %s227 = smul.addr %s226, 4
      %s228 = scalar_lea.vmem %s3, %s227
      %p229 = pneg %p122
      %p230 = pneg %p119
      %p231 = pneg %p150
      %p232 = pneg %p147
      %p233 = scmp.lt.s32.totalorder %s19, 1
      %s234 = scalar_select %p233, %s19, 1
      %p235 = scmp.lt.s32.totalorder %s20, 7
      %s236 = scalar_select %p235, %s20, 7
      %s237 = smul.addr %s234, 8
      %s238 = sadd.s32 %s236, %s237
      %s239 = smul.addr %s238, 8
      %s240 = scalar_lea.vmem %s4, %s239
      %p241 = scmp.lt.s32.totalorder %s19, 1
      %s242 = scalar_select %p241, %s19, 1
      %p243 = scmp.lt.s32.totalorder %s20, 8
      %s244 = scalar_select %p243, %s20, 8
      %s245 = smul.addr %s242, 9
      %s246 = sadd.s32 %s244, %s245
      %s247 = smul.addr %s246, 4
      %s248 = scalar_lea.vmem %s2, %s247
      %s249 = sadd.s32 %s20, 1
      %p250 = scmp.lt.s32.totalorder %s19, 1
      %s251 = scalar_select %p250, %s19, 1
      %p252 = scmp.lt.s32.totalorder %s249, 8
      %s253 = scalar_select %p252, %s249, 8
      %s254 = smul.addr %s251, 9
      %s255 = sadd.s32 %s253, %s254
      %s256 = smul.addr %s255, 4
      %s257 = scalar_lea.vmem %s3, %s256
      %s258 = sadd.s32 %s20, 1
      %p259 = scmp.lt.s32.totalorder %s19, 1
      %s260 = scalar_select %p259, %s19, 1
      %p261 = scmp.lt.s32.totalorder %s20, 7
      %s262 = scalar_select %p261, %s20, 7
      %s263 = smul.addr %s260, 8
      %s264 = sadd.s32 %s262, %s263
      %s265 = smul.addr %s264, 8
      %s266 = scalar_lea.vmem %s4, %s265
      %v267 = vld [vmem:[%s257] sm:$0xf]
      %v268 = vld [vmem:[%s0] sm:$0xff]
      %s269 = scalar_lea.vmem %s0, 8
      %v270 = vld [vmem:[%s269] sm:$0xff]
      %vm271 = vcmask 31744
      %v273 = vsel %vm271, %v270, 0
      %vm275 = vcmask 1043456
      %v277 = vsel %vm275, %v267, 0
      %279 = vmatprep.subr.mxu0 0.0
      %280 = vmatpush1.msra.mxu0 %v277
      %281 = vmatprep.subr.mxu0 0.0
      %282 = vmatpush1.msra.mxu0 0.0
      %283 = vmatprep.subr.mxu0 0.0
      %284 = vmatpush1.msra.mxu0 0.0
      %285 = vmatprep.subr.mxu0 0.0
      %286 = vmatpush1.msra.mxu0 0.0
      %287 = vmatprep.subr.mxu0 0.0
      %288 = vmatpush1.msra.mxu0 0.0
      %289 = vmatprep.subr.mxu0 0.0
      %290 = vmatpush1.msra.mxu0 0.0
      %291 = vmatprep.subr.mxu0 0.0
      %292 = vmatpush1.msra.mxu0 0.0
      %293 = vmatprep.subr.mxu0 0.0
      %294 = vmatpush1.msra.mxu0 0.0
      %295 = vmatprep.subr.mxu0 0.0
      %296 = vmatpush1.msra.mxu0 0.0
      %297 = vmatprep.subr.mxu0 0.0
      %298 = vmatpush1.msra.mxu0 0.0
      %299 = vmatprep.subr.mxu0 0.0
      %300 = vmatpush1.msra.mxu0 0.0
      %301 = vmatprep.subr.mxu0 0.0
      %302 = vmatpush1.msra.mxu0 0.0
      %303 = vmatprep.subr.mxu0 0.0
      %304 = vmatpush1.msra.mxu0 0.0
      %305 = vmatprep.subr.mxu0 0.0
      %306 = vmatpush1.msra.mxu0 0.0
      %307 = vmatprep.subr.mxu0 0.0
      %308 = vmatpush1.msra.mxu0 0.0
      %309 = vmatprep.subr.mxu0 0.0
      %310 = vmatpush1.msra.mxu0 0.0
      %311 = vmatprep.subr.mxu0 0.0
      %312 = vmatpush1.msra.mxu0 0.0
      %313 = vmatprep.subr.mxu0 0.0
      %314 = vmatpush1.msra.mxu0 0.0
      %315 = vmatprep.subr.mxu0 0.0
      %316 = vmatpush1.msra.mxu0 0.0
      %317 = vmatprep.subr.mxu0 0.0
      %318 = vmatpush1.msra.mxu0 0.0
      %319 = vmatprep.subr.mxu0 0.0
      %320 = vmatpush1.msra.mxu0 0.0
      %321 = vmatprep.subr.mxu0 0.0
      %322 = vmatpush1.msra.mxu0 0.0
      %323 = vmatprep.subr.mxu0 0.0
      %324 = vmatpush1.msra.mxu0 0.0
      %325 = vmatprep.subr.mxu0 0.0
      %326 = vmatpush1.msra.mxu0 0.0
      %327 = vmatprep.subr.mxu0 0.0
      %328 = vmatpush1.msra.mxu0 0.0
      %329 = vmatprep.subr.mxu0 0.0
      %330 = vmatpush1.msra.mxu0 0.0
      %331 = vmatprep.subr.mxu0 0.0
      %332 = vmatpush1.msra.mxu0 0.0
      %333 = vmatprep.subr.mxu0 0.0
      %334 = vmatpush1.msra.mxu0 0.0
      %335 = vmatprep.subr.mxu0 0.0
      %336 = vmatpush1.msra.mxu0 0.0
      %337 = vmatprep.subr.mxu0 0.0
      %338 = vmatpush1.msra.mxu0 0.0
      %339 = vmatprep.subr.mxu0 0.0
      %340 = vmatpush1.msra.mxu0 0.0
      %341 = vmatprep.subr.mxu0 0.0
      %342 = vmatpush1.msra.mxu0 0.0
      %343 = vmatprep.mubr.f32.mxu0 0.0
      %344 = vmatmul.mubr.f32.gmra.mrb[0].mxu0 %v273
      %v345 = vpop.f32.mrb[0].mxu0
      %v346 = vadd.f32 0.0, %v345
      %v347 = vpop.f32.mrb[0].mxu0
      %348 = vdwg.mxu0
      %349 = vrot.lane.b32.xlu0 %v267, 127
      %v350 = vpop.permute.xlu0 %349
      %v352 = vsel %vm271, %v268, 0
      %v354 = vsel %vm275, %v350, 0
      %356 = vmatprep.subr.mxu0 0.0
      %357 = vmatpush1.msra.mxu0 %v354
      %358 = vmatprep.subr.mxu0 0.0
      %359 = vmatpush1.msra.mxu0 0.0
      %360 = vmatprep.subr.mxu0 0.0
      %361 = vmatpush1.msra.mxu0 0.0
      %362 = vmatprep.subr.mxu0 0.0
      %363 = vmatpush1.msra.mxu0 0.0
      %364 = vmatprep.subr.mxu0 0.0
      %365 = vmatpush1.msra.mxu0 0.0
      %366 = vmatprep.subr.mxu0 0.0
      %367 = vmatpush1.msra.mxu0 0.0
      %368 = vmatprep.subr.mxu0 0.0
      %369 = vmatpush1.msra.mxu0 0.0
      %370 = vmatprep.subr.mxu0 0.0
      %371 = vmatpush1.msra.mxu0 0.0
      %372 = vmatprep.subr.mxu0 0.0
      %373 = vmatpush1.msra.mxu0 0.0
      %374 = vmatprep.subr.mxu0 0.0
      %375 = vmatpush1.msra.mxu0 0.0
      %376 = vmatprep.subr.mxu0 0.0
      %377 = vmatpush1.msra.mxu0 0.0
      %378 = vmatprep.subr.mxu0 0.0
      %379 = vmatpush1.msra.mxu0 0.0
      %380 = vmatprep.subr.mxu0 0.0
      %381 = vmatpush1.msra.mxu0 0.0
      %382 = vmatprep.subr.mxu0 0.0
      %383 = vmatpush1.msra.mxu0 0.0
      %384 = vmatprep.subr.mxu0 0.0
      %385 = vmatpush1.msra.mxu0 0.0
      %386 = vmatprep.subr.mxu0 0.0
      %387 = vmatpush1.msra.mxu0 0.0
      %388 = vmatprep.subr.mxu0 0.0
      %389 = vmatpush1.msra.mxu0 0.0
      %390 = vmatprep.subr.mxu0 0.0
      %391 = vmatpush1.msra.mxu0 0.0
      %392 = vmatprep.subr.mxu0 0.0
      %393 = vmatpush1.msra.mxu0 0.0
      %394 = vmatprep.subr.mxu0 0.0
      %395 = vmatpush1.msra.mxu0 0.0
      %396 = vmatprep.subr.mxu0 0.0
      %397 = vmatpush1.msra.mxu0 0.0
      %398 = vmatprep.subr.mxu0 0.0
      %399 = vmatpush1.msra.mxu0 0.0
      %400 = vmatprep.subr.mxu0 0.0
      %401 = vmatpush1.msra.mxu0 0.0
      %402 = vmatprep.subr.mxu0 0.0
      %403 = vmatpush1.msra.mxu0 0.0
      %404 = vmatprep.subr.mxu0 0.0
      %405 = vmatpush1.msra.mxu0 0.0
      %406 = vmatprep.subr.mxu0 0.0
      %407 = vmatpush1.msra.mxu0 0.0
      %408 = vmatprep.subr.mxu0 0.0
      %409 = vmatpush1.msra.mxu0 0.0
      %410 = vmatprep.subr.mxu0 0.0
      %411 = vmatpush1.msra.mxu0 0.0
      %412 = vmatprep.subr.mxu0 0.0
      %413 = vmatpush1.msra.mxu0 0.0
      %414 = vmatprep.subr.mxu0 0.0
      %415 = vmatpush1.msra.mxu0 0.0
      %416 = vmatprep.subr.mxu0 0.0
      %417 = vmatpush1.msra.mxu0 0.0
      %418 = vmatprep.subr.mxu0 0.0
      %419 = vmatpush1.msra.mxu0 0.0
      %420 = vmatprep.mubr.f32.mxu0 0.0
      %421 = vmatmul.mubr.f32.gmra.mrb[0].mxu0 %v352
      %v422 = vpop.f32.mrb[0].mxu0
      %v423 = vadd.f32 %v346, %v422
      %v424 = vpop.f32.mrb[0].mxu0
      %425 = vdwg.mxu0
      %v426 = vld [vmem:[%s248] sm:$0xf]
      %s427 = scalar_lea.vmem %s0, 16
      %v428 = vld [vmem:[%s427] sm:$0xff]
      %430 = vrot.lane.b32.xlu0 %v426, 127
      %v431 = vpop.permute.xlu0 %430
      %v433 = vsel %vm271, %v428, 0
      %v435 = vsel %vm275, %v431, 0
      %437 = vmatprep.subr.mxu0 0.0
      %438 = vmatpush1.msra.mxu0 %v435
      %439 = vmatprep.subr.mxu0 0.0
      %440 = vmatpush1.msra.mxu0 0.0
      %441 = vmatprep.subr.mxu0 0.0
      %442 = vmatpush1.msra.mxu0 0.0
      %443 = vmatprep.subr.mxu0 0.0
      %444 = vmatpush1.msra.mxu0 0.0
      %445 = vmatprep.subr.mxu0 0.0
      %446 = vmatpush1.msra.mxu0 0.0
      %447 = vmatprep.subr.mxu0 0.0
      %448 = vmatpush1.msra.mxu0 0.0
      %449 = vmatprep.subr.mxu0 0.0
      %450 = vmatpush1.msra.mxu0 0.0
      %451 = vmatprep.subr.mxu0 0.0
      %452 = vmatpush1.msra.mxu0 0.0
      %453 = vmatprep.subr.mxu0 0.0
      %454 = vmatpush1.msra.mxu0 0.0
      %455 = vmatprep.subr.mxu0 0.0
      %456 = vmatpush1.msra.mxu0 0.0
      %457 = vmatprep.subr.mxu0 0.0
      %458 = vmatpush1.msra.mxu0 0.0
      %459 = vmatprep.subr.mxu0 0.0
      %460 = vmatpush1.msra.mxu0 0.0
      %461 = vmatprep.subr.mxu0 0.0
      %462 = vmatpush1.msra.mxu0 0.0
      %463 = vmatprep.subr.mxu0 0.0
      %464 = vmatpush1.msra.mxu0 0.0
      %465 = vmatprep.subr.mxu0 0.0
      %466 = vmatpush1.msra.mxu0 0.0
      %467 = vmatprep.subr.mxu0 0.0
      %468 = vmatpush1.msra.mxu0 0.0
      %469 = vmatprep.subr.mxu0 0.0
      %470 = vmatpush1.msra.mxu0 0.0
      %471 = vmatprep.subr.mxu0 0.0
      %472 = vmatpush1.msra.mxu0 0.0
      %473 = vmatprep.subr.mxu0 0.0
      %474 = vmatpush1.msra.mxu0 0.0
      %475 = vmatprep.subr.mxu0 0.0
      %476 = vmatpush1.msra.mxu0 0.0
      %477 = vmatprep.subr.mxu0 0.0
      %478 = vmatpush1.msra.mxu0 0.0
      %479 = vmatprep.subr.mxu0 0.0
      %480 = vmatpush1.msra.mxu0 0.0
      %481 = vmatprep.subr.mxu0 0.0
      %482 = vmatpush1.msra.mxu0 0.0
      %483 = vmatprep.subr.mxu0 0.0
      %484 = vmatpush1.msra.mxu0 0.0
      %485 = vmatprep.subr.mxu0 0.0
      %486 = vmatpush1.msra.mxu0 0.0
      %487 = vmatprep.subr.mxu0 0.0
      %488 = vmatpush1.msra.mxu0 0.0
      %489 = vmatprep.subr.mxu0 0.0
      %490 = vmatpush1.msra.mxu0 0.0
      %491 = vmatprep.subr.mxu0 0.0
      %492 = vmatpush1.msra.mxu0 0.0
      %493 = vmatprep.subr.mxu0 0.0
      %494 = vmatpush1.msra.mxu0 0.0
      %495 = vmatprep.subr.mxu0 0.0
      %496 = vmatpush1.msra.mxu0 0.0
      %497 = vmatprep.subr.mxu0 0.0
      %498 = vmatpush1.msra.mxu0 0.0
      %499 = vmatprep.subr.mxu0 0.0
      %500 = vmatpush1.msra.mxu0 0.0
      %501 = vmatprep.mubr.f32.mxu0 0.0
      %502 = vmatmul.mubr.f32.gmra.mrb[0].mxu0 %v433
      %v503 = vpop.f32.mrb[0].mxu0
      %v504 = vadd.f32 0.0, %v503
      %v505 = vpop.f32.mrb[0].mxu0
      %506 = vdwg.mxu0
      %v507 = vadd.f32 %v423, %v504
      %s508 = scalar_lea.vmem %s0, 24
      %v509 = vld [vmem:[%s508] sm:$0xff]
      %v511 = vsel %vm271, %v509, 0
      %v513 = vsel %vm275, %v426, 0
      %515 = vmatprep.subr.mxu0 0.0
      %516 = vmatpush1.msra.mxu0 %v513
      %517 = vmatprep.subr.mxu0 0.0
      %518 = vmatpush1.msra.mxu0 0.0
      %519 = vmatprep.subr.mxu0 0.0
      %520 = vmatpush1.msra.mxu0 0.0
      %521 = vmatprep.subr.mxu0 0.0
      %522 = vmatpush1.msra.mxu0 0.0
      %523 = vmatprep.subr.mxu0 0.0
      %524 = vmatpush1.msra.mxu0 0.0
      %525 = vmatprep.subr.mxu0 0.0
      %526 = vmatpush1.msra.mxu0 0.0
      %527 = vmatprep.subr.mxu0 0.0
      %528 = vmatpush1.msra.mxu0 0.0
      %529 = vmatprep.subr.mxu0 0.0
      %530 = vmatpush1.msra.mxu0 0.0
      %531 = vmatprep.subr.mxu0 0.0
      %532 = vmatpush1.msra.mxu0 0.0
      %533 = vmatprep.subr.mxu0 0.0
      %534 = vmatpush1.msra.mxu0 0.0
      %535 = vmatprep.subr.mxu0 0.0
      %536 = vmatpush1.msra.mxu0 0.0
      %537 = vmatprep.subr.mxu0 0.0
      %538 = vmatpush1.msra.mxu0 0.0
      %539 = vmatprep.subr.mxu0 0.0
      %540 = vmatpush1.msra.mxu0 0.0
      %541 = vmatprep.subr.mxu0 0.0
      %542 = vmatpush1.msra.mxu0 0.0
      %543 = vmatprep.subr.mxu0 0.0
      %544 = vmatpush1.msra.mxu0 0.0
      %545 = vmatprep.subr.mxu0 0.0
      %546 = vmatpush1.msra.mxu0 0.0
      %547 = vmatprep.subr.mxu0 0.0
      %548 = vmatpush1.msra.mxu0 0.0
      %549 = vmatprep.subr.mxu0 0.0
      %550 = vmatpush1.msra.mxu0 0.0
      %551 = vmatprep.subr.mxu0 0.0
      %552 = vmatpush1.msra.mxu0 0.0
      %553 = vmatprep.subr.mxu0 0.0
      %554 = vmatpush1.msra.mxu0 0.0
      %555 = vmatprep.subr.mxu0 0.0
      %556 = vmatpush1.msra.mxu0 0.0
      %557 = vmatprep.subr.mxu0 0.0
      %558 = vmatpush1.msra.mxu0 0.0
      %559 = vmatprep.subr.mxu0 0.0
      %560 = vmatpush1.msra.mxu0 0.0
      %561 = vmatprep.subr.mxu0 0.0
      %562 = vmatpush1.msra.mxu0 0.0
      %563 = vmatprep.subr.mxu0 0.0
      %564 = vmatpush1.msra.mxu0 0.0
      %565 = vmatprep.subr.mxu0 0.0
      %566 = vmatpush1.msra.mxu0 0.0
      %567 = vmatprep.subr.mxu0 0.0
      %568 = vmatpush1.msra.mxu0 0.0
      %569 = vmatprep.subr.mxu0 0.0
      %570 = vmatpush1.msra.mxu0 0.0
      %571 = vmatprep.subr.mxu0 0.0
      %572 = vmatpush1.msra.mxu0 0.0
      %573 = vmatprep.subr.mxu0 0.0
      %574 = vmatpush1.msra.mxu0 0.0
      %575 = vmatprep.subr.mxu0 0.0
      %576 = vmatpush1.msra.mxu0 0.0
      %577 = vmatprep.subr.mxu0 0.0
      %578 = vmatpush1.msra.mxu0 0.0
      %579 = vmatprep.mubr.f32.mxu0 0.0
      %580 = vmatmul.mubr.f32.gmra.mrb[0].mxu0 %v511
      %v581 = vpop.f32.mrb[0].mxu0
      %v582 = vadd.f32 0.0, %v581
      %v583 = vpop.f32.mrb[0].mxu0
      %584 = vdwg.mxu0
      %v585 = vadd.f32 %v507, %v582
      %v586 = vld [vmem:[%s1] sm:$0xff]
      %588 = vset.pattern.permute.xlu0 0
      %589 = vperm.xlu0 %588, %v586
      %v590 = vpop.permute.xlu0 %589
      %v592 = vadd.f32 %v585, %v590
      %vm593 = vcmask 588800
      %594 = vst.msk [vmem:[%s266] sm:$0xff] %vm593, %v592
      %p595 = scmp.lt.s32.totalorder %s19, 1
      %s596 = scalar_select %p595, %s19, 1
      %p597 = scmp.lt.s32.totalorder %s20, 7
      %s598 = scalar_select %p597, %s20, 7
      %s599 = smul.addr %s596, 8
      %s600 = sadd.s32 %s598, %s599
      %s601 = smul.addr %s600, 8
      %s602 = scalar_lea.vmem %s4, %s601
      // Predicated region
      $region37: #{conv_transpose3d_pallas.13} parent=35 // pred_check
        %p603 = pneg %p147
      $region38: #{conv_transpose3d_pallas.13} parent=35 // pred_check_branch
        %605 = sbr.rel (%p603) target = $region40
      $region39: #{conv_transpose3d_pallas.13} parent=35 // pred_region
        _
      $region40: #{conv_transpose3d_pallas.13} parent=35 // pred_fallthru
        _
    $region36: #{conv_transpose3d_pallas.13} parent=5 // pred_fallthru
      _
    %p606 = scmp.le.s32.totalorder 2, %s10
    // Predicated region
    $region41: #{conv_transpose3d_pallas.13} parent=5 // pred_check
      %p607 = pneg %p606
    $region42: #{conv_transpose3d_pallas.13} parent=5 // pred_check_branch
      %609 = sbr.rel (%p607) target = $region44
    $region43: #{conv_transpose3d_pallas.13} parent=5 // pred_region
      %s610 = ssub.s32 %s10, 2
      // Predicated region
      $region45: #{conv_transpose3d_pallas.13} parent=43 // pred_check
        %p611 = pneg %p153
      $region46: #{conv_transpose3d_pallas.13} parent=43 // pred_check_branch
        %613 = sbr.rel (%p611) target = $region48
      $region47: #{conv_transpose3d_pallas.13} parent=43 // pred_region
        %p614 = scmp.lt.s32.totalorder %s21, 1
        %s615 = scalar_select %p614, %s21, 1
        %p616 = scmp.lt.s32.totalorder %s22, 7
        %s617 = scalar_select %p616, %s22, 7
        %s618 = smul.addr %s615, 8
        %s619 = sadd.s32 %s617, %s618
        %s620 = smul.addr %s619, 8
        %s621 = scalar_lea.vmem %s4, %s620
      $region48: #{conv_transpose3d_pallas.13} parent=43 // pred_fallthru
        _
    $region44: #{conv_transpose3d_pallas.13} parent=5 // pred_fallthru
      _
  $region6: #{conv_transpose3d_pallas.13} parent=0 // loop_footer
    %s14 = sadd.s32 1, %s10
  $region7: #{conv_transpose3d_pallas.13} parent=0 // loop_footer_branch
    %9 = sbr.rel target = $region3
  $region8: #{conv_transpose3d_pallas.13} parent=0 // loop_exit
    _

// kernel: conv_transpose3d_pallas.14
$region0: #{conv_transpose3d_pallas.14}
  #allocation0 [shape = 'u32[]', space=smem, size = 0x4, offset = 0x4, fixed_abs, tag = 'smem constant byte address 0x4 - core index']
  #allocation1 [shape = 'u32[144,128]{1,0:T(1,128)}', space=vmem, size = 0x12000, scoped, tag = 'internal scratch']
  %s0 = inlined_call_operand.vmem [shape: f32[4,8,4], index: 0, kind: input, shape index: {}]
  %s1 = inlined_call_operand.vmem [shape: f32[8,1], index: 1, kind: input, shape index: {}]
  %s2 = inlined_call_operand.vmem [shape: f32[2,9,4,128], index: 2, kind: input, shape index: {}, may-alias: {2,3}]
  %s3 = inlined_call_operand.vmem [shape: f32[2,9,4,128], index: 3, kind: input, shape index: {}, may-alias: {2,3}]
  %s4 = inlined_call_operand.vmem [shape: f32[2,8,8,64], index: 4, kind: output, shape index: {}]
  %s5 = sld [smem:[#allocation0]]
  $region49: #{conv_transpose3d_pallas.14} parent=0
    _
  %s7 = ssub.s32 1, %s5
  %s8 = scalar_select 0, %s7, %s5
  loop: start=0, step=1, limit=18
  $region2: #{conv_transpose3d_pallas.14} parent=0 // loop_pre_header
    _
  $region3: #{conv_transpose3d_pallas.14} parent=0 // loop_header
    %s10 = sphi 0, %s14
    %p11 = scmp.ge.s32.totalorder %s10, 18
    %s17 = sphi 0, %s29
    %s18 = sphi 0, %s25
    %s19 = sphi 0, %s17
    %s20 = sphi 0, %s18
    %s21 = sphi 0, %s19
    %s22 = sphi 0, %s20
    %s30 = sphi 0, %s30
    %s32 = sphi 0, %s30
    %s33 = sphi 0, %s32
    %s47 = sphi 0, %s33
    %s51 = sphi 0, %s51
    %s53 = sphi 0, %s51
    %s54 = sphi 0, %s53
    %s68 = sphi 0, %s54
    %s76 = sphi 0, %s78
    %s79 = sphi 0, %s76
    %s80 = sphi 0, %s79
    %s96 = sphi 0, %s80
    %s106 = sphi 0, %s108
    %s109 = sphi 0, %s106
    %s110 = sphi 0, %s109
    %s126 = sphi 0, %s110
    %s134 = sphi 0, %s136
    %s137 = sphi 0, %s134
    %s138 = sphi 0, %s137
    %s154 = sphi 0, %s138
  $region4: #{conv_transpose3d_pallas.14} parent=0 // loop_header_branch
    %13 = sbr.rel (%p11) target = $region8
  $region5: #{conv_transpose3d_pallas.14} parent=0 // loop_body
    %s15 = ssub.s32 %s10, 1
    %s16 = ssub.s32 %s10, 2
    %s23 = sadd.s32 1, %s18
    %p24 = scmp.ge.s32.totalorder %s23, 8
    %s25 = scalar_select %p24, 0, %s23
    %s26 = sadd.s32 1, %s17
    %s27 = scalar_select %p24, %s26, %s17
    %p28 = scmp.ge.s32.totalorder %s27, 2
    %s29 = scalar_select %p28, 0, %s27
    %s31 = sadd.s32 %s30, 1
    %p34 = scmp.eq.s32.totalorder %s10, 15
    %p35 = scmp.ne.s32.totalorder %s30, %s32
    %p36 = scmp.eq.s32.totalorder %s10, 0
    %p37 = por %p35, %p36
    %p38 = scmp.ne.s32.totalorder %s30, %s32
    %p39 = scmp.eq.s32.totalorder %s15, 15
    %p40 = por %p38, %p39
    %p41 = scmp.ne.s32.totalorder %s32, %s33
    %p42 = scmp.eq.s32.totalorder %s15, 0
    %p43 = por %p41, %p42
    %p44 = scmp.ne.s32.totalorder %s32, %s33
    %p45 = scmp.eq.s32.totalorder %s16, 15
    %p46 = por %p44, %p45
    %p48 = scmp.ne.s32.totalorder %s33, %s47
    %p49 = scmp.eq.s32.totalorder %s16, 0
    %p50 = por %p48, %p49
    %s52 = sadd.s32 %s51, 1
    %p55 = scmp.eq.s32.totalorder %s10, 15
    %p56 = scmp.ne.s32.totalorder %s51, %s53
    %p57 = scmp.eq.s32.totalorder %s10, 0
    %p58 = por %p56, %p57
    %p59 = scmp.ne.s32.totalorder %s51, %s53
    %p60 = scmp.eq.s32.totalorder %s15, 15
    %p61 = por %p59, %p60
    %p62 = scmp.ne.s32.totalorder %s53, %s54
    %p63 = scmp.eq.s32.totalorder %s15, 0
    %p64 = por %p62, %p63
    %p65 = scmp.ne.s32.totalorder %s53, %s54
    %p66 = scmp.eq.s32.totalorder %s16, 15
    %p67 = por %p65, %p66
    %p69 = scmp.ne.s32.totalorder %s54, %s68
    %p70 = scmp.eq.s32.totalorder %s16, 0
    %p71 = por %p69, %p70
    %s72 = ssub.s32 %s17, %s29
    %s73 = ssub.s32 %s18, %s25
    %s74 = sor.u32 %s72, %s73
    %p75 = scmp.eq.s32.totalorder %s74, 0
    %s77 = sadd.s32 %s76, 1
    %s78 = scalar_select %p75, %s76, %s77
    %p81 = pneg %p75
    %p82 = scmp.eq.s32.totalorder %s10, 15
    %p83 = por %p81, %p82
    %p84 = scmp.ne.s32.totalorder %s76, %s79
    %p85 = scmp.eq.s32.totalorder %s10, 0
    %p86 = por %p84, %p85
    %p87 = scmp.ne.s32.totalorder %s76, %s79
    %p88 = scmp.eq.s32.totalorder %s15, 15
    %p89 = por %p87, %p88
    %p90 = scmp.ne.s32.totalorder %s79, %s80
    %p91 = scmp.eq.s32.totalorder %s15, 0
    %p92 = por %p90, %p91
    %p93 = scmp.ne.s32.totalorder %s79, %s80
    %p94 = scmp.eq.s32.totalorder %s16, 15
    %p95 = por %p93, %p94
    %p97 = scmp.ne.s32.totalorder %s80, %s96
    %p98 = scmp.eq.s32.totalorder %s16, 0
    %p99 = por %p97, %p98
    %s100 = sadd.s32 %s18, 1
    %s101 = sadd.s32 %s25, 1
    %s102 = ssub.s32 %s17, %s29
    %s103 = ssub.s32 %s100, %s101
    %s104 = sor.u32 %s102, %s103
    %p105 = scmp.eq.s32.totalorder %s104, 0
    %s107 = sadd.s32 %s106, 1
    %s108 = scalar_select %p105, %s106, %s107
    %p111 = pneg %p105
    %p112 = scmp.eq.s32.totalorder %s10, 15
    %p113 = por %p111, %p112
    %p114 = scmp.ne.s32.totalorder %s106, %s109
    %p115 = scmp.eq.s32.totalorder %s10, 0
    %p116 = por %p114, %p115
    %p117 = scmp.ne.s32.totalorder %s106, %s109
    %p118 = scmp.eq.s32.totalorder %s15, 15
    %p119 = por %p117, %p118
    %p120 = scmp.ne.s32.totalorder %s109, %s110
    %p121 = scmp.eq.s32.totalorder %s15, 0
    %p122 = por %p120, %p121
    %p123 = scmp.ne.s32.totalorder %s109, %s110
    %p124 = scmp.eq.s32.totalorder %s16, 15
    %p125 = por %p123, %p124
    %p127 = scmp.ne.s32.totalorder %s110, %s126
    %p128 = scmp.eq.s32.totalorder %s16, 0
    %p129 = por %p127, %p128
    %s130 = ssub.s32 %s17, %s29
    %s131 = ssub.s32 %s18, %s25
    %s132 = sor.u32 %s130, %s131
    %p133 = scmp.eq.s32.totalorder %s132, 0
    %s135 = sadd.s32 %s134, 1
    %s136 = scalar_select %p133, %s134, %s135
    %p139 = pneg %p133
    %p140 = scmp.eq.s32.totalorder %s10, 15
    %p141 = por %p139, %p140
    %p142 = scmp.ne.s32.totalorder %s134, %s137
    %p143 = scmp.eq.s32.totalorder %s10, 0
    %p144 = por %p142, %p143
    %p145 = scmp.ne.s32.totalorder %s134, %s137
    %p146 = scmp.eq.s32.totalorder %s15, 15
    %p147 = por %p145, %p146
    %p148 = scmp.ne.s32.totalorder %s137, %s138
    %p149 = scmp.eq.s32.totalorder %s15, 0
    %p150 = por %p148, %p149
    %p151 = scmp.ne.s32.totalorder %s137, %s138
    %p152 = scmp.eq.s32.totalorder %s16, 15
    %p153 = por %p151, %p152
    %p155 = scmp.ne.s32.totalorder %s138, %s154
    %p156 = scmp.eq.s32.totalorder %s16, 0
    %p157 = por %p155, %p156
    %p158 = scmp.le.s32.totalorder 1, %s10
    %p159 = scmp.lt.s32.totalorder %s10, 17
    %p160 = pnand %p158, %p159
    %p161 = pneg %p160
    // Predicated region
    $region9: #{conv_transpose3d_pallas.14} parent=5 // pred_check
      _
    $region10: #{conv_transpose3d_pallas.14} parent=5 // pred_check_branch
      %163 = sbr.rel (%p160) target = $region12
    $region11: #{conv_transpose3d_pallas.14} parent=5 // pred_region
      %s164 = ssub.s32 %s10, 1
      // Predicated region
      $region13: #{conv_transpose3d_pallas.14} parent=11 // pred_check
        %p165 = pneg %p43
      $region14: #{conv_transpose3d_pallas.14} parent=11 // pred_check_branch
        %167 = sbr.rel (%p165) target = $region16
      $region15: #{conv_transpose3d_pallas.14} parent=11 // pred_region
        _
      $region16: #{conv_transpose3d_pallas.14} parent=11 // pred_fallthru
        _
      // Predicated region
      $region17: #{conv_transpose3d_pallas.14} parent=11 // pred_check
        %p168 = pneg %p64
      $region18: #{conv_transpose3d_pallas.14} parent=11 // pred_check_branch
        %170 = sbr.rel (%p168) target = $region20
      $region19: #{conv_transpose3d_pallas.14} parent=11 // pred_region
        _
      $region20: #{conv_transpose3d_pallas.14} parent=11 // pred_fallthru
        _
    $region12: #{conv_transpose3d_pallas.14} parent=5 // pred_fallthru
      _
    %p171 = scmp.lt.s32.totalorder %s10, 16
    // Predicated region
    $region21: #{conv_transpose3d_pallas.14} parent=5 // pred_check
      %p172 = pneg %p171
    $region22: #{conv_transpose3d_pallas.14} parent=5 // pred_check_branch
      %174 = sbr.rel (%p172) target = $region24
    $region23: #{conv_transpose3d_pallas.14} parent=5 // pred_region
      // Predicated region
      $region25: #{conv_transpose3d_pallas.14} parent=23 // pred_check
        %p175 = pneg %p86
      $region26: #{conv_transpose3d_pallas.14} parent=23 // pred_check_branch
        %177 = sbr.rel (%p175) target = $region28
      $region27: #{conv_transpose3d_pallas.14} parent=23 // pred_region
        %p178 = scmp.lt.s32.totalorder %s17, 1
        %s179 = scalar_select %p178, %s17, 1
        %p180 = scmp.lt.s32.totalorder %s18, 8
        %s181 = scalar_select %p180, %s18, 8
        %s182 = smul.addr %s179, 9
        %s183 = sadd.s32 %s181, %s182
        %s184 = smul.addr %s183, 4
        %s185 = scalar_lea.vmem %s2, %s184
      $region28: #{conv_transpose3d_pallas.14} parent=23 // pred_fallthru
        _
      // Predicated region
      $region29: #{conv_transpose3d_pallas.14} parent=23 // pred_check
        %p186 = pneg %p116
      $region30: #{conv_transpose3d_pallas.14} parent=23 // pred_check_branch
        %188 = sbr.rel (%p186) target = $region32
      $region31: #{conv_transpose3d_pallas.14} parent=23 // pred_region
        %s189 = sadd.s32 %s18, 1
        %p190 = scmp.lt.s32.totalorder %s17, 1
        %s191 = scalar_select %p190, %s17, 1
        %p192 = scmp.lt.s32.totalorder %s189, 8
        %s193 = scalar_select %p192, %s189, 8
        %s194 = smul.addr %s191, 9
        %s195 = sadd.s32 %s193, %s194
        %s196 = smul.addr %s195, 4
        %s197 = scalar_lea.vmem %s3, %s196
        %s198 = sadd.s32 %s18, 1
      $region32: #{conv_transpose3d_pallas.14} parent=23 // pred_fallthru
        _
    $region24: #{conv_transpose3d_pallas.14} parent=5 // pred_fallthru
      _
    %p199 = scmp.le.s32.totalorder 1, %s10
    %p200 = scmp.lt.s32.totalorder %s10, 17
    %p201 = pnand %p199, %p200
    %p202 = pneg %p201
    // Predicated region
    $region33: #{conv_transpose3d_pallas.14} parent=5 // pred_check
      _
    $region34: #{conv_transpose3d_pallas.14} parent=5 // pred_check_branch
      %204 = sbr.rel (%p201) target = $region36
    $region35: #{conv_transpose3d_pallas.14} parent=5 // pred_region
      %s205 = ssub.s32 %s10, 1
      %p206 = pneg %p43
      %p207 = pneg %p40
      %p208 = pneg %p64
      %p209 = pneg %p61
      %p210 = scmp.lt.s32.totalorder %s19, 1
      %s211 = scalar_select %p210, %s19, 1
      %p212 = scmp.lt.s32.totalorder %s20, 8
      %s213 = scalar_select %p212, %s20, 8
      %s214 = smul.addr %s211, 9
      %s215 = sadd.s32 %s213, %s214
      %s216 = smul.addr %s215, 4
      %s217 = scalar_lea.vmem %s2, %s216
      %p218 = pneg %p92
      %p219 = pneg %p89
      %s220 = sadd.s32 %s20, 1
      %p221 = scmp.lt.s32.totalorder %s19, 1
      %s222 = scalar_select %p221, %s19, 1
      %p223 = scmp.lt.s32.totalorder %s220, 8
      %s224 = scalar_select %p223, %s220, 8
      %s225 = smul.addr %s222, 9
      %s226 = sadd.s32 %s224, %s225
      %s227 = smul.addr %s226, 4
      %s228 = scalar_lea.vmem %s3, %s227
      %p229 = pneg %p122
      %p230 = pneg %p119
      %p231 = pneg %p150
      %p232 = pneg %p147
      %p233 = scmp.lt.s32.totalorder %s19, 1
      %s234 = scalar_select %p233, %s19, 1
      %p235 = scmp.lt.s32.totalorder %s20, 7
      %s236 = scalar_select %p235, %s20, 7
      %s237 = smul.addr %s234, 8
      %s238 = sadd.s32 %s236, %s237
      %s239 = smul.addr %s238, 8
      %s240 = scalar_lea.vmem %s4, %s239
      %p241 = scmp.lt.s32.totalorder %s19, 1
      %s242 = scalar_select %p241, %s19, 1
      %p243 = scmp.lt.s32.totalorder %s20, 8
      %s244 = scalar_select %p243, %s20, 8
      %s245 = smul.addr %s242, 9
      %s246 = sadd.s32 %s244, %s245
      %s247 = smul.addr %s246, 4
      %s248 = scalar_lea.vmem %s2, %s247
      %s249 = sadd.s32 %s20, 1
      %p250 = scmp.lt.s32.totalorder %s19, 1
      %s251 = scalar_select %p250, %s19, 1
      %p252 = scmp.lt.s32.totalorder %s249, 8
      %s253 = scalar_select %p252, %s249, 8
      %s254 = smul.addr %s251, 9
      %s255 = sadd.s32 %s253, %s254
      %s256 = smul.addr %s255, 4
      %s257 = scalar_lea.vmem %s3, %s256
      %s258 = sadd.s32 %s20, 1
      %p259 = scmp.lt.s32.totalorder %s19, 1
      %s260 = scalar_select %p259, %s19, 1
      %p261 = scmp.lt.s32.totalorder %s20, 7
      %s262 = scalar_select %p261, %s20, 7
      %s263 = smul.addr %s260, 8
      %s264 = sadd.s32 %s262, %s263
      %s265 = smul.addr %s264, 8
      %s266 = scalar_lea.vmem %s4, %s265
      %v267 = vld [vmem:[%s257] sm:$0xf]
      %v268 = vld [vmem:[%s0] sm:$0xff]
      %s269 = scalar_lea.vmem %s0, 8
      %v270 = vld [vmem:[%s269] sm:$0xff]
      %vm271 = vcmask 31744
      %v273 = vsel %vm271, %v270, 0
      %vm275 = vcmask 1043456
      %v277 = vsel %vm275, %v267, 0
      %279 = vmatprep.subr.mxu0 0.0
      %280 = vmatpush1.msra.mxu0 %v277
      %281 = vmatprep.subr.mxu0 0.0
      %282 = vmatpush1.msra.mxu0 0.0
      %283 = vmatprep.subr.mxu0 0.0
      %284 = vmatpush1.msra.mxu0 0.0
      %285 = vmatprep.subr.mxu0 0.0
      %286 = vmatpush1.msra.mxu0 0.0
      %287 = vmatprep.subr.mxu0 0.0
      %288 = vmatpush1.msra.mxu0 0.0
      %289 = vmatprep.subr.mxu0 0.0
      %290 = vmatpush1.msra.mxu0 0.0
      %291 = vmatprep.subr.mxu0 0.0
      %292 = vmatpush1.msra.mxu0 0.0
      %293 = vmatprep.subr.mxu0 0.0
      %294 = vmatpush1.msra.mxu0 0.0
      %295 = vmatprep.subr.mxu0 0.0
      %296 = vmatpush1.msra.mxu0 0.0
      %297 = vmatprep.subr.mxu0 0.0
      %298 = vmatpush1.msra.mxu0 0.0
      %299 = vmatprep.subr.mxu0 0.0
      %300 = vmatpush1.msra.mxu0 0.0
      %301 = vmatprep.subr.mxu0 0.0
      %302 = vmatpush1.msra.mxu0 0.0
      %303 = vmatprep.subr.mxu0 0.0
      %304 = vmatpush1.msra.mxu0 0.0
      %305 = vmatprep.subr.mxu0 0.0
      %306 = vmatpush1.msra.mxu0 0.0
      %307 = vmatprep.subr.mxu0 0.0
      %308 = vmatpush1.msra.mxu0 0.0
      %309 = vmatprep.subr.mxu0 0.0
      %310 = vmatpush1.msra.mxu0 0.0
      %311 = vmatprep.subr.mxu0 0.0
      %312 = vmatpush1.msra.mxu0 0.0
      %313 = vmatprep.subr.mxu0 0.0
      %314 = vmatpush1.msra.mxu0 0.0
      %315 = vmatprep.subr.mxu0 0.0
      %316 = vmatpush1.msra.mxu0 0.0
      %317 = vmatprep.subr.mxu0 0.0
      %318 = vmatpush1.msra.mxu0 0.0
      %319 = vmatprep.subr.mxu0 0.0
      %320 = vmatpush1.msra.mxu0 0.0
      %321 = vmatprep.subr.mxu0 0.0
      %322 = vmatpush1.msra.mxu0 0.0
      %323 = vmatprep.subr.mxu0 0.0
      %324 = vmatpush1.msra.mxu0 0.0
      %325 = vmatprep.subr.mxu0 0.0
      %326 = vmatpush1.msra.mxu0 0.0
      %327 = vmatprep.subr.mxu0 0.0
      %328 = vmatpush1.msra.mxu0 0.0
      %329 = vmatprep.subr.mxu0 0.0
      %330 = vmatpush1.msra.mxu0 0.0
      %331 = vmatprep.subr.mxu0 0.0
      %332 = vmatpush1.msra.mxu0 0.0
      %333 = vmatprep.subr.mxu0 0.0
      %334 = vmatpush1.msra.mxu0 0.0
      %335 = vmatprep.subr.mxu0 0.0
      %336 = vmatpush1.msra.mxu0 0.0
      %337 = vmatprep.subr.mxu0 0.0
      %338 = vmatpush1.msra.mxu0 0.0
      %339 = vmatprep.subr.mxu0 0.0
      %340 = vmatpush1.msra.mxu0 0.0
      %341 = vmatprep.subr.mxu0 0.0
      %342 = vmatpush1.msra.mxu0 0.0
      %343 = vmatprep.mubr.f32.mxu0 0.0
      %344 = vmatmul.mubr.f32.gmra.mrb[0].mxu0 %v273
      %v345 = vpop.f32.mrb[0].mxu0
      %v346 = vadd.f32 0.0, %v345
      %v347 = vpop.f32.mrb[0].mxu0
      %348 = vdwg.mxu0
      %349 = vrot.lane.b32.xlu0 %v267, 120
      %v350 = vpop.permute.xlu0 %349
      %v352 = vsel %vm271, %v268, 0
      %v354 = vsel %vm275, %v350, 0
      %356 = vmatprep.subr.mxu0 0.0
      %357 = vmatpush1.msra.mxu0 %v354
      %358 = vmatprep.subr.mxu0 0.0
      %359 = vmatpush1.msra.mxu0 0.0
      %360 = vmatprep.subr.mxu0 0.0
      %361 = vmatpush1.msra.mxu0 0.0
      %362 = vmatprep.subr.mxu0 0.0
      %363 = vmatpush1.msra.mxu0 0.0
      %364 = vmatprep.subr.mxu0 0.0
      %365 = vmatpush1.msra.mxu0 0.0
      %366 = vmatprep.subr.mxu0 0.0
      %367 = vmatpush1.msra.mxu0 0.0
      %368 = vmatprep.subr.mxu0 0.0
      %369 = vmatpush1.msra.mxu0 0.0
      %370 = vmatprep.subr.mxu0 0.0
      %371 = vmatpush1.msra.mxu0 0.0
      %372 = vmatprep.subr.mxu0 0.0
      %373 = vmatpush1.msra.mxu0 0.0
      %374 = vmatprep.subr.mxu0 0.0
      %375 = vmatpush1.msra.mxu0 0.0
      %376 = vmatprep.subr.mxu0 0.0
      %377 = vmatpush1.msra.mxu0 0.0
      %378 = vmatprep.subr.mxu0 0.0
      %379 = vmatpush1.msra.mxu0 0.0
      %380 = vmatprep.subr.mxu0 0.0
      %381 = vmatpush1.msra.mxu0 0.0
      %382 = vmatprep.subr.mxu0 0.0
      %383 = vmatpush1.msra.mxu0 0.0
      %384 = vmatprep.subr.mxu0 0.0
      %385 = vmatpush1.msra.mxu0 0.0
      %386 = vmatprep.subr.mxu0 0.0
      %387 = vmatpush1.msra.mxu0 0.0
      %388 = vmatprep.subr.mxu0 0.0
      %389 = vmatpush1.msra.mxu0 0.0
      %390 = vmatprep.subr.mxu0 0.0
      %391 = vmatpush1.msra.mxu0 0.0
      %392 = vmatprep.subr.mxu0 0.0
      %393 = vmatpush1.msra.mxu0 0.0
      %394 = vmatprep.subr.mxu0 0.0
      %395 = vmatpush1.msra.mxu0 0.0
      %396 = vmatprep.subr.mxu0 0.0
      %397 = vmatpush1.msra.mxu0 0.0
      %398 = vmatprep.subr.mxu0 0.0
      %399 = vmatpush1.msra.mxu0 0.0
      %400 = vmatprep.subr.mxu0 0.0
      %401 = vmatpush1.msra.mxu0 0.0
      %402 = vmatprep.subr.mxu0 0.0
      %403 = vmatpush1.msra.mxu0 0.0
      %404 = vmatprep.subr.mxu0 0.0
      %405 = vmatpush1.msra.mxu0 0.0
      %406 = vmatprep.subr.mxu0 0.0
      %407 = vmatpush1.msra.mxu0 0.0
      %408 = vmatprep.subr.mxu0 0.0
      %409 = vmatpush1.msra.mxu0 0.0
      %410 = vmatprep.subr.mxu0 0.0
      %411 = vmatpush1.msra.mxu0 0.0
      %412 = vmatprep.subr.mxu0 0.0
      %413 = vmatpush1.msra.mxu0 0.0
      %414 = vmatprep.subr.mxu0 0.0
      %415 = vmatpush1.msra.mxu0 0.0
      %416 = vmatprep.subr.mxu0 0.0
      %417 = vmatpush1.msra.mxu0 0.0
      %418 = vmatprep.subr.mxu0 0.0
      %419 = vmatpush1.msra.mxu0 0.0
      %420 = vmatprep.mubr.f32.mxu0 0.0
      %421 = vmatmul.mubr.f32.gmra.mrb[0].mxu0 %v352
      %v422 = vpop.f32.mrb[0].mxu0
      %v423 = vadd.f32 %v346, %v422
      %v424 = vpop.f32.mrb[0].mxu0
      %425 = vdwg.mxu0
      %v426 = vld [vmem:[%s248] sm:$0xf]
      %s427 = scalar_lea.vmem %s0, 16
      %v428 = vld [vmem:[%s427] sm:$0xff]
      %430 = vrot.lane.b32.xlu0 %v426, 120
      %v431 = vpop.permute.xlu0 %430
      %v433 = vsel %vm271, %v428, 0
      %v435 = vsel %vm275, %v431, 0
      %437 = vmatprep.subr.mxu0 0.0
      %438 = vmatpush1.msra.mxu0 %v435
      %439 = vmatprep.subr.mxu0 0.0
      %440 = vmatpush1.msra.mxu0 0.0
      %441 = vmatprep.subr.mxu0 0.0
      %442 = vmatpush1.msra.mxu0 0.0
      %443 = vmatprep.subr.mxu0 0.0
      %444 = vmatpush1.msra.mxu0 0.0
      %445 = vmatprep.subr.mxu0 0.0
      %446 = vmatpush1.msra.mxu0 0.0
      %447 = vmatprep.subr.mxu0 0.0
      %448 = vmatpush1.msra.mxu0 0.0
      %449 = vmatprep.subr.mxu0 0.0
      %450 = vmatpush1.msra.mxu0 0.0
      %451 = vmatprep.subr.mxu0 0.0
      %452 = vmatpush1.msra.mxu0 0.0
      %453 = vmatprep.subr.mxu0 0.0
      %454 = vmatpush1.msra.mxu0 0.0
      %455 = vmatprep.subr.mxu0 0.0
      %456 = vmatpush1.msra.mxu0 0.0
      %457 = vmatprep.subr.mxu0 0.0
      %458 = vmatpush1.msra.mxu0 0.0
      %459 = vmatprep.subr.mxu0 0.0
      %460 = vmatpush1.msra.mxu0 0.0
      %461 = vmatprep.subr.mxu0 0.0
      %462 = vmatpush1.msra.mxu0 0.0
      %463 = vmatprep.subr.mxu0 0.0
      %464 = vmatpush1.msra.mxu0 0.0
      %465 = vmatprep.subr.mxu0 0.0
      %466 = vmatpush1.msra.mxu0 0.0
      %467 = vmatprep.subr.mxu0 0.0
      %468 = vmatpush1.msra.mxu0 0.0
      %469 = vmatprep.subr.mxu0 0.0
      %470 = vmatpush1.msra.mxu0 0.0
      %471 = vmatprep.subr.mxu0 0.0
      %472 = vmatpush1.msra.mxu0 0.0
      %473 = vmatprep.subr.mxu0 0.0
      %474 = vmatpush1.msra.mxu0 0.0
      %475 = vmatprep.subr.mxu0 0.0
      %476 = vmatpush1.msra.mxu0 0.0
      %477 = vmatprep.subr.mxu0 0.0
      %478 = vmatpush1.msra.mxu0 0.0
      %479 = vmatprep.subr.mxu0 0.0
      %480 = vmatpush1.msra.mxu0 0.0
      %481 = vmatprep.subr.mxu0 0.0
      %482 = vmatpush1.msra.mxu0 0.0
      %483 = vmatprep.subr.mxu0 0.0
      %484 = vmatpush1.msra.mxu0 0.0
      %485 = vmatprep.subr.mxu0 0.0
      %486 = vmatpush1.msra.mxu0 0.0
      %487 = vmatprep.subr.mxu0 0.0
      %488 = vmatpush1.msra.mxu0 0.0
      %489 = vmatprep.subr.mxu0 0.0
      %490 = vmatpush1.msra.mxu0 0.0
      %491 = vmatprep.subr.mxu0 0.0
      %492 = vmatpush1.msra.mxu0 0.0
      %493 = vmatprep.subr.mxu0 0.0
      %494 = vmatpush1.msra.mxu0 0.0
      %495 = vmatprep.subr.mxu0 0.0
      %496 = vmatpush1.msra.mxu0 0.0
      %497 = vmatprep.subr.mxu0 0.0
      %498 = vmatpush1.msra.mxu0 0.0
      %499 = vmatprep.subr.mxu0 0.0
      %500 = vmatpush1.msra.mxu0 0.0
      %501 = vmatprep.mubr.f32.mxu0 0.0
      %502 = vmatmul.mubr.f32.gmra.mrb[0].mxu0 %v433
      %v503 = vpop.f32.mrb[0].mxu0
      %v504 = vadd.f32 0.0, %v503
      %v505 = vpop.f32.mrb[0].mxu0
      %506 = vdwg.mxu0
      %v507 = vadd.f32 %v423, %v504
      %s508 = scalar_lea.vmem %s0, 24
      %v509 = vld [vmem:[%s508] sm:$0xff]
      %v511 = vsel %vm271, %v509, 0
      %v513 = vsel %vm275, %v426, 0
      %515 = vmatprep.subr.mxu0 0.0
      %516 = vmatpush1.msra.mxu0 %v513
      %517 = vmatprep.subr.mxu0 0.0
      %518 = vmatpush1.msra.mxu0 0.0
      %519 = vmatprep.subr.mxu0 0.0
      %520 = vmatpush1.msra.mxu0 0.0
      %521 = vmatprep.subr.mxu0 0.0
      %522 = vmatpush1.msra.mxu0 0.0
      %523 = vmatprep.subr.mxu0 0.0
      %524 = vmatpush1.msra.mxu0 0.0
      %525 = vmatprep.subr.mxu0 0.0
      %526 = vmatpush1.msra.mxu0 0.0
      %527 = vmatprep.subr.mxu0 0.0
      %528 = vmatpush1.msra.mxu0 0.0
      %529 = vmatprep.subr.mxu0 0.0
      %530 = vmatpush1.msra.mxu0 0.0
      %531 = vmatprep.subr.mxu0 0.0
      %532 = vmatpush1.msra.mxu0 0.0
      %533 = vmatprep.subr.mxu0 0.0
      %534 = vmatpush1.msra.mxu0 0.0
      %535 = vmatprep.subr.mxu0 0.0
      %536 = vmatpush1.msra.mxu0 0.0
      %537 = vmatprep.subr.mxu0 0.0
      %538 = vmatpush1.msra.mxu0 0.0
      %539 = vmatprep.subr.mxu0 0.0
      %540 = vmatpush1.msra.mxu0 0.0
      %541 = vmatprep.subr.mxu0 0.0
      %542 = vmatpush1.msra.mxu0 0.0
      %543 = vmatprep.subr.mxu0 0.0
      %544 = vmatpush1.msra.mxu0 0.0
      %545 = vmatprep.subr.mxu0 0.0
      %546 = vmatpush1.msra.mxu0 0.0
      %547 = vmatprep.subr.mxu0 0.0
      %548 = vmatpush1.msra.mxu0 0.0
      %549 = vmatprep.subr.mxu0 0.0
      %550 = vmatpush1.msra.mxu0 0.0
      %551 = vmatprep.subr.mxu0 0.0
      %552 = vmatpush1.msra.mxu0 0.0
      %553 = vmatprep.subr.mxu0 0.0
      %554 = vmatpush1.msra.mxu0 0.0
      %555 = vmatprep.subr.mxu0 0.0
      %556 = vmatpush1.msra.mxu0 0.0
      %557 = vmatprep.subr.mxu0 0.0
      %558 = vmatpush1.msra.mxu0 0.0
      %559 = vmatprep.subr.mxu0 0.0
      %560 = vmatpush1.msra.mxu0 0.0
      %561 = vmatprep.subr.mxu0 0.0
      %562 = vmatpush1.msra.mxu0 0.0
      %563 = vmatprep.subr.mxu0 0.0
      %564 = vmatpush1.msra.mxu0 0.0
      %565 = vmatprep.subr.mxu0 0.0
      %566 = vmatpush1.msra.mxu0 0.0
      %567 = vmatprep.subr.mxu0 0.0
      %568 = vmatpush1.msra.mxu0 0.0
      %569 = vmatprep.subr.mxu0 0.0
      %570 = vmatpush1.msra.mxu0 0.0
      %571 = vmatprep.subr.mxu0 0.0
      %572 = vmatpush1.msra.mxu0 0.0
      %573 = vmatprep.subr.mxu0 0.0
      %574 = vmatpush1.msra.mxu0 0.0
      %575 = vmatprep.subr.mxu0 0.0
      %576 = vmatpush1.msra.mxu0 0.0
      %577 = vmatprep.subr.mxu0 0.0
      %578 = vmatpush1.msra.mxu0 0.0
      %579 = vmatprep.mubr.f32.mxu0 0.0
      %580 = vmatmul.mubr.f32.gmra.mrb[0].mxu0 %v511
      %v581 = vpop.f32.mrb[0].mxu0
      %v582 = vadd.f32 0.0, %v581
      %v583 = vpop.f32.mrb[0].mxu0
      %584 = vdwg.mxu0
      %v585 = vadd.f32 %v507, %v582
      %v586 = vld [vmem:[%s1] sm:$0xff]
      %588 = vset.pattern.permute.xlu0 0
      %589 = vperm.xlu0 %588, %v586
      %v590 = vpop.permute.xlu0 %589
      %v592 = vadd.f32 %v585, %v590
      %vm593 = vcmask 523264
      %594 = vst.msk [vmem:[%s266] sm:$0xff] %vm593, %v592
      %p595 = scmp.lt.s32.totalorder %s19, 1
      %s596 = scalar_select %p595, %s19, 1
      %p597 = scmp.lt.s32.totalorder %s20, 7
      %s598 = scalar_select %p597, %s20, 7
      %s599 = smul.addr %s596, 8
      %s600 = sadd.s32 %s598, %s599
      %s601 = smul.addr %s600, 8
      %s602 = scalar_lea.vmem %s4, %s601
      // Predicated region
      $region37: #{conv_transpose3d_pallas.14} parent=35 // pred_check
        %p603 = pneg %p147
      $region38: #{conv_transpose3d_pallas.14} parent=35 // pred_check_branch
        %605 = sbr.rel (%p603) target = $region40
      $region39: #{conv_transpose3d_pallas.14} parent=35 // pred_region
        _
      $region40: #{conv_transpose3d_pallas.14} parent=35 // pred_fallthru
        _
    $region36: #{conv_transpose3d_pallas.14} parent=5 // pred_fallthru
      _
    %p606 = scmp.le.s32.totalorder 2, %s10
    // Predicated region
    $region41: #{conv_transpose3d_pallas.14} parent=5 // pred_check
      %p607 = pneg %p606
    $region42: #{conv_transpose3d_pallas.14} parent=5 // pred_check_branch
      %609 = sbr.rel (%p607) target = $region44
    $region43: #{conv_transpose3d_pallas.14} parent=5 // pred_region
      %s610 = ssub.s32 %s10, 2
      // Predicated region
      $region45: #{conv_transpose3d_pallas.14} parent=43 // pred_check
        %p611 = pneg %p153
      $region46: #{conv_transpose3d_pallas.14} parent=43 // pred_check_branch
        %613 = sbr.rel (%p611) target = $region48
      $region47: #{conv_transpose3d_pallas.14} parent=43 // pred_region
        %p614 = scmp.lt.s32.totalorder %s21, 1
        %s615 = scalar_select %p614, %s21, 1
        %p616 = scmp.lt.s32.totalorder %s22, 7
        %s617 = scalar_select %p616, %s22, 7
        %s618 = smul.addr %s615, 8
        %s619 = sadd.s32 %s617, %s618
        %s620 = smul.addr %s619, 8
        %s621 = scalar_lea.vmem %s4, %s620
      $region48: #{conv_transpose3d_pallas.14} parent=43 // pred_fallthru
        _
    $region44: #{conv_transpose3d_pallas.14} parent=5 // pred_fallthru
      _
  $region6: #{conv_transpose3d_pallas.14} parent=0 // loop_footer
    %s14 = sadd.s32 1, %s10
  $region7: #{conv_transpose3d_pallas.14} parent=0 // loop_footer_branch
    %9 = sbr.rel target = $region3
  $region8: #{conv_transpose3d_pallas.14} parent=0 // loop_exit
    _

// kernel: conv_transpose3d_pallas.15
$region0: #{conv_transpose3d_pallas.15}
  #allocation0 [shape = 'u32[]', space=smem, size = 0x4, offset = 0x4, fixed_abs, tag = 'smem constant byte address 0x4 - core index']
  #allocation1 [shape = 'u32[144,128]{1,0:T(1,128)}', space=vmem, size = 0x12000, scoped, tag = 'internal scratch']
  %s0 = inlined_call_operand.vmem [shape: f32[8,8,4], index: 0, kind: input, shape index: {}]
  %s1 = inlined_call_operand.vmem [shape: f32[8,1], index: 1, kind: input, shape index: {}]
  %s2 = inlined_call_operand.vmem [shape: f32[2,9,4,128], index: 2, kind: input, shape index: {}, may-alias: {2,3}]
  %s3 = inlined_call_operand.vmem [shape: f32[2,9,4,128], index: 3, kind: input, shape index: {}, may-alias: {2,3}]
  %s4 = inlined_call_operand.vmem [shape: f32[2,8,8,72], index: 4, kind: output, shape index: {}]
  %s5 = sld [smem:[#allocation0]]
  $region49: #{conv_transpose3d_pallas.15} parent=0
    _
  %s7 = ssub.s32 1, %s5
  %s8 = scalar_select 0, %s7, %s5
  loop: start=0, step=1, limit=18
  $region2: #{conv_transpose3d_pallas.15} parent=0 // loop_pre_header
    _
  $region3: #{conv_transpose3d_pallas.15} parent=0 // loop_header
    %s10 = sphi 0, %s14
    %p11 = scmp.ge.s32.totalorder %s10, 18
    %s17 = sphi 0, %s29
    %s18 = sphi 0, %s25
    %s19 = sphi 0, %s17
    %s20 = sphi 0, %s18
    %s21 = sphi 0, %s19
    %s22 = sphi 0, %s20
    %s30 = sphi 0, %s30
    %s32 = sphi 0, %s30
    %s33 = sphi 0, %s32
    %s47 = sphi 0, %s33
    %s51 = sphi 0, %s51
    %s53 = sphi 0, %s51
    %s54 = sphi 0, %s53
    %s68 = sphi 0, %s54
    %s76 = sphi 0, %s78
    %s79 = sphi 0, %s76
    %s80 = sphi 0, %s79
    %s96 = sphi 0, %s80
    %s106 = sphi 0, %s108
    %s109 = sphi 0, %s106
    %s110 = sphi 0, %s109
    %s126 = sphi 0, %s110
    %s134 = sphi 0, %s136
    %s137 = sphi 0, %s134
    %s138 = sphi 0, %s137
    %s154 = sphi 0, %s138
  $region4: #{conv_transpose3d_pallas.15} parent=0 // loop_header_branch
    %13 = sbr.rel (%p11) target = $region8
  $region5: #{conv_transpose3d_pallas.15} parent=0 // loop_body
    %s15 = ssub.s32 %s10, 1
    %s16 = ssub.s32 %s10, 2
    %s23 = sadd.s32 1, %s18
    %p24 = scmp.ge.s32.totalorder %s23, 8
    %s25 = scalar_select %p24, 0, %s23
    %s26 = sadd.s32 1, %s17
    %s27 = scalar_select %p24, %s26, %s17
    %p28 = scmp.ge.s32.totalorder %s27, 2
    %s29 = scalar_select %p28, 0, %s27
    %s31 = sadd.s32 %s30, 1
    %p34 = scmp.eq.s32.totalorder %s10, 15
    %p35 = scmp.ne.s32.totalorder %s30, %s32
    %p36 = scmp.eq.s32.totalorder %s10, 0
    %p37 = por %p35, %p36
    %p38 = scmp.ne.s32.totalorder %s30, %s32
    %p39 = scmp.eq.s32.totalorder %s15, 15
    %p40 = por %p38, %p39
    %p41 = scmp.ne.s32.totalorder %s32, %s33
    %p42 = scmp.eq.s32.totalorder %s15, 0
    %p43 = por %p41, %p42
    %p44 = scmp.ne.s32.totalorder %s32, %s33
    %p45 = scmp.eq.s32.totalorder %s16, 15
    %p46 = por %p44, %p45
    %p48 = scmp.ne.s32.totalorder %s33, %s47
    %p49 = scmp.eq.s32.totalorder %s16, 0
    %p50 = por %p48, %p49
    %s52 = sadd.s32 %s51, 1
    %p55 = scmp.eq.s32.totalorder %s10, 15
    %p56 = scmp.ne.s32.totalorder %s51, %s53
    %p57 = scmp.eq.s32.totalorder %s10, 0
    %p58 = por %p56, %p57
    %p59 = scmp.ne.s32.totalorder %s51, %s53
    %p60 = scmp.eq.s32.totalorder %s15, 15
    %p61 = por %p59, %p60
    %p62 = scmp.ne.s32.totalorder %s53, %s54
    %p63 = scmp.eq.s32.totalorder %s15, 0
    %p64 = por %p62, %p63
    %p65 = scmp.ne.s32.totalorder %s53, %s54
    %p66 = scmp.eq.s32.totalorder %s16, 15
    %p67 = por %p65, %p66
    %p69 = scmp.ne.s32.totalorder %s54, %s68
    %p70 = scmp.eq.s32.totalorder %s16, 0
    %p71 = por %p69, %p70
    %s72 = ssub.s32 %s17, %s29
    %s73 = ssub.s32 %s18, %s25
    %s74 = sor.u32 %s72, %s73
    %p75 = scmp.eq.s32.totalorder %s74, 0
    %s77 = sadd.s32 %s76, 1
    %s78 = scalar_select %p75, %s76, %s77
    %p81 = pneg %p75
    %p82 = scmp.eq.s32.totalorder %s10, 15
    %p83 = por %p81, %p82
    %p84 = scmp.ne.s32.totalorder %s76, %s79
    %p85 = scmp.eq.s32.totalorder %s10, 0
    %p86 = por %p84, %p85
    %p87 = scmp.ne.s32.totalorder %s76, %s79
    %p88 = scmp.eq.s32.totalorder %s15, 15
    %p89 = por %p87, %p88
    %p90 = scmp.ne.s32.totalorder %s79, %s80
    %p91 = scmp.eq.s32.totalorder %s15, 0
    %p92 = por %p90, %p91
    %p93 = scmp.ne.s32.totalorder %s79, %s80
    %p94 = scmp.eq.s32.totalorder %s16, 15
    %p95 = por %p93, %p94
    %p97 = scmp.ne.s32.totalorder %s80, %s96
    %p98 = scmp.eq.s32.totalorder %s16, 0
    %p99 = por %p97, %p98
    %s100 = sadd.s32 %s18, 1
    %s101 = sadd.s32 %s25, 1
    %s102 = ssub.s32 %s17, %s29
    %s103 = ssub.s32 %s100, %s101
    %s104 = sor.u32 %s102, %s103
    %p105 = scmp.eq.s32.totalorder %s104, 0
    %s107 = sadd.s32 %s106, 1
    %s108 = scalar_select %p105, %s106, %s107
    %p111 = pneg %p105
    %p112 = scmp.eq.s32.totalorder %s10, 15
    %p113 = por %p111, %p112
    %p114 = scmp.ne.s32.totalorder %s106, %s109
    %p115 = scmp.eq.s32.totalorder %s10, 0
    %p116 = por %p114, %p115
    %p117 = scmp.ne.s32.totalorder %s106, %s109
    %p118 = scmp.eq.s32.totalorder %s15, 15
    %p119 = por %p117, %p118
    %p120 = scmp.ne.s32.totalorder %s109, %s110
    %p121 = scmp.eq.s32.totalorder %s15, 0
    %p122 = por %p120, %p121
    %p123 = scmp.ne.s32.totalorder %s109, %s110
    %p124 = scmp.eq.s32.totalorder %s16, 15
    %p125 = por %p123, %p124
    %p127 = scmp.ne.s32.totalorder %s110, %s126
    %p128 = scmp.eq.s32.totalorder %s16, 0
    %p129 = por %p127, %p128
    %s130 = ssub.s32 %s17, %s29
    %s131 = ssub.s32 %s18, %s25
    %s132 = sor.u32 %s130, %s131
    %p133 = scmp.eq.s32.totalorder %s132, 0
    %s135 = sadd.s32 %s134, 1
    %s136 = scalar_select %p133, %s134, %s135
    %p139 = pneg %p133
    %p140 = scmp.eq.s32.totalorder %s10, 15
    %p141 = por %p139, %p140
    %p142 = scmp.ne.s32.totalorder %s134, %s137
    %p143 = scmp.eq.s32.totalorder %s10, 0
    %p144 = por %p142, %p143
    %p145 = scmp.ne.s32.totalorder %s134, %s137
    %p146 = scmp.eq.s32.totalorder %s15, 15
    %p147 = por %p145, %p146
    %p148 = scmp.ne.s32.totalorder %s137, %s138
    %p149 = scmp.eq.s32.totalorder %s15, 0
    %p150 = por %p148, %p149
    %p151 = scmp.ne.s32.totalorder %s137, %s138
    %p152 = scmp.eq.s32.totalorder %s16, 15
    %p153 = por %p151, %p152
    %p155 = scmp.ne.s32.totalorder %s138, %s154
    %p156 = scmp.eq.s32.totalorder %s16, 0
    %p157 = por %p155, %p156
    %p158 = scmp.le.s32.totalorder 1, %s10
    %p159 = scmp.lt.s32.totalorder %s10, 17
    %p160 = pnand %p158, %p159
    %p161 = pneg %p160
    // Predicated region
    $region9: #{conv_transpose3d_pallas.15} parent=5 // pred_check
      _
    $region10: #{conv_transpose3d_pallas.15} parent=5 // pred_check_branch
      %163 = sbr.rel (%p160) target = $region12
    $region11: #{conv_transpose3d_pallas.15} parent=5 // pred_region
      %s164 = ssub.s32 %s10, 1
      // Predicated region
      $region13: #{conv_transpose3d_pallas.15} parent=11 // pred_check
        %p165 = pneg %p43
      $region14: #{conv_transpose3d_pallas.15} parent=11 // pred_check_branch
        %167 = sbr.rel (%p165) target = $region16
      $region15: #{conv_transpose3d_pallas.15} parent=11 // pred_region
        _
      $region16: #{conv_transpose3d_pallas.15} parent=11 // pred_fallthru
        _
      // Predicated region
      $region17: #{conv_transpose3d_pallas.15} parent=11 // pred_check
        %p168 = pneg %p64
      $region18: #{conv_transpose3d_pallas.15} parent=11 // pred_check_branch
        %170 = sbr.rel (%p168) target = $region20
      $region19: #{conv_transpose3d_pallas.15} parent=11 // pred_region
        _
      $region20: #{conv_transpose3d_pallas.15} parent=11 // pred_fallthru
        _
    $region12: #{conv_transpose3d_pallas.15} parent=5 // pred_fallthru
      _
    %p171 = scmp.lt.s32.totalorder %s10, 16
    // Predicated region
    $region21: #{conv_transpose3d_pallas.15} parent=5 // pred_check
      %p172 = pneg %p171
    $region22: #{conv_transpose3d_pallas.15} parent=5 // pred_check_branch
      %174 = sbr.rel (%p172) target = $region24
    $region23: #{conv_transpose3d_pallas.15} parent=5 // pred_region
      // Predicated region
      $region25: #{conv_transpose3d_pallas.15} parent=23 // pred_check
        %p175 = pneg %p86
      $region26: #{conv_transpose3d_pallas.15} parent=23 // pred_check_branch
        %177 = sbr.rel (%p175) target = $region28
      $region27: #{conv_transpose3d_pallas.15} parent=23 // pred_region
        %p178 = scmp.lt.s32.totalorder %s17, 1
        %s179 = scalar_select %p178, %s17, 1
        %p180 = scmp.lt.s32.totalorder %s18, 8
        %s181 = scalar_select %p180, %s18, 8
        %s182 = smul.addr %s179, 9
        %s183 = sadd.s32 %s181, %s182
        %s184 = smul.addr %s183, 4
        %s185 = scalar_lea.vmem %s2, %s184
      $region28: #{conv_transpose3d_pallas.15} parent=23 // pred_fallthru
        _
      // Predicated region
      $region29: #{conv_transpose3d_pallas.15} parent=23 // pred_check
        %p186 = pneg %p116
      $region30: #{conv_transpose3d_pallas.15} parent=23 // pred_check_branch
        %188 = sbr.rel (%p186) target = $region32
      $region31: #{conv_transpose3d_pallas.15} parent=23 // pred_region
        %s189 = sadd.s32 %s18, 1
        %p190 = scmp.lt.s32.totalorder %s17, 1
        %s191 = scalar_select %p190, %s17, 1
        %p192 = scmp.lt.s32.totalorder %s189, 8
        %s193 = scalar_select %p192, %s189, 8
        %s194 = smul.addr %s191, 9
        %s195 = sadd.s32 %s193, %s194
        %s196 = smul.addr %s195, 4
        %s197 = scalar_lea.vmem %s3, %s196
        %s198 = sadd.s32 %s18, 1
      $region32: #{conv_transpose3d_pallas.15} parent=23 // pred_fallthru
        _
    $region24: #{conv_transpose3d_pallas.15} parent=5 // pred_fallthru
      _
    %p199 = scmp.le.s32.totalorder 1, %s10
    %p200 = scmp.lt.s32.totalorder %s10, 17
    %p201 = pnand %p199, %p200
    %p202 = pneg %p201
    // Predicated region
    $region33: #{conv_transpose3d_pallas.15} parent=5 // pred_check
      _
    $region34: #{conv_transpose3d_pallas.15} parent=5 // pred_check_branch
      %204 = sbr.rel (%p201) target = $region36
    $region35: #{conv_transpose3d_pallas.15} parent=5 // pred_region
      %s205 = ssub.s32 %s10, 1
      %p206 = pneg %p43
      %p207 = pneg %p40
      %p208 = pneg %p64
      %p209 = pneg %p61
      %p210 = scmp.lt.s32.totalorder %s19, 1
      %s211 = scalar_select %p210, %s19, 1
      %p212 = scmp.lt.s32.totalorder %s20, 8
      %s213 = scalar_select %p212, %s20, 8
      %s214 = smul.addr %s211, 9
      %s215 = sadd.s32 %s213, %s214
      %s216 = smul.addr %s215, 4
      %s217 = scalar_lea.vmem %s2, %s216
      %p218 = pneg %p92
      %p219 = pneg %p89
      %s220 = sadd.s32 %s20, 1
      %p221 = scmp.lt.s32.totalorder %s19, 1
      %s222 = scalar_select %p221, %s19, 1
      %p223 = scmp.lt.s32.totalorder %s220, 8
      %s224 = scalar_select %p223, %s220, 8
      %s225 = smul.addr %s222, 9
      %s226 = sadd.s32 %s224, %s225
      %s227 = smul.addr %s226, 4
      %s228 = scalar_lea.vmem %s3, %s227
      %p229 = pneg %p122
      %p230 = pneg %p119
      %p231 = pneg %p150
      %p232 = pneg %p147
      %p233 = scmp.lt.s32.totalorder %s19, 1
      %s234 = scalar_select %p233, %s19, 1
      %p235 = scmp.lt.s32.totalorder %s20, 7
      %s236 = scalar_select %p235, %s20, 7
      %s237 = smul.addr %s234, 8
      %s238 = sadd.s32 %s236, %s237
      %s239 = smul.addr %s238, 8
      %s240 = scalar_lea.vmem %s4, %s239
      %p241 = scmp.lt.s32.totalorder %s19, 1
      %s242 = scalar_select %p241, %s19, 1
      %p243 = scmp.lt.s32.totalorder %s20, 8
      %s244 = scalar_select %p243, %s20, 8
      %s245 = smul.addr %s242, 9
      %s246 = sadd.s32 %s244, %s245
      %s247 = smul.addr %s246, 4
      %s248 = scalar_lea.vmem %s2, %s247
      %s249 = sadd.s32 %s20, 1
      %p250 = scmp.lt.s32.totalorder %s19, 1
      %s251 = scalar_select %p250, %s19, 1
      %p252 = scmp.lt.s32.totalorder %s249, 8
      %s253 = scalar_select %p252, %s249, 8
      %s254 = smul.addr %s251, 9
      %s255 = sadd.s32 %s253, %s254
      %s256 = smul.addr %s255, 4
      %s257 = scalar_lea.vmem %s3, %s256
      %s258 = sadd.s32 %s20, 1
      %p259 = scmp.lt.s32.totalorder %s19, 1
      %s260 = scalar_select %p259, %s19, 1
      %p261 = scmp.lt.s32.totalorder %s20, 7
      %s262 = scalar_select %p261, %s20, 7
      %s263 = smul.addr %s260, 8
      %s264 = sadd.s32 %s262, %s263
      %s265 = smul.addr %s264, 8
      %s266 = scalar_lea.vmem %s4, %s265
      %v267 = vld [vmem:[%s257] sm:$0xf]
      %v268 = vld [vmem:[%s0] sm:$0xff]
      %s269 = scalar_lea.vmem %s0, 8
      %v270 = vld [vmem:[%s269] sm:$0xff]
      %272 = vrot.lane.b32.xlu0 %v267, 119
      %v273 = vpop.permute.xlu0 %272
      %vm274 = vcmask 31744
      %v276 = vsel %vm274, %v270, 0
      %vm278 = vcmask 1043456
      %v279 = vsel %vm278, %v273, 0
      %281 = vmatprep.subr.mxu0 0.0
      %282 = vmatpush1.msra.mxu0 %v279
      %283 = vmatprep.subr.mxu0 0.0
      %284 = vmatpush1.msra.mxu0 0.0
      %285 = vmatprep.subr.mxu0 0.0
      %286 = vmatpush1.msra.mxu0 0.0
      %287 = vmatprep.subr.mxu0 0.0
      %288 = vmatpush1.msra.mxu0 0.0
      %289 = vmatprep.subr.mxu0 0.0
      %290 = vmatpush1.msra.mxu0 0.0
      %291 = vmatprep.subr.mxu0 0.0
      %292 = vmatpush1.msra.mxu0 0.0
      %293 = vmatprep.subr.mxu0 0.0
      %294 = vmatpush1.msra.mxu0 0.0
      %295 = vmatprep.subr.mxu0 0.0
      %296 = vmatpush1.msra.mxu0 0.0
      %297 = vmatprep.subr.mxu0 0.0
      %298 = vmatpush1.msra.mxu0 0.0
      %299 = vmatprep.subr.mxu0 0.0
      %300 = vmatpush1.msra.mxu0 0.0
      %301 = vmatprep.subr.mxu0 0.0
      %302 = vmatpush1.msra.mxu0 0.0
      %303 = vmatprep.subr.mxu0 0.0
      %304 = vmatpush1.msra.mxu0 0.0
      %305 = vmatprep.subr.mxu0 0.0
      %306 = vmatpush1.msra.mxu0 0.0
      %307 = vmatprep.subr.mxu0 0.0
      %308 = vmatpush1.msra.mxu0 0.0
      %309 = vmatprep.subr.mxu0 0.0
      %310 = vmatpush1.msra.mxu0 0.0
      %311 = vmatprep.subr.mxu0 0.0
      %312 = vmatpush1.msra.mxu0 0.0
      %313 = vmatprep.subr.mxu0 0.0
      %314 = vmatpush1.msra.mxu0 0.0
      %315 = vmatprep.subr.mxu0 0.0
      %316 = vmatpush1.msra.mxu0 0.0
      %317 = vmatprep.subr.mxu0 0.0
      %318 = vmatpush1.msra.mxu0 0.0
      %319 = vmatprep.subr.mxu0 0.0
      %320 = vmatpush1.msra.mxu0 0.0
      %321 = vmatprep.subr.mxu0 0.0
      %322 = vmatpush1.msra.mxu0 0.0
      %323 = vmatprep.subr.mxu0 0.0
      %324 = vmatpush1.msra.mxu0 0.0
      %325 = vmatprep.subr.mxu0 0.0
      %326 = vmatpush1.msra.mxu0 0.0
      %327 = vmatprep.subr.mxu0 0.0
      %328 = vmatpush1.msra.mxu0 0.0
      %329 = vmatprep.subr.mxu0 0.0
      %330 = vmatpush1.msra.mxu0 0.0
      %331 = vmatprep.subr.mxu0 0.0
      %332 = vmatpush1.msra.mxu0 0.0
      %333 = vmatprep.subr.mxu0 0.0
      %334 = vmatpush1.msra.mxu0 0.0
      %335 = vmatprep.subr.mxu0 0.0
      %336 = vmatpush1.msra.mxu0 0.0
      %337 = vmatprep.subr.mxu0 0.0
      %338 = vmatpush1.msra.mxu0 0.0
      %339 = vmatprep.subr.mxu0 0.0
      %340 = vmatpush1.msra.mxu0 0.0
      %341 = vmatprep.subr.mxu0 0.0
      %342 = vmatpush1.msra.mxu0 0.0
      %343 = vmatprep.subr.mxu0 0.0
      %344 = vmatpush1.msra.mxu0 0.0
      %345 = vmatprep.mubr.f32.mxu0 0.0
      %346 = vmatmul.mubr.f32.gmra.mrb[0].mxu0 %v276
      %v347 = vpop.f32.mrb[0].mxu0
      %v348 = vadd.f32 0.0, %v347
      %v349 = vpop.f32.mrb[0].mxu0
      %350 = vdwg.mxu0
      %351 = vrot.lane.b32.xlu0 %v267, 118
      %v352 = vpop.permute.xlu0 %351
      %v354 = vsel %vm274, %v268, 0
      %v356 = vsel %vm278, %v352, 0
      %358 = vmatprep.subr.mxu0 0.0
      %359 = vmatpush1.msra.mxu0 %v356
      %360 = vmatprep.subr.mxu0 0.0
      %361 = vmatpush1.msra.mxu0 0.0
      %362 = vmatprep.subr.mxu0 0.0
      %363 = vmatpush1.msra.mxu0 0.0
      %364 = vmatprep.subr.mxu0 0.0
      %365 = vmatpush1.msra.mxu0 0.0
      %366 = vmatprep.subr.mxu0 0.0
      %367 = vmatpush1.msra.mxu0 0.0
      %368 = vmatprep.subr.mxu0 0.0
      %369 = vmatpush1.msra.mxu0 0.0
      %370 = vmatprep.subr.mxu0 0.0
      %371 = vmatpush1.msra.mxu0 0.0
      %372 = vmatprep.subr.mxu0 0.0
      %373 = vmatpush1.msra.mxu0 0.0
      %374 = vmatprep.subr.mxu0 0.0
      %375 = vmatpush1.msra.mxu0 0.0
      %376 = vmatprep.subr.mxu0 0.0
      %377 = vmatpush1.msra.mxu0 0.0
      %378 = vmatprep.subr.mxu0 0.0
      %379 = vmatpush1.msra.mxu0 0.0
      %380 = vmatprep.subr.mxu0 0.0
      %381 = vmatpush1.msra.mxu0 0.0
      %382 = vmatprep.subr.mxu0 0.0
      %383 = vmatpush1.msra.mxu0 0.0
      %384 = vmatprep.subr.mxu0 0.0
      %385 = vmatpush1.msra.mxu0 0.0
      %386 = vmatprep.subr.mxu0 0.0
      %387 = vmatpush1.msra.mxu0 0.0
      %388 = vmatprep.subr.mxu0 0.0
      %389 = vmatpush1.msra.mxu0 0.0
      %390 = vmatprep.subr.mxu0 0.0
      %391 = vmatpush1.msra.mxu0 0.0
      %392 = vmatprep.subr.mxu0 0.0
      %393 = vmatpush1.msra.mxu0 0.0
      %394 = vmatprep.subr.mxu0 0.0
      %395 = vmatpush1.msra.mxu0 0.0
      %396 = vmatprep.subr.mxu0 0.0
      %397 = vmatpush1.msra.mxu0 0.0
      %398 = vmatprep.subr.mxu0 0.0
      %399 = vmatpush1.msra.mxu0 0.0
      %400 = vmatprep.subr.mxu0 0.0
      %401 = vmatpush1.msra.mxu0 0.0
      %402 = vmatprep.subr.mxu0 0.0
      %403 = vmatpush1.msra.mxu0 0.0
      %404 = vmatprep.subr.mxu0 0.0
      %405 = vmatpush1.msra.mxu0 0.0
      %406 = vmatprep.subr.mxu0 0.0
      %407 = vmatpush1.msra.mxu0 0.0
      %408 = vmatprep.subr.mxu0 0.0
      %409 = vmatpush1.msra.mxu0 0.0
      %410 = vmatprep.subr.mxu0 0.0
      %411 = vmatpush1.msra.mxu0 0.0
      %412 = vmatprep.subr.mxu0 0.0
      %413 = vmatpush1.msra.mxu0 0.0
      %414 = vmatprep.subr.mxu0 0.0
      %415 = vmatpush1.msra.mxu0 0.0
      %416 = vmatprep.subr.mxu0 0.0
      %417 = vmatpush1.msra.mxu0 0.0
      %418 = vmatprep.subr.mxu0 0.0
      %419 = vmatpush1.msra.mxu0 0.0
      %420 = vmatprep.subr.mxu0 0.0
      %421 = vmatpush1.msra.mxu0 0.0
      %422 = vmatprep.mubr.f32.mxu0 0.0
      %423 = vmatmul.mubr.f32.gmra.mrb[0].mxu0 %v354
      %v424 = vpop.f32.mrb[0].mxu0
      %v425 = vadd.f32 %v348, %v424
      %v426 = vpop.f32.mrb[0].mxu0
      %427 = vdwg.mxu0
      %s428 = scalar_lea.vmem %s0, 16
      %v429 = vld [vmem:[%s428] sm:$0xff]
      %430 = vrot.lane.b32.xlu0 %v267, 127
      %v431 = vpop.permute.xlu0 %430
      %v433 = vsel %vm274, %v429, 0
      %v435 = vsel %vm278, %v431, 0
      %437 = vmatprep.subr.mxu0 0.0
      %438 = vmatpush1.msra.mxu0 %v435
      %439 = vmatprep.subr.mxu0 0.0
      %440 = vmatpush1.msra.mxu0 0.0
      %441 = vmatprep.subr.mxu0 0.0
      %442 = vmatpush1.msra.mxu0 0.0
      %443 = vmatprep.subr.mxu0 0.0
      %444 = vmatpush1.msra.mxu0 0.0
      %445 = vmatprep.subr.mxu0 0.0
      %446 = vmatpush1.msra.mxu0 0.0
      %447 = vmatprep.subr.mxu0 0.0
      %448 = vmatpush1.msra.mxu0 0.0
      %449 = vmatprep.subr.mxu0 0.0
      %450 = vmatpush1.msra.mxu0 0.0
      %451 = vmatprep.subr.mxu0 0.0
      %452 = vmatpush1.msra.mxu0 0.0
      %453 = vmatprep.subr.mxu0 0.0
      %454 = vmatpush1.msra.mxu0 0.0
      %455 = vmatprep.subr.mxu0 0.0
      %456 = vmatpush1.msra.mxu0 0.0
      %457 = vmatprep.subr.mxu0 0.0
      %458 = vmatpush1.msra.mxu0 0.0
      %459 = vmatprep.subr.mxu0 0.0
      %460 = vmatpush1.msra.mxu0 0.0
      %461 = vmatprep.subr.mxu0 0.0
      %462 = vmatpush1.msra.mxu0 0.0
      %463 = vmatprep.subr.mxu0 0.0
      %464 = vmatpush1.msra.mxu0 0.0
      %465 = vmatprep.subr.mxu0 0.0
      %466 = vmatpush1.msra.mxu0 0.0
      %467 = vmatprep.subr.mxu0 0.0
      %468 = vmatpush1.msra.mxu0 0.0
      %469 = vmatprep.subr.mxu0 0.0
      %470 = vmatpush1.msra.mxu0 0.0
      %471 = vmatprep.subr.mxu0 0.0
      %472 = vmatpush1.msra.mxu0 0.0
      %473 = vmatprep.subr.mxu0 0.0
      %474 = vmatpush1.msra.mxu0 0.0
      %475 = vmatprep.subr.mxu0 0.0
      %476 = vmatpush1.msra.mxu0 0.0
      %477 = vmatprep.subr.mxu0 0.0
      %478 = vmatpush1.msra.mxu0 0.0
      %479 = vmatprep.subr.mxu0 0.0
      %480 = vmatpush1.msra.mxu0 0.0
      %481 = vmatprep.subr.mxu0 0.0
      %482 = vmatpush1.msra.mxu0 0.0
      %483 = vmatprep.subr.mxu0 0.0
      %484 = vmatpush1.msra.mxu0 0.0
      %485 = vmatprep.subr.mxu0 0.0
      %486 = vmatpush1.msra.mxu0 0.0
      %487 = vmatprep.subr.mxu0 0.0
      %488 = vmatpush1.msra.mxu0 0.0
      %489 = vmatprep.subr.mxu0 0.0
      %490 = vmatpush1.msra.mxu0 0.0
      %491 = vmatprep.subr.mxu0 0.0
      %492 = vmatpush1.msra.mxu0 0.0
      %493 = vmatprep.subr.mxu0 0.0
      %494 = vmatpush1.msra.mxu0 0.0
      %495 = vmatprep.subr.mxu0 0.0
      %496 = vmatpush1.msra.mxu0 0.0
      %497 = vmatprep.subr.mxu0 0.0
      %498 = vmatpush1.msra.mxu0 0.0
      %499 = vmatprep.subr.mxu0 0.0
      %500 = vmatpush1.msra.mxu0 0.0
      %501 = vmatprep.mubr.f32.mxu0 0.0
      %502 = vmatmul.mubr.f32.gmra.mrb[0].mxu0 %v433
      %v503 = vpop.f32.mrb[0].mxu0
      %v504 = vadd.f32 0.0, %v503
      %v505 = vpop.f32.mrb[0].mxu0
      %506 = vdwg.mxu0
      %v507 = vadd.f32 %v425, %v504
      %s508 = scalar_lea.vmem %s0, 24
      %v509 = vld [vmem:[%s508] sm:$0xff]
      %v511 = vsel %vm274, %v509, 0
      %v513 = vsel %vm278, %v267, 0
      %515 = vmatprep.subr.mxu0 0.0
      %516 = vmatpush1.msra.mxu0 %v513
      %517 = vmatprep.subr.mxu0 0.0
      %518 = vmatpush1.msra.mxu0 0.0
      %519 = vmatprep.subr.mxu0 0.0
      %520 = vmatpush1.msra.mxu0 0.0
      %521 = vmatprep.subr.mxu0 0.0
      %522 = vmatpush1.msra.mxu0 0.0
      %523 = vmatprep.subr.mxu0 0.0
      %524 = vmatpush1.msra.mxu0 0.0
      %525 = vmatprep.subr.mxu0 0.0
      %526 = vmatpush1.msra.mxu0 0.0
      %527 = vmatprep.subr.mxu0 0.0
      %528 = vmatpush1.msra.mxu0 0.0
      %529 = vmatprep.subr.mxu0 0.0
      %530 = vmatpush1.msra.mxu0 0.0
      %531 = vmatprep.subr.mxu0 0.0
      %532 = vmatpush1.msra.mxu0 0.0
      %533 = vmatprep.subr.mxu0 0.0
      %534 = vmatpush1.msra.mxu0 0.0
      %535 = vmatprep.subr.mxu0 0.0
      %536 = vmatpush1.msra.mxu0 0.0
      %537 = vmatprep.subr.mxu0 0.0
      %538 = vmatpush1.msra.mxu0 0.0
      %539 = vmatprep.subr.mxu0 0.0
      %540 = vmatpush1.msra.mxu0 0.0
      %541 = vmatprep.subr.mxu0 0.0
      %542 = vmatpush1.msra.mxu0 0.0
      %543 = vmatprep.subr.mxu0 0.0
      %544 = vmatpush1.msra.mxu0 0.0
      %545 = vmatprep.subr.mxu0 0.0
      %546 = vmatpush1.msra.mxu0 0.0
      %547 = vmatprep.subr.mxu0 0.0
      %548 = vmatpush1.msra.mxu0 0.0
      %549 = vmatprep.subr.mxu0 0.0
      %550 = vmatpush1.msra.mxu0 0.0
      %551 = vmatprep.subr.mxu0 0.0
      %552 = vmatpush1.msra.mxu0 0.0
      %553 = vmatprep.subr.mxu0 0.0
      %554 = vmatpush1.msra.mxu0 0.0
      %555 = vmatprep.subr.mxu0 0.0
      %556 = vmatpush1.msra.mxu0 0.0
      %557 = vmatprep.subr.mxu0 0.0
      %558 = vmatpush1.msra.mxu0 0.0
      %559 = vmatprep.subr.mxu0 0.0
      %560 = vmatpush1.msra.mxu0 0.0
      %561 = vmatprep.subr.mxu0 0.0
      %562 = vmatpush1.msra.mxu0 0.0
      %563 = vmatprep.subr.mxu0 0.0
      %564 = vmatpush1.msra.mxu0 0.0
      %565 = vmatprep.subr.mxu0 0.0
      %566 = vmatpush1.msra.mxu0 0.0
      %567 = vmatprep.subr.mxu0 0.0
      %568 = vmatpush1.msra.mxu0 0.0
      %569 = vmatprep.subr.mxu0 0.0
      %570 = vmatpush1.msra.mxu0 0.0
      %571 = vmatprep.subr.mxu0 0.0
      %572 = vmatpush1.msra.mxu0 0.0
      %573 = vmatprep.subr.mxu0 0.0
      %574 = vmatpush1.msra.mxu0 0.0
      %575 = vmatprep.subr.mxu0 0.0
      %576 = vmatpush1.msra.mxu0 0.0
      %577 = vmatprep.subr.mxu0 0.0
      %578 = vmatpush1.msra.mxu0 0.0
      %579 = vmatprep.mubr.f32.mxu0 0.0
      %580 = vmatmul.mubr.f32.gmra.mrb[0].mxu0 %v511
      %v581 = vpop.f32.mrb[0].mxu0
      %v582 = vadd.f32 0.0, %v581
      %v583 = vpop.f32.mrb[0].mxu0
      %584 = vdwg.mxu0
      %v585 = vadd.f32 %v507, %v582
      %v586 = vld [vmem:[%s248] sm:$0xf]
      %s587 = scalar_lea.vmem %s0, 32
      %v588 = vld [vmem:[%s587] sm:$0xff]
      %590 = vrot.lane.b32.xlu0 %v586, 118
      %v591 = vpop.permute.xlu0 %590
      %v593 = vsel %vm274, %v588, 0
      %v595 = vsel %vm278, %v591, 0
      %597 = vmatprep.subr.mxu0 0.0
      %598 = vmatpush1.msra.mxu0 %v595
      %599 = vmatprep.subr.mxu0 0.0
      %600 = vmatpush1.msra.mxu0 0.0
      %601 = vmatprep.subr.mxu0 0.0
      %602 = vmatpush1.msra.mxu0 0.0
      %603 = vmatprep.subr.mxu0 0.0
      %604 = vmatpush1.msra.mxu0 0.0
      %605 = vmatprep.subr.mxu0 0.0
      %606 = vmatpush1.msra.mxu0 0.0
      %607 = vmatprep.subr.mxu0 0.0
      %608 = vmatpush1.msra.mxu0 0.0
      %609 = vmatprep.subr.mxu0 0.0
      %610 = vmatpush1.msra.mxu0 0.0
      %611 = vmatprep.subr.mxu0 0.0
      %612 = vmatpush1.msra.mxu0 0.0
      %613 = vmatprep.subr.mxu0 0.0
      %614 = vmatpush1.msra.mxu0 0.0
      %615 = vmatprep.subr.mxu0 0.0
      %616 = vmatpush1.msra.mxu0 0.0
      %617 = vmatprep.subr.mxu0 0.0
      %618 = vmatpush1.msra.mxu0 0.0
      %619 = vmatprep.subr.mxu0 0.0
      %620 = vmatpush1.msra.mxu0 0.0
      %621 = vmatprep.subr.mxu0 0.0
      %622 = vmatpush1.msra.mxu0 0.0
      %623 = vmatprep.subr.mxu0 0.0
      %624 = vmatpush1.msra.mxu0 0.0
      %625 = vmatprep.subr.mxu0 0.0
      %626 = vmatpush1.msra.mxu0 0.0
      %627 = vmatprep.subr.mxu0 0.0
      %628 = vmatpush1.msra.mxu0 0.0
      %629 = vmatprep.subr.mxu0 0.0
      %630 = vmatpush1.msra.mxu0 0.0
      %631 = vmatprep.subr.mxu0 0.0
      %632 = vmatpush1.msra.mxu0 0.0
      %633 = vmatprep.subr.mxu0 0.0
      %634 = vmatpush1.msra.mxu0 0.0
      %635 = vmatprep.subr.mxu0 0.0
      %636 = vmatpush1.msra.mxu0 0.0
      %637 = vmatprep.subr.mxu0 0.0
      %638 = vmatpush1.msra.mxu0 0.0
      %639 = vmatprep.subr.mxu0 0.0
      %640 = vmatpush1.msra.mxu0 0.0
      %641 = vmatprep.subr.mxu0 0.0
      %642 = vmatpush1.msra.mxu0 0.0
      %643 = vmatprep.subr.mxu0 0.0
      %644 = vmatpush1.msra.mxu0 0.0
      %645 = vmatprep.subr.mxu0 0.0
      %646 = vmatpush1.msra.mxu0 0.0
      %647 = vmatprep.subr.mxu0 0.0
      %648 = vmatpush1.msra.mxu0 0.0
      %649 = vmatprep.subr.mxu0 0.0
      %650 = vmatpush1.msra.mxu0 0.0
      %651 = vmatprep.subr.mxu0 0.0
      %652 = vmatpush1.msra.mxu0 0.0
      %653 = vmatprep.subr.mxu0 0.0
      %654 = vmatpush1.msra.mxu0 0.0
      %655 = vmatprep.subr.mxu0 0.0
      %656 = vmatpush1.msra.mxu0 0.0
      %657 = vmatprep.subr.mxu0 0.0
      %658 = vmatpush1.msra.mxu0 0.0
      %659 = vmatprep.subr.mxu0 0.0
      %660 = vmatpush1.msra.mxu0 0.0
      %661 = vmatprep.mubr.f32.mxu0 0.0
      %662 = vmatmul.mubr.f32.gmra.mrb[0].mxu0 %v593
      %v663 = vpop.f32.mrb[0].mxu0
      %v664 = vadd.f32 0.0, %v663
      %v665 = vpop.f32.mrb[0].mxu0
      %666 = vdwg.mxu0
      %v667 = vadd.f32 %v585, %v664
      %s668 = scalar_lea.vmem %s0, 40
      %v669 = vld [vmem:[%s668] sm:$0xff]
      %670 = vrot.lane.b32.xlu0 %v586, 119
      %v671 = vpop.permute.xlu0 %670
      %v673 = vsel %vm274, %v669, 0
      %v675 = vsel %vm278, %v671, 0
      %677 = vmatprep.subr.mxu0 0.0
      %678 = vmatpush1.msra.mxu0 %v675
      %679 = vmatprep.subr.mxu0 0.0
      %680 = vmatpush1.msra.mxu0 0.0
      %681 = vmatprep.subr.mxu0 0.0
      %682 = vmatpush1.msra.mxu0 0.0
      %683 = vmatprep.subr.mxu0 0.0
      %684 = vmatpush1.msra.mxu0 0.0
      %685 = vmatprep.subr.mxu0 0.0
      %686 = vmatpush1.msra.mxu0 0.0
      %687 = vmatprep.subr.mxu0 0.0
      %688 = vmatpush1.msra.mxu0 0.0
      %689 = vmatprep.subr.mxu0 0.0
      %690 = vmatpush1.msra.mxu0 0.0
      %691 = vmatprep.subr.mxu0 0.0
      %692 = vmatpush1.msra.mxu0 0.0
      %693 = vmatprep.subr.mxu0 0.0
      %694 = vmatpush1.msra.mxu0 0.0
      %695 = vmatprep.subr.mxu0 0.0
      %696 = vmatpush1.msra.mxu0 0.0
      %697 = vmatprep.subr.mxu0 0.0
      %698 = vmatpush1.msra.mxu0 0.0
      %699 = vmatprep.subr.mxu0 0.0
      %700 = vmatpush1.msra.mxu0 0.0
      %701 = vmatprep.subr.mxu0 0.0
      %702 = vmatpush1.msra.mxu0 0.0
      %703 = vmatprep.subr.mxu0 0.0
      %704 = vmatpush1.msra.mxu0 0.0
      %705 = vmatprep.subr.mxu0 0.0
      %706 = vmatpush1.msra.mxu0 0.0
      %707 = vmatprep.subr.mxu0 0.0
      %708 = vmatpush1.msra.mxu0 0.0
      %709 = vmatprep.subr.mxu0 0.0
      %710 = vmatpush1.msra.mxu0 0.0
      %711 = vmatprep.subr.mxu0 0.0
      %712 = vmatpush1.msra.mxu0 0.0
      %713 = vmatprep.subr.mxu0 0.0
      %714 = vmatpush1.msra.mxu0 0.0
      %715 = vmatprep.subr.mxu0 0.0
      %716 = vmatpush1.msra.mxu0 0.0
      %717 = vmatprep.subr.mxu0 0.0
      %718 = vmatpush1.msra.mxu0 0.0
      %719 = vmatprep.subr.mxu0 0.0
      %720 = vmatpush1.msra.mxu0 0.0
      %721 = vmatprep.subr.mxu0 0.0
      %722 = vmatpush1.msra.mxu0 0.0
      %723 = vmatprep.subr.mxu0 0.0
      %724 = vmatpush1.msra.mxu0 0.0
      %725 = vmatprep.subr.mxu0 0.0
      %726 = vmatpush1.msra.mxu0 0.0
      %727 = vmatprep.subr.mxu0 0.0
      %728 = vmatpush1.msra.mxu0 0.0
      %729 = vmatprep.subr.mxu0 0.0
      %730 = vmatpush1.msra.mxu0 0.0
      %731 = vmatprep.subr.mxu0 0.0
      %732 = vmatpush1.msra.mxu0 0.0
      %733 = vmatprep.subr.mxu0 0.0
      %734 = vmatpush1.msra.mxu0 0.0
      %735 = vmatprep.subr.mxu0 0.0
      %736 = vmatpush1.msra.mxu0 0.0
      %737 = vmatprep.subr.mxu0 0.0
      %738 = vmatpush1.msra.mxu0 0.0
      %739 = vmatprep.subr.mxu0 0.0
      %740 = vmatpush1.msra.mxu0 0.0
      %741 = vmatprep.mubr.f32.mxu0 0.0
      %742 = vmatmul.mubr.f32.gmra.mrb[0].mxu0 %v673
      %v743 = vpop.f32.mrb[0].mxu0
      %v744 = vadd.f32 0.0, %v743
      %v745 = vpop.f32.mrb[0].mxu0
      %746 = vdwg.mxu0
      %v747 = vadd.f32 %v667, %v744
      %s748 = scalar_lea.vmem %s0, 48
      %v749 = vld [vmem:[%s748] sm:$0xff]
      %750 = vrot.lane.b32.xlu0 %v586, 127
      %v751 = vpop.permute.xlu0 %750
      %v753 = vsel %vm274, %v749, 0
      %v755 = vsel %vm278, %v751, 0
      %757 = vmatprep.subr.mxu0 0.0
      %758 = vmatpush1.msra.mxu0 %v755
      %759 = vmatprep.subr.mxu0 0.0
      %760 = vmatpush1.msra.mxu0 0.0
      %761 = vmatprep.subr.mxu0 0.0
      %762 = vmatpush1.msra.mxu0 0.0
      %763 = vmatprep.subr.mxu0 0.0
      %764 = vmatpush1.msra.mxu0 0.0
      %765 = vmatprep.subr.mxu0 0.0
      %766 = vmatpush1.msra.mxu0 0.0
      %767 = vmatprep.subr.mxu0 0.0
      %768 = vmatpush1.msra.mxu0 0.0
      %769 = vmatprep.subr.mxu0 0.0
      %770 = vmatpush1.msra.mxu0 0.0
      %771 = vmatprep.subr.mxu0 0.0
      %772 = vmatpush1.msra.mxu0 0.0
      %773 = vmatprep.subr.mxu0 0.0
      %774 = vmatpush1.msra.mxu0 0.0
      %775 = vmatprep.subr.mxu0 0.0
      %776 = vmatpush1.msra.mxu0 0.0
      %777 = vmatprep.subr.mxu0 0.0
      %778 = vmatpush1.msra.mxu0 0.0
      %779 = vmatprep.subr.mxu0 0.0
      %780 = vmatpush1.msra.mxu0 0.0
      %781 = vmatprep.subr.mxu0 0.0
      %782 = vmatpush1.msra.mxu0 0.0
      %783 = vmatprep.subr.mxu0 0.0
      %784 = vmatpush1.msra.mxu0 0.0
      %785 = vmatprep.subr.mxu0 0.0
      %786 = vmatpush1.msra.mxu0 0.0
      %787 = vmatprep.subr.mxu0 0.0
      %788 = vmatpush1.msra.mxu0 0.0
      %789 = vmatprep.subr.mxu0 0.0
      %790 = vmatpush1.msra.mxu0 0.0
      %791 = vmatprep.subr.mxu0 0.0
      %792 = vmatpush1.msra.mxu0 0.0
      %793 = vmatprep.subr.mxu0 0.0
      %794 = vmatpush1.msra.mxu0 0.0
      %795 = vmatprep.subr.mxu0 0.0
      %796 = vmatpush1.msra.mxu0 0.0
      %797 = vmatprep.subr.mxu0 0.0
      %798 = vmatpush1.msra.mxu0 0.0
      %799 = vmatprep.subr.mxu0 0.0
      %800 = vmatpush1.msra.mxu0 0.0
      %801 = vmatprep.subr.mxu0 0.0
      %802 = vmatpush1.msra.mxu0 0.0
      %803 = vmatprep.subr.mxu0 0.0
      %804 = vmatpush1.msra.mxu0 0.0
      %805 = vmatprep.subr.mxu0 0.0
      %806 = vmatpush1.msra.mxu0 0.0
      %807 = vmatprep.subr.mxu0 0.0
      %808 = vmatpush1.msra.mxu0 0.0
      %809 = vmatprep.subr.mxu0 0.0
      %810 = vmatpush1.msra.mxu0 0.0
      %811 = vmatprep.subr.mxu0 0.0
      %812 = vmatpush1.msra.mxu0 0.0
      %813 = vmatprep.subr.mxu0 0.0
      %814 = vmatpush1.msra.mxu0 0.0
      %815 = vmatprep.subr.mxu0 0.0
      %816 = vmatpush1.msra.mxu0 0.0
      %817 = vmatprep.subr.mxu0 0.0
      %818 = vmatpush1.msra.mxu0 0.0
      %819 = vmatprep.subr.mxu0 0.0
      %820 = vmatpush1.msra.mxu0 0.0
      %821 = vmatprep.mubr.f32.mxu0 0.0
      %822 = vmatmul.mubr.f32.gmra.mrb[0].mxu0 %v753
      %v823 = vpop.f32.mrb[0].mxu0
      %v824 = vadd.f32 0.0, %v823
      %v825 = vpop.f32.mrb[0].mxu0
      %826 = vdwg.mxu0
      %v827 = vadd.f32 %v747, %v824
      %s828 = scalar_lea.vmem %s0, 56
      %v829 = vld [vmem:[%s828] sm:$0xff]
      %v831 = vsel %vm274, %v829, 0
      %v833 = vsel %vm278, %v586, 0
      %835 = vmatprep.subr.mxu0 0.0
      %836 = vmatpush1.msra.mxu0 %v833
      %837 = vmatprep.subr.mxu0 0.0
      %838 = vmatpush1.msra.mxu0 0.0
      %839 = vmatprep.subr.mxu0 0.0
      %840 = vmatpush1.msra.mxu0 0.0
      %841 = vmatprep.subr.mxu0 0.0
      %842 = vmatpush1.msra.mxu0 0.0
      %843 = vmatprep.subr.mxu0 0.0
      %844 = vmatpush1.msra.mxu0 0.0
      %845 = vmatprep.subr.mxu0 0.0
      %846 = vmatpush1.msra.mxu0 0.0
      %847 = vmatprep.subr.mxu0 0.0
      %848 = vmatpush1.msra.mxu0 0.0
      %849 = vmatprep.subr.mxu0 0.0
      %850 = vmatpush1.msra.mxu0 0.0
      %851 = vmatprep.subr.mxu0 0.0
      %852 = vmatpush1.msra.mxu0 0.0
      %853 = vmatprep.subr.mxu0 0.0
      %854 = vmatpush1.msra.mxu0 0.0
      %855 = vmatprep.subr.mxu0 0.0
      %856 = vmatpush1.msra.mxu0 0.0
      %857 = vmatprep.subr.mxu0 0.0
      %858 = vmatpush1.msra.mxu0 0.0
      %859 = vmatprep.subr.mxu0 0.0
      %860 = vmatpush1.msra.mxu0 0.0
      %861 = vmatprep.subr.mxu0 0.0
      %862 = vmatpush1.msra.mxu0 0.0
      %863 = vmatprep.subr.mxu0 0.0
      %864 = vmatpush1.msra.mxu0 0.0
      %865 = vmatprep.subr.mxu0 0.0
      %866 = vmatpush1.msra.mxu0 0.0
      %867 = vmatprep.subr.mxu0 0.0
      %868 = vmatpush1.msra.mxu0 0.0
      %869 = vmatprep.subr.mxu0 0.0
      %870 = vmatpush1.msra.mxu0 0.0
      %871 = vmatprep.subr.mxu0 0.0
      %872 = vmatpush1.msra.mxu0 0.0
      %873 = vmatprep.subr.mxu0 0.0
      %874 = vmatpush1.msra.mxu0 0.0
      %875 = vmatprep.subr.mxu0 0.0
      %876 = vmatpush1.msra.mxu0 0.0
      %877 = vmatprep.subr.mxu0 0.0
      %878 = vmatpush1.msra.mxu0 0.0
      %879 = vmatprep.subr.mxu0 0.0
      %880 = vmatpush1.msra.mxu0 0.0
      %881 = vmatprep.subr.mxu0 0.0
      %882 = vmatpush1.msra.mxu0 0.0
      %883 = vmatprep.subr.mxu0 0.0
      %884 = vmatpush1.msra.mxu0 0.0
      %885 = vmatprep.subr.mxu0 0.0
      %886 = vmatpush1.msra.mxu0 0.0
      %887 = vmatprep.subr.mxu0 0.0
      %888 = vmatpush1.msra.mxu0 0.0
      %889 = vmatprep.subr.mxu0 0.0
      %890 = vmatpush1.msra.mxu0 0.0
      %891 = vmatprep.subr.mxu0 0.0
      %892 = vmatpush1.msra.mxu0 0.0
      %893 = vmatprep.subr.mxu0 0.0
      %894 = vmatpush1.msra.mxu0 0.0
      %895 = vmatprep.subr.mxu0 0.0
      %896 = vmatpush1.msra.mxu0 0.0
      %897 = vmatprep.subr.mxu0 0.0
      %898 = vmatpush1.msra.mxu0 0.0
      %899 = vmatprep.mubr.f32.mxu0 0.0
      %900 = vmatmul.mubr.f32.gmra.mrb[0].mxu0 %v831
      %v901 = vpop.f32.mrb[0].mxu0
      %v902 = vadd.f32 0.0, %v901
      %v903 = vpop.f32.mrb[0].mxu0
      %904 = vdwg.mxu0
      %v905 = vadd.f32 %v827, %v902
      %v906 = vld [vmem:[%s1] sm:$0xff]
      %908 = vset.pattern.permute.xlu0 0
      %909 = vperm.xlu0 %908, %v906
      %v910 = vpop.permute.xlu0 %909
      %v912 = vadd.f32 %v905, %v910
      %vm913 = vcmask 588800
      %914 = vst.msk [vmem:[%s266] sm:$0xff] %vm913, %v912
      %p915 = scmp.lt.s32.totalorder %s19, 1
      %s916 = scalar_select %p915, %s19, 1
      %p917 = scmp.lt.s32.totalorder %s20, 7
      %s918 = scalar_select %p917, %s20, 7
      %s919 = smul.addr %s916, 8
      %s920 = sadd.s32 %s918, %s919
      %s921 = smul.addr %s920, 8
      %s922 = scalar_lea.vmem %s4, %s921
      // Predicated region
      $region37: #{conv_transpose3d_pallas.15} parent=35 // pred_check
        %p923 = pneg %p147
      $region38: #{conv_transpose3d_pallas.15} parent=35 // pred_check_branch
        %925 = sbr.rel (%p923) target = $region40
      $region39: #{conv_transpose3d_pallas.15} parent=35 // pred_region
        _
      $region40: #{conv_transpose3d_pallas.15} parent=35 // pred_fallthru
        _
    $region36: #{conv_transpose3d_pallas.15} parent=5 // pred_fallthru
      _
    %p926 = scmp.le.s32.totalorder 2, %s10
    // Predicated region
    $region41: #{conv_transpose3d_pallas.15} parent=5 // pred_check
      %p927 = pneg %p926
    $region42: #{conv_transpose3d_pallas.15} parent=5 // pred_check_branch
      %929 = sbr.rel (%p927) target = $region44
    $region43: #{conv_transpose3d_pallas.15} parent=5 // pred_region
      %s930 = ssub.s32 %s10, 2
      // Predicated region
      $region45: #{conv_transpose3d_pallas.15} parent=43 // pred_check
        %p931 = pneg %p153
      $region46: #{conv_transpose3d_pallas.15} parent=43 // pred_check_branch
        %933 = sbr.rel (%p931) target = $region48
      $region47: #{conv_transpose3d_pallas.15} parent=43 // pred_region
        %p934 = scmp.lt.s32.totalorder %s21, 1
        %s935 = scalar_select %p934, %s21, 1
        %p936 = scmp.lt.s32.totalorder %s22, 7
        %s937 = scalar_select %p936, %s22, 7
        %s938 = smul.addr %s935, 8
        %s939 = sadd.s32 %s937, %s938
        %s940 = smul.addr %s939, 8
        %s941 = scalar_lea.vmem %s4, %s940
      $region48: #{conv_transpose3d_pallas.15} parent=43 // pred_fallthru
        _
    $region44: #{conv_transpose3d_pallas.15} parent=5 // pred_fallthru
      _
  $region6: #{conv_transpose3d_pallas.15} parent=0 // loop_footer
    %s14 = sadd.s32 1, %s10
  $region7: #{conv_transpose3d_pallas.15} parent=0 // loop_footer_branch
    %9 = sbr.rel target = $region3
  $region8: #{conv_transpose3d_pallas.15} parent=0 // loop_exit
    _

</llo_original>
